<compile_context>
chip_gen: v7x
topology: tpu7x:2x2x1
jax: 0.10.0
libtpu: 0.0.40
codegen_flags: <defaults>
</compile_context>

<pallas_src>
import functools
import math

import jax
import jax.numpy as jnp
from jax import lax
from jax.experimental import pallas as pl
from jax.experimental.pallas import tpu as pltpu

LN_EPS = 1e-5  # torch.nn.LayerNorm default


def _layernorm(x, gamma, beta):
    mu = jnp.mean(x, axis=-1, keepdims=True)
    var = jnp.mean(jnp.square(x - mu), axis=-1, keepdims=True)
    return (x - mu) * lax.rsqrt(var + LN_EPS) * gamma + beta


# ----------------------------------------------------------------------------
# Single fused kernel: whole forward pass in one invocation (no grid).
# ----------------------------------------------------------------------------
def pte8_kernel(x_ref, cls_ref, pos_ref,
                ln1g_ref, ln1b_ref, wqkv_ref, wout_ref, bout_ref,
                ln2g_ref, ln2b_ref, w1_ref, b1_ref, w2_ref, b2_ref,
                o_ref, act_ref,
                *, batch, num_patch, depth, heads, dim_head):
    seq = num_patch + 1                              # tokens incl. cls
    inner = heads * dim_head

    # ---- build token sequence: cls concat + positional embedding -----------
    # (B=2 -> four small stores; for large B use a single full store / strided
    #  pl.ds access instead.)
    pos = pos_ref[0]                                 # (S, D)
    cls_row = cls_ref[0] + pos[0:1, :]               # (1, D)
    body_pos = pos[1:, :]                            # (N, D)
    for b in range(batch):                           # static unroll
        act_ref[b * seq:b * seq + 1, :] = cls_row
        act_ref[b * seq + 1:(b + 1) * seq, :] = x_ref[b] + body_pos
    act = act_ref[...]                               # (B*S, D) in registers

    for layer in range(depth):                       # static unroll, weights resident
        # ---- Residual(PreNorm(Attention)) -----------------------------------
        xn = _layernorm(act, ln1g_ref[layer], ln1b_ref[layer])
        # single fused qkv matmul; attention scale already folded into weights
        qkv = jnp.dot(xn, wqkv_ref[layer],
                      preferred_element_type=jnp.float32)      # (B*S, 3*inner)

        for b in range(batch):                        # static (B small)
            r0, r1 = b * seq, (b + 1) * seq
            head_outs = []
            for h in range(heads):                    # static unroll
                c0 = h * dim_head
                qh = qkv[r0:r1, c0:c0 + dim_head]                         # (S, dh)
                kh = qkv[r0:r1, inner + c0:inner + c0 + dim_head]
                vh = qkv[r0:r1, 2 * inner + c0:2 * inner + c0 + dim_head]
                # contract last dims directly (no kh.T / XLU transpose)
                dots = lax.dot_general(qh, kh, (((1,), (1,)), ((), ())),
                                       preferred_element_type=jnp.float32)
                dots = dots - jnp.max(dots, axis=-1, keepdims=True)
                e = jnp.exp(dots)
                p = e * pl.reciprocal(jnp.sum(e, axis=-1, keepdims=True),
                                      approx=False)            # exact, parity w/ torch
                head_outs.append(jnp.dot(p, vh,
                                         preferred_element_type=jnp.float32))
            # heads concatenated in registers -> straight into the out projection
            hcat = jnp.concatenate(head_outs, axis=-1)          # (S, inner)
            attn_b = jnp.dot(hcat, wout_ref[layer],
                             preferred_element_type=jnp.float32) + bout_ref[layer]
            act_ref[r0:r1, :] = act[r0:r1, :] + attn_b          # residual rows
        act = act_ref[...]                            # re-assembled (B*S, D)

        # ---- Residual(PreNorm(FeedForward)) ---------------------------------
        xn2 = _layernorm(act, ln2g_ref[layer], ln2b_ref[layer])
        hid = jnp.dot(xn2, w1_ref[layer],
                      preferred_element_type=jnp.float32) + b1_ref[layer]
        # exact (erf-based) GELU, matching torch.nn.GELU default
        hid = 0.5 * hid * (1.0 + lax.erf(hid * (1.0 / math.sqrt(2.0))))
        ffo = jnp.dot(hid, w2_ref[layer],
                      preferred_element_type=jnp.float32) + b2_ref[layer]
        act = act + ffo                               # stays in registers

        if layer + 1 < depth:
            act_ref[...] = act                        # assembly buffer for next layer

    # ---- extract cls token per batch element (to_latent = Identity) --------
    for b in range(batch):
        o_ref[b:b + 1, :] = act[b * seq:b * seq + 1, :].astype(o_ref.dtype)


# ----------------------------------------------------------------------------
# pallas_call wrapper: one call, all inputs whole-array VMEM-resident.
# ----------------------------------------------------------------------------
def pte8_forward(x, params, *, heads, dim_head):
    B, N, D = x.shape
    S = N + 1
    depth = params["w_qkv"].shape[0]

    kernel = functools.partial(pte8_kernel, batch=B, num_patch=N, depth=depth,
                               heads=heads, dim_head=dim_head)

    vmem = pl.BlockSpec(memory_space=pltpu.MemorySpace.VMEM)   # whole array in VMEM

    return pl.pallas_call(
        kernel,
        out_shape=jax.ShapeDtypeStruct((B, D), x.dtype),
        in_specs=[vmem] * 14,
        out_specs=vmem,
        scratch_shapes=[
            pltpu.VMEM((B * S, D), jnp.float32),   # flattened-activation assembly buffer
        ],
    )(x, params["cls_token"], params["pos_embedding"],
      params["ln1_g"], params["ln1_b"], params["w_qkv"],
      params["w_out"], params["b_out"],
      params["ln2_g"], params["ln2_b"],
      params["w1"], params["b1"], params["w2"], params["b2"])


# ----------------------------------------------------------------------------
# Parameter construction (deterministic, synthetic), stacked over depth.
# ----------------------------------------------------------------------------
def init_params(key, *, out_channel, num_patch, heads, dim_head, mlp_dim,
                depth, scale):
    D = out_channel
    inner = heads * dim_head
    ks = jax.random.split(key, 9)

    def nrm(k, shape, s=0.05):
        return s * jax.random.normal(k, shape, jnp.float32)

    # nn.Linear(D, 3*inner, bias=False).weight, stored transposed so the
    # kernel computes x @ W; attention scale folded into the q columns
    # (host side -> zero runtime cost).
    w_q = nrm(ks[2], (depth, D, inner))
    w_k = nrm(ks[3], (depth, D, inner))
    w_v = nrm(ks[4], (depth, D, inner))
    w_qkv = jnp.concatenate([w_q * scale, w_k, w_v], axis=-1)   # (depth, D, 3*inner)

    return {
        "cls_token": jax.random.normal(ks[0], (1, 1, D), jnp.float32),
        "pos_embedding": jax.random.normal(ks[1], (1, num_patch + 1, D),
                                           jnp.float32),
        "ln1_g": jnp.ones((depth, 1, D), jnp.float32),
        "ln1_b": jnp.zeros((depth, 1, D), jnp.float32),
        "w_qkv": w_qkv,
        "w_out": nrm(ks[5], (depth, inner, D)),
        "b_out": nrm(ks[6], (depth, 1, D)),
        "ln2_g": jnp.ones((depth, 1, D), jnp.float32),
        "ln2_b": jnp.zeros((depth, 1, D), jnp.float32),
        "w1": nrm(ks[7], (depth, D, mlp_dim)),
        "b1": jnp.zeros((depth, 1, mlp_dim), jnp.float32),
        "w2": nrm(ks[8], (depth, mlp_dim, D)),
        "b2": jnp.zeros((depth, 1, D), jnp.float32),
    }


if __name__ == "__main__":
    # small config consistent with the module's forward
    batch = 2
    num_patch = 8            # n
    out_channel = 32         # model dim D (input last dim must equal D)
    heads = 4
    dim_head = 8
    mlp_dim = 64
    depth = 2
    scale = out_channel ** (-0.5)   # matches `self.scale = dim ** -0.5`

    key = jax.random.PRNGKey(0)
    kx, kp = jax.random.split(key)
    x = jax.random.normal(kx, (batch, num_patch, out_channel), jnp.float32)
    params = init_params(kp, out_channel=out_channel, num_patch=num_patch,
                         heads=heads, dim_head=dim_head, mlp_dim=mlp_dim,
                         depth=depth, scale=scale)

    out = pte8_forward(x, params, heads=heads, dim_head=dim_head)
    out = jax.block_until_ready(out)
    assert out.shape == (batch, out_channel), out.shape
    assert bool(jnp.all(jnp.isfinite(out)))
    print("KERNEL_OK")
</pallas_src>

<mosaic_0001>
module attributes {stable_mosaic.version = 11 : i64} {
  func.func @pte8_kernel(%arg0: memref<2x8x32xf32, #tpu.memory_space<vmem>>, %arg1: memref<1x1x32xf32, #tpu.memory_space<vmem>>, %arg2: memref<1x9x32xf32, #tpu.memory_space<vmem>>, %arg3: memref<2x1x32xf32, #tpu.memory_space<vmem>>, %arg4: memref<2x1x32xf32, #tpu.memory_space<vmem>>, %arg5: memref<2x32x96xf32, #tpu.memory_space<vmem>>, %arg6: memref<2x32x32xf32, #tpu.memory_space<vmem>>, %arg7: memref<2x1x32xf32, #tpu.memory_space<vmem>>, %arg8: memref<2x1x32xf32, #tpu.memory_space<vmem>>, %arg9: memref<2x1x32xf32, #tpu.memory_space<vmem>>, %arg10: memref<2x32x64xf32, #tpu.memory_space<vmem>>, %arg11: memref<2x1x64xf32, #tpu.memory_space<vmem>>, %arg12: memref<2x64x32xf32, #tpu.memory_space<vmem>>, %arg13: memref<2x1x32xf32, #tpu.memory_space<vmem>>, %arg14: memref<2x32xf32, #tpu.memory_space<vmem>>, %arg15: memref<18x32xf32, #tpu.memory_space<vmem>>) attributes {dimension_semantics = [], scalar_prefetch = 0 : i64, scratch_operands = 1 : i64, tpu.core_type = #tpu.core_type<tc>} {
    %c0 = arith.constant 0 : index
    %c0_0 = arith.constant 0 : index
    %c0_1 = arith.constant 0 : index
    %0 = vector.load %arg2[%c0, %c0_0, %c0_1] : memref<1x9x32xf32, #tpu.memory_space<vmem>>, vector<1x9x32xf32>
    %1 = vector.shape_cast %0 : vector<1x9x32xf32> to vector<9x32xf32>
    %c0_2 = arith.constant 0 : index
    %c0_3 = arith.constant 0 : index
    %c0_4 = arith.constant 0 : index
    %2 = vector.load %arg1[%c0_2, %c0_3, %c0_4] : memref<1x1x32xf32, #tpu.memory_space<vmem>>, vector<1x1x32xf32>
    %3 = vector.shape_cast %2 : vector<1x1x32xf32> to vector<1x32xf32>
    %4 = vector.extract_strided_slice %1 {offsets = [0, 0], sizes = [1, 32], strides = [1, 1]} : vector<9x32xf32> to vector<1x32xf32>
    %5 = arith.addf %3, %4 : vector<1x32xf32>
    %6 = vector.extract_strided_slice %1 {offsets = [1, 0], sizes = [8, 32], strides = [1, 1]} : vector<9x32xf32> to vector<8x32xf32>
    %c0_5 = arith.constant 0 : index
    %c0_6 = arith.constant 0 : index
    %7 = vector.load %arg15[%c0_5, %c0_6] : memref<18x32xf32, #tpu.memory_space<vmem>>, vector<1x32xf32>
    tpu.vector_store %arg15[%c0_5, %c0_6], %5 {strides = array<i32>} : memref<18x32xf32, #tpu.memory_space<vmem>>, vector<1x32xf32>,
    %c0_7 = arith.constant 0 : index
    %c0_8 = arith.constant 0 : index
    %c0_9 = arith.constant 0 : index
    %8 = vector.load %arg0[%c0_7, %c0_8, %c0_9] : memref<2x8x32xf32, #tpu.memory_space<vmem>>, vector<1x8x32xf32>
    %9 = vector.shape_cast %8 : vector<1x8x32xf32> to vector<8x32xf32>
    %10 = arith.addf %9, %6 : vector<8x32xf32>
    %c1 = arith.constant 1 : index
    %c0_10 = arith.constant 0 : index
    %11 = vector.load %arg15[%c1, %c0_10] : memref<18x32xf32, #tpu.memory_space<vmem>>, vector<8x32xf32>
    tpu.vector_store %arg15[%c1, %c0_10], %10 {strides = array<i32>} : memref<18x32xf32, #tpu.memory_space<vmem>>, vector<8x32xf32>,
    %c9 = arith.constant 9 : index
    %c0_11 = arith.constant 0 : index
    %12 = vector.load %arg15[%c9, %c0_11] : memref<18x32xf32, #tpu.memory_space<vmem>>, vector<1x32xf32>
    tpu.vector_store %arg15[%c9, %c0_11], %5 {strides = array<i32>} : memref<18x32xf32, #tpu.memory_space<vmem>>, vector<1x32xf32>,
    %c1_12 = arith.constant 1 : index
    %c0_13 = arith.constant 0 : index
    %c0_14 = arith.constant 0 : index
    %13 = vector.load %arg0[%c1_12, %c0_13, %c0_14] : memref<2x8x32xf32, #tpu.memory_space<vmem>>, vector<1x8x32xf32>
    %14 = vector.shape_cast %13 : vector<1x8x32xf32> to vector<8x32xf32>
    %15 = arith.addf %14, %6 : vector<8x32xf32>
    %c10 = arith.constant 10 : index
    %c0_15 = arith.constant 0 : index
    %16 = vector.load %arg15[%c10, %c0_15] : memref<18x32xf32, #tpu.memory_space<vmem>>, vector<8x32xf32>
    tpu.vector_store %arg15[%c10, %c0_15], %15 {strides = array<i32>} : memref<18x32xf32, #tpu.memory_space<vmem>>, vector<8x32xf32>,
    %c0_16 = arith.constant 0 : index
    %c0_17 = arith.constant 0 : index
    %17 = vector.load %arg15[%c0_16, %c0_17] : memref<18x32xf32, #tpu.memory_space<vmem>>, vector<18x32xf32>
    %c0_18 = arith.constant 0 : index
    %c0_19 = arith.constant 0 : index
    %c0_20 = arith.constant 0 : index
    %18 = vector.load %arg3[%c0_18, %c0_19, %c0_20] : memref<2x1x32xf32, #tpu.memory_space<vmem>>, vector<1x1x32xf32>
    %19 = vector.shape_cast %18 : vector<1x1x32xf32> to vector<1x32xf32>
    %c0_21 = arith.constant 0 : index
    %c0_22 = arith.constant 0 : index
    %c0_23 = arith.constant 0 : index
    %20 = vector.load %arg4[%c0_21, %c0_22, %c0_23] : memref<2x1x32xf32, #tpu.memory_space<vmem>>, vector<1x1x32xf32>
    %21 = vector.shape_cast %20 : vector<1x1x32xf32> to vector<1x32xf32>
    %cst = arith.constant dense<0.000000e+00> : vector<18xf32>
    %22 = vector.multi_reduction <add>, %17, %cst [1] : vector<18x32xf32> to vector<18xf32>
    %23 = vector.shape_cast %22 : vector<18xf32> to vector<18x1xf32>
    %cst_24 = arith.constant 3.200000e+01 : f32
    %24 = vector.broadcast %cst_24 : f32 to vector<18x1xf32>
    %25 = arith.divf %23, %24 : vector<18x1xf32>
    %26 = vector.broadcast %25 : vector<18x1xf32> to vector<18x32xf32>
    %27 = arith.subf %17, %26 : vector<18x32xf32>
    %28 = arith.mulf %27, %27 : vector<18x32xf32>
    %cst_25 = arith.constant dense<0.000000e+00> : vector<18xf32>
    %29 = vector.multi_reduction <add>, %28, %cst_25 [1] : vector<18x32xf32> to vector<18xf32>
    %30 = vector.shape_cast %29 : vector<18xf32> to vector<18x1xf32>
    %cst_26 = arith.constant 3.200000e+01 : f32
    %31 = vector.broadcast %cst_26 : f32 to vector<18x1xf32>
    %32 = arith.divf %30, %31 : vector<18x1xf32>
    %33 = vector.broadcast %25 : vector<18x1xf32> to vector<18x32xf32>
    %34 = arith.subf %17, %33 : vector<18x32xf32>
    %cst_27 = arith.constant 9.99999974E-6 : f32
    %35 = vector.broadcast %cst_27 : f32 to vector<18x1xf32>
    %36 = arith.addf %32, %35 : vector<18x1xf32>
    %37 = math.rsqrt %36 : vector<18x1xf32>
    %38 = vector.broadcast %37 : vector<18x1xf32> to vector<18x32xf32>
    %39 = arith.mulf %34, %38 : vector<18x32xf32>
    %40 = vector.broadcast %19 : vector<1x32xf32> to vector<18x32xf32>
    %41 = arith.mulf %39, %40 : vector<18x32xf32>
    %42 = vector.broadcast %21 : vector<1x32xf32> to vector<18x32xf32>
    %43 = arith.addf %41, %42 : vector<18x32xf32>
    %c0_28 = arith.constant 0 : index
    %c0_29 = arith.constant 0 : index
    %c0_30 = arith.constant 0 : index
    %44 = vector.load %arg5[%c0_28, %c0_29, %c0_30] : memref<2x32x96xf32, #tpu.memory_space<vmem>>, vector<1x32x96xf32>
    %45 = vector.shape_cast %44 : vector<1x32x96xf32> to vector<32x96xf32>
    %cst_31 = arith.constant dense<0.000000e+00> : vector<18x96xf32>
    %46 = tpu.matmul %43, %45, %cst_31 {dimension_numbers = #tpu.dot_dimension_numbers<[1], [0], [0], [1], [0, 0, 1, 1], [], []>} : vector<18x32xf32>, vector<32x96xf32>, vector<18x96xf32> -> vector<18x96xf32>
    %47 = vector.extract_strided_slice %46 {offsets = [0, 0], sizes = [9, 8], strides = [1, 1]} : vector<18x96xf32> to vector<9x8xf32>
    %48 = vector.extract_strided_slice %46 {offsets = [0, 32], sizes = [9, 8], strides = [1, 1]} : vector<18x96xf32> to vector<9x8xf32>
    %49 = vector.extract_strided_slice %46 {offsets = [0, 64], sizes = [9, 8], strides = [1, 1]} : vector<18x96xf32> to vector<9x8xf32>
    %cst_32 = arith.constant dense<0.000000e+00> : vector<9x9xf32>
    %50 = tpu.matmul %47, %48, %cst_32 {dimension_numbers = #tpu.dot_dimension_numbers<[1], [1], [0], [0], [0, 0, 1, 0], [], []>} : vector<9x8xf32>, vector<9x8xf32>, vector<9x9xf32> -> vector<9x9xf32>
    %cst_33 = arith.constant dense<0xFF800000> : vector<9xf32>
    %51 = vector.multi_reduction <maximumf>, %50, %cst_33 [1] : vector<9x9xf32> to vector<9xf32>
    %52 = vector.shape_cast %51 : vector<9xf32> to vector<9x1xf32>
    %53 = vector.broadcast %52 : vector<9x1xf32> to vector<9x9xf32>
    %54 = arith.subf %50, %53 : vector<9x9xf32>
    %55 = math.exp %54 : vector<9x9xf32>
    %cst_34 = arith.constant dense<0.000000e+00> : vector<9xf32>
    %56 = vector.multi_reduction <add>, %55, %cst_34 [1] : vector<9x9xf32> to vector<9xf32>
    %57 = vector.shape_cast %56 : vector<9xf32> to vector<9x1xf32>
    %58 = tpu.reciprocal %57 : vector<9x1xf32> -> vector<9x1xf32>
    %59 = vector.broadcast %58 : vector<9x1xf32> to vector<9x9xf32>
    %60 = arith.mulf %55, %59 : vector<9x9xf32>
    %cst_35 = arith.constant dense<0.000000e+00> : vector<9x8xf32>
    %61 = tpu.matmul %60, %49, %cst_35 {dimension_numbers = #tpu.dot_dimension_numbers<[1], [0], [0], [1], [0, 0, 1, 1], [], []>} : vector<9x9xf32>, vector<9x8xf32>, vector<9x8xf32> -> vector<9x8xf32>
    %62 = vector.extract_strided_slice %46 {offsets = [0, 8], sizes = [9, 8], strides = [1, 1]} : vector<18x96xf32> to vector<9x8xf32>
    %63 = vector.extract_strided_slice %46 {offsets = [0, 40], sizes = [9, 8], strides = [1, 1]} : vector<18x96xf32> to vector<9x8xf32>
    %64 = vector.extract_strided_slice %46 {offsets = [0, 72], sizes = [9, 8], strides = [1, 1]} : vector<18x96xf32> to vector<9x8xf32>
    %cst_36 = arith.constant dense<0.000000e+00> : vector<9x9xf32>
    %65 = tpu.matmul %62, %63, %cst_36 {dimension_numbers = #tpu.dot_dimension_numbers<[1], [1], [0], [0], [0, 0, 1, 0], [], []>} : vector<9x8xf32>, vector<9x8xf32>, vector<9x9xf32> -> vector<9x9xf32>
    %cst_37 = arith.constant dense<0xFF800000> : vector<9xf32>
    %66 = vector.multi_reduction <maximumf>, %65, %cst_37 [1] : vector<9x9xf32> to vector<9xf32>
    %67 = vector.shape_cast %66 : vector<9xf32> to vector<9x1xf32>
    %68 = vector.broadcast %67 : vector<9x1xf32> to vector<9x9xf32>
    %69 = arith.subf %65, %68 : vector<9x9xf32>
    %70 = math.exp %69 : vector<9x9xf32>
    %cst_38 = arith.constant dense<0.000000e+00> : vector<9xf32>
    %71 = vector.multi_reduction <add>, %70, %cst_38 [1] : vector<9x9xf32> to vector<9xf32>
    %72 = vector.shape_cast %71 : vector<9xf32> to vector<9x1xf32>
    %73 = tpu.reciprocal %72 : vector<9x1xf32> -> vector<9x1xf32>
    %74 = vector.broadcast %73 : vector<9x1xf32> to vector<9x9xf32>
    %75 = arith.mulf %70, %74 : vector<9x9xf32>
    %cst_39 = arith.constant dense<0.000000e+00> : vector<9x8xf32>
    %76 = tpu.matmul %75, %64, %cst_39 {dimension_numbers = #tpu.dot_dimension_numbers<[1], [0], [0], [1], [0, 0, 1, 1], [], []>} : vector<9x9xf32>, vector<9x8xf32>, vector<9x8xf32> -> vector<9x8xf32>
    %77 = vector.extract_strided_slice %46 {offsets = [0, 16], sizes = [9, 8], strides = [1, 1]} : vector<18x96xf32> to vector<9x8xf32>
    %78 = vector.extract_strided_slice %46 {offsets = [0, 48], sizes = [9, 8], strides = [1, 1]} : vector<18x96xf32> to vector<9x8xf32>
    %79 = vector.extract_strided_slice %46 {offsets = [0, 80], sizes = [9, 8], strides = [1, 1]} : vector<18x96xf32> to vector<9x8xf32>
    %cst_40 = arith.constant dense<0.000000e+00> : vector<9x9xf32>
    %80 = tpu.matmul %77, %78, %cst_40 {dimension_numbers = #tpu.dot_dimension_numbers<[1], [1], [0], [0], [0, 0, 1, 0], [], []>} : vector<9x8xf32>, vector<9x8xf32>, vector<9x9xf32> -> vector<9x9xf32>
    %cst_41 = arith.constant dense<0xFF800000> : vector<9xf32>
    %81 = vector.multi_reduction <maximumf>, %80, %cst_41 [1] : vector<9x9xf32> to vector<9xf32>
    %82 = vector.shape_cast %81 : vector<9xf32> to vector<9x1xf32>
    %83 = vector.broadcast %82 : vector<9x1xf32> to vector<9x9xf32>
    %84 = arith.subf %80, %83 : vector<9x9xf32>
    %85 = math.exp %84 : vector<9x9xf32>
    %cst_42 = arith.constant dense<0.000000e+00> : vector<9xf32>
    %86 = vector.multi_reduction <add>, %85, %cst_42 [1] : vector<9x9xf32> to vector<9xf32>
    %87 = vector.shape_cast %86 : vector<9xf32> to vector<9x1xf32>
    %88 = tpu.reciprocal %87 : vector<9x1xf32> -> vector<9x1xf32>
    %89 = vector.broadcast %88 : vector<9x1xf32> to vector<9x9xf32>
    %90 = arith.mulf %85, %89 : vector<9x9xf32>
    %cst_43 = arith.constant dense<0.000000e+00> : vector<9x8xf32>
    %91 = tpu.matmul %90, %79, %cst_43 {dimension_numbers = #tpu.dot_dimension_numbers<[1], [0], [0], [1], [0, 0, 1, 1], [], []>} : vector<9x9xf32>, vector<9x8xf32>, vector<9x8xf32> -> vector<9x8xf32>
    %92 = vector.extract_strided_slice %46 {offsets = [0, 24], sizes = [9, 8], strides = [1, 1]} : vector<18x96xf32> to vector<9x8xf32>
    %93 = vector.extract_strided_slice %46 {offsets = [0, 56], sizes = [9, 8], strides = [1, 1]} : vector<18x96xf32> to vector<9x8xf32>
    %94 = vector.extract_strided_slice %46 {offsets = [0, 88], sizes = [9, 8], strides = [1, 1]} : vector<18x96xf32> to vector<9x8xf32>
    %cst_44 = arith.constant dense<0.000000e+00> : vector<9x9xf32>
    %95 = tpu.matmul %92, %93, %cst_44 {dimension_numbers = #tpu.dot_dimension_numbers<[1], [1], [0], [0], [0, 0, 1, 0], [], []>} : vector<9x8xf32>, vector<9x8xf32>, vector<9x9xf32> -> vector<9x9xf32>
    %cst_45 = arith.constant dense<0xFF800000> : vector<9xf32>
    %96 = vector.multi_reduction <maximumf>, %95, %cst_45 [1] : vector<9x9xf32> to vector<9xf32>
    %97 = vector.shape_cast %96 : vector<9xf32> to vector<9x1xf32>
    %98 = vector.broadcast %97 : vector<9x1xf32> to vector<9x9xf32>
    %99 = arith.subf %95, %98 : vector<9x9xf32>
    %100 = math.exp %99 : vector<9x9xf32>
    %cst_46 = arith.constant dense<0.000000e+00> : vector<9xf32>
    %101 = vector.multi_reduction <add>, %100, %cst_46 [1] : vector<9x9xf32> to vector<9xf32>
    %102 = vector.shape_cast %101 : vector<9xf32> to vector<9x1xf32>
    %103 = tpu.reciprocal %102 : vector<9x1xf32> -> vector<9x1xf32>
    %104 = vector.broadcast %103 : vector<9x1xf32> to vector<9x9xf32>
    %105 = arith.mulf %100, %104 : vector<9x9xf32>
    %cst_47 = arith.constant dense<0.000000e+00> : vector<9x8xf32>
    %106 = tpu.matmul %105, %94, %cst_47 {dimension_numbers = #tpu.dot_dimension_numbers<[1], [0], [0], [1], [0, 0, 1, 1], [], []>} : vector<9x9xf32>, vector<9x8xf32>, vector<9x8xf32> -> vector<9x8xf32>
    %107 = tpu.concatenate %61, %76, %91, %106 in 1 : vector<9x8xf32>, vector<9x8xf32>, vector<9x8xf32>, vector<9x8xf32> -> vector<9x32xf32>
    %c0_48 = arith.constant 0 : index
    %c0_49 = arith.constant 0 : index
    %c0_50 = arith.constant 0 : index
    %108 = vector.load %arg6[%c0_48, %c0_49, %c0_50] : memref<2x32x32xf32, #tpu.memory_space<vmem>>, vector<1x32x32xf32>
    %109 = vector.shape_cast %108 : vector<1x32x32xf32> to vector<32x32xf32>
    %cst_51 = arith.constant dense<0.000000e+00> : vector<9x32xf32>
    %110 = tpu.matmul %107, %109, %cst_51 {dimension_numbers = #tpu.dot_dimension_numbers<[1], [0], [0], [1], [0, 0, 1, 1], [], []>} : vector<9x32xf32>, vector<32x32xf32>, vector<9x32xf32> -> vector<9x32xf32>
    %c0_52 = arith.constant 0 : index
    %c0_53 = arith.constant 0 : index
    %c0_54 = arith.constant 0 : index
    %111 = vector.load %arg7[%c0_52, %c0_53, %c0_54] : memref<2x1x32xf32, #tpu.memory_space<vmem>>, vector<1x1x32xf32>
    %112 = vector.shape_cast %111 : vector<1x1x32xf32> to vector<1x32xf32>
    %113 = vector.broadcast %112 : vector<1x32xf32> to vector<9x32xf32>
    %114 = arith.addf %110, %113 : vector<9x32xf32>
    %115 = vector.extract_strided_slice %17 {offsets = [0, 0], sizes = [9, 32], strides = [1, 1]} : vector<18x32xf32> to vector<9x32xf32>
    %116 = arith.addf %115, %114 : vector<9x32xf32>
    %c0_55 = arith.constant 0 : index
    %c0_56 = arith.constant 0 : index
    %117 = vector.load %arg15[%c0_55, %c0_56] : memref<18x32xf32, #tpu.memory_space<vmem>>, vector<9x32xf32>
    tpu.vector_store %arg15[%c0_55, %c0_56], %116 {strides = array<i32>} : memref<18x32xf32, #tpu.memory_space<vmem>>, vector<9x32xf32>,
    %118 = vector.extract_strided_slice %46 {offsets = [9, 0], sizes = [9, 8], strides = [1, 1]} : vector<18x96xf32> to vector<9x8xf32>
    %119 = vector.extract_strided_slice %46 {offsets = [9, 32], sizes = [9, 8], strides = [1, 1]} : vector<18x96xf32> to vector<9x8xf32>
    %120 = vector.extract_strided_slice %46 {offsets = [9, 64], sizes = [9, 8], strides = [1, 1]} : vector<18x96xf32> to vector<9x8xf32>
    %cst_57 = arith.constant dense<0.000000e+00> : vector<9x9xf32>
    %121 = tpu.matmul %118, %119, %cst_57 {dimension_numbers = #tpu.dot_dimension_numbers<[1], [1], [0], [0], [0, 0, 1, 0], [], []>} : vector<9x8xf32>, vector<9x8xf32>, vector<9x9xf32> -> vector<9x9xf32>
    %cst_58 = arith.constant dense<0xFF800000> : vector<9xf32>
    %122 = vector.multi_reduction <maximumf>, %121, %cst_58 [1] : vector<9x9xf32> to vector<9xf32>
    %123 = vector.shape_cast %122 : vector<9xf32> to vector<9x1xf32>
    %124 = vector.broadcast %123 : vector<9x1xf32> to vector<9x9xf32>
    %125 = arith.subf %121, %124 : vector<9x9xf32>
    %126 = math.exp %125 : vector<9x9xf32>
    %cst_59 = arith.constant dense<0.000000e+00> : vector<9xf32>
    %127 = vector.multi_reduction <add>, %126, %cst_59 [1] : vector<9x9xf32> to vector<9xf32>
    %128 = vector.shape_cast %127 : vector<9xf32> to vector<9x1xf32>
    %129 = tpu.reciprocal %128 : vector<9x1xf32> -> vector<9x1xf32>
    %130 = vector.broadcast %129 : vector<9x1xf32> to vector<9x9xf32>
    %131 = arith.mulf %126, %130 : vector<9x9xf32>
    %cst_60 = arith.constant dense<0.000000e+00> : vector<9x8xf32>
    %132 = tpu.matmul %131, %120, %cst_60 {dimension_numbers = #tpu.dot_dimension_numbers<[1], [0], [0], [1], [0, 0, 1, 1], [], []>} : vector<9x9xf32>, vector<9x8xf32>, vector<9x8xf32> -> vector<9x8xf32>
    %133 = vector.extract_strided_slice %46 {offsets = [9, 8], sizes = [9, 8], strides = [1, 1]} : vector<18x96xf32> to vector<9x8xf32>
    %134 = vector.extract_strided_slice %46 {offsets = [9, 40], sizes = [9, 8], strides = [1, 1]} : vector<18x96xf32> to vector<9x8xf32>
    %135 = vector.extract_strided_slice %46 {offsets = [9, 72], sizes = [9, 8], strides = [1, 1]} : vector<18x96xf32> to vector<9x8xf32>
    %cst_61 = arith.constant dense<0.000000e+00> : vector<9x9xf32>
    %136 = tpu.matmul %133, %134, %cst_61 {dimension_numbers = #tpu.dot_dimension_numbers<[1], [1], [0], [0], [0, 0, 1, 0], [], []>} : vector<9x8xf32>, vector<9x8xf32>, vector<9x9xf32> -> vector<9x9xf32>
    %cst_62 = arith.constant dense<0xFF800000> : vector<9xf32>
    %137 = vector.multi_reduction <maximumf>, %136, %cst_62 [1] : vector<9x9xf32> to vector<9xf32>
    %138 = vector.shape_cast %137 : vector<9xf32> to vector<9x1xf32>
    %139 = vector.broadcast %138 : vector<9x1xf32> to vector<9x9xf32>
    %140 = arith.subf %136, %139 : vector<9x9xf32>
    %141 = math.exp %140 : vector<9x9xf32>
    %cst_63 = arith.constant dense<0.000000e+00> : vector<9xf32>
    %142 = vector.multi_reduction <add>, %141, %cst_63 [1] : vector<9x9xf32> to vector<9xf32>
    %143 = vector.shape_cast %142 : vector<9xf32> to vector<9x1xf32>
    %144 = tpu.reciprocal %143 : vector<9x1xf32> -> vector<9x1xf32>
    %145 = vector.broadcast %144 : vector<9x1xf32> to vector<9x9xf32>
    %146 = arith.mulf %141, %145 : vector<9x9xf32>
    %cst_64 = arith.constant dense<0.000000e+00> : vector<9x8xf32>
    %147 = tpu.matmul %146, %135, %cst_64 {dimension_numbers = #tpu.dot_dimension_numbers<[1], [0], [0], [1], [0, 0, 1, 1], [], []>} : vector<9x9xf32>, vector<9x8xf32>, vector<9x8xf32> -> vector<9x8xf32>
    %148 = vector.extract_strided_slice %46 {offsets = [9, 16], sizes = [9, 8], strides = [1, 1]} : vector<18x96xf32> to vector<9x8xf32>
    %149 = vector.extract_strided_slice %46 {offsets = [9, 48], sizes = [9, 8], strides = [1, 1]} : vector<18x96xf32> to vector<9x8xf32>
    %150 = vector.extract_strided_slice %46 {offsets = [9, 80], sizes = [9, 8], strides = [1, 1]} : vector<18x96xf32> to vector<9x8xf32>
    %cst_65 = arith.constant dense<0.000000e+00> : vector<9x9xf32>
    %151 = tpu.matmul %148, %149, %cst_65 {dimension_numbers = #tpu.dot_dimension_numbers<[1], [1], [0], [0], [0, 0, 1, 0], [], []>} : vector<9x8xf32>, vector<9x8xf32>, vector<9x9xf32> -> vector<9x9xf32>
    %cst_66 = arith.constant dense<0xFF800000> : vector<9xf32>
    %152 = vector.multi_reduction <maximumf>, %151, %cst_66 [1] : vector<9x9xf32> to vector<9xf32>
    %153 = vector.shape_cast %152 : vector<9xf32> to vector<9x1xf32>
    %154 = vector.broadcast %153 : vector<9x1xf32> to vector<9x9xf32>
    %155 = arith.subf %151, %154 : vector<9x9xf32>
    %156 = math.exp %155 : vector<9x9xf32>
    %cst_67 = arith.constant dense<0.000000e+00> : vector<9xf32>
    %157 = vector.multi_reduction <add>, %156, %cst_67 [1] : vector<9x9xf32> to vector<9xf32>
    %158 = vector.shape_cast %157 : vector<9xf32> to vector<9x1xf32>
    %159 = tpu.reciprocal %158 : vector<9x1xf32> -> vector<9x1xf32>
    %160 = vector.broadcast %159 : vector<9x1xf32> to vector<9x9xf32>
    %161 = arith.mulf %156, %160 : vector<9x9xf32>
    %cst_68 = arith.constant dense<0.000000e+00> : vector<9x8xf32>
    %162 = tpu.matmul %161, %150, %cst_68 {dimension_numbers = #tpu.dot_dimension_numbers<[1], [0], [0], [1], [0, 0, 1, 1], [], []>} : vector<9x9xf32>, vector<9x8xf32>, vector<9x8xf32> -> vector<9x8xf32>
    %163 = vector.extract_strided_slice %46 {offsets = [9, 24], sizes = [9, 8], strides = [1, 1]} : vector<18x96xf32> to vector<9x8xf32>
    %164 = vector.extract_strided_slice %46 {offsets = [9, 56], sizes = [9, 8], strides = [1, 1]} : vector<18x96xf32> to vector<9x8xf32>
    %165 = vector.extract_strided_slice %46 {offsets = [9, 88], sizes = [9, 8], strides = [1, 1]} : vector<18x96xf32> to vector<9x8xf32>
    %cst_69 = arith.constant dense<0.000000e+00> : vector<9x9xf32>
    %166 = tpu.matmul %163, %164, %cst_69 {dimension_numbers = #tpu.dot_dimension_numbers<[1], [1], [0], [0], [0, 0, 1, 0], [], []>} : vector<9x8xf32>, vector<9x8xf32>, vector<9x9xf32> -> vector<9x9xf32>
    %cst_70 = arith.constant dense<0xFF800000> : vector<9xf32>
    %167 = vector.multi_reduction <maximumf>, %166, %cst_70 [1] : vector<9x9xf32> to vector<9xf32>
    %168 = vector.shape_cast %167 : vector<9xf32> to vector<9x1xf32>
    %169 = vector.broadcast %168 : vector<9x1xf32> to vector<9x9xf32>
    %170 = arith.subf %166, %169 : vector<9x9xf32>
    %171 = math.exp %170 : vector<9x9xf32>
    %cst_71 = arith.constant dense<0.000000e+00> : vector<9xf32>
    %172 = vector.multi_reduction <add>, %171, %cst_71 [1] : vector<9x9xf32> to vector<9xf32>
    %173 = vector.shape_cast %172 : vector<9xf32> to vector<9x1xf32>
    %174 = tpu.reciprocal %173 : vector<9x1xf32> -> vector<9x1xf32>
    %175 = vector.broadcast %174 : vector<9x1xf32> to vector<9x9xf32>
    %176 = arith.mulf %171, %175 : vector<9x9xf32>
    %cst_72 = arith.constant dense<0.000000e+00> : vector<9x8xf32>
    %177 = tpu.matmul %176, %165, %cst_72 {dimension_numbers = #tpu.dot_dimension_numbers<[1], [0], [0], [1], [0, 0, 1, 1], [], []>} : vector<9x9xf32>, vector<9x8xf32>, vector<9x8xf32> -> vector<9x8xf32>
    %178 = tpu.concatenate %132, %147, %162, %177 in 1 : vector<9x8xf32>, vector<9x8xf32>, vector<9x8xf32>, vector<9x8xf32> -> vector<9x32xf32>
    %c0_73 = arith.constant 0 : index
    %c0_74 = arith.constant 0 : index
    %c0_75 = arith.constant 0 : index
    %179 = vector.load %arg6[%c0_73, %c0_74, %c0_75] : memref<2x32x32xf32, #tpu.memory_space<vmem>>, vector<1x32x32xf32>
    %180 = vector.shape_cast %179 : vector<1x32x32xf32> to vector<32x32xf32>
    %cst_76 = arith.constant dense<0.000000e+00> : vector<9x32xf32>
    %181 = tpu.matmul %178, %180, %cst_76 {dimension_numbers = #tpu.dot_dimension_numbers<[1], [0], [0], [1], [0, 0, 1, 1], [], []>} : vector<9x32xf32>, vector<32x32xf32>, vector<9x32xf32> -> vector<9x32xf32>
    %c0_77 = arith.constant 0 : index
    %c0_78 = arith.constant 0 : index
    %c0_79 = arith.constant 0 : index
    %182 = vector.load %arg7[%c0_77, %c0_78, %c0_79] : memref<2x1x32xf32, #tpu.memory_space<vmem>>, vector<1x1x32xf32>
    %183 = vector.shape_cast %182 : vector<1x1x32xf32> to vector<1x32xf32>
    %184 = vector.broadcast %183 : vector<1x32xf32> to vector<9x32xf32>
    %185 = arith.addf %181, %184 : vector<9x32xf32>
    %186 = vector.extract_strided_slice %17 {offsets = [9, 0], sizes = [9, 32], strides = [1, 1]} : vector<18x32xf32> to vector<9x32xf32>
    %187 = arith.addf %186, %185 : vector<9x32xf32>
    %c9_80 = arith.constant 9 : index
    %c0_81 = arith.constant 0 : index
    %188 = vector.load %arg15[%c9_80, %c0_81] : memref<18x32xf32, #tpu.memory_space<vmem>>, vector<9x32xf32>
    tpu.vector_store %arg15[%c9_80, %c0_81], %187 {strides = array<i32>} : memref<18x32xf32, #tpu.memory_space<vmem>>, vector<9x32xf32>,
    %c0_82 = arith.constant 0 : index
    %c0_83 = arith.constant 0 : index
    %189 = vector.load %arg15[%c0_82, %c0_83] : memref<18x32xf32, #tpu.memory_space<vmem>>, vector<18x32xf32>
    %c0_84 = arith.constant 0 : index
    %c0_85 = arith.constant 0 : index
    %c0_86 = arith.constant 0 : index
    %190 = vector.load %arg8[%c0_84, %c0_85, %c0_86] : memref<2x1x32xf32, #tpu.memory_space<vmem>>, vector<1x1x32xf32>
    %191 = vector.shape_cast %190 : vector<1x1x32xf32> to vector<1x32xf32>
    %c0_87 = arith.constant 0 : index
    %c0_88 = arith.constant 0 : index
    %c0_89 = arith.constant 0 : index
    %192 = vector.load %arg9[%c0_87, %c0_88, %c0_89] : memref<2x1x32xf32, #tpu.memory_space<vmem>>, vector<1x1x32xf32>
    %193 = vector.shape_cast %192 : vector<1x1x32xf32> to vector<1x32xf32>
    %cst_90 = arith.constant dense<0.000000e+00> : vector<18xf32>
    %194 = vector.multi_reduction <add>, %189, %cst_90 [1] : vector<18x32xf32> to vector<18xf32>
    %195 = vector.shape_cast %194 : vector<18xf32> to vector<18x1xf32>
    %cst_91 = arith.constant 3.200000e+01 : f32
    %196 = vector.broadcast %cst_91 : f32 to vector<18x1xf32>
    %197 = arith.divf %195, %196 : vector<18x1xf32>
    %198 = vector.broadcast %197 : vector<18x1xf32> to vector<18x32xf32>
    %199 = arith.subf %189, %198 : vector<18x32xf32>
    %200 = arith.mulf %199, %199 : vector<18x32xf32>
    %cst_92 = arith.constant dense<0.000000e+00> : vector<18xf32>
    %201 = vector.multi_reduction <add>, %200, %cst_92 [1] : vector<18x32xf32> to vector<18xf32>
    %202 = vector.shape_cast %201 : vector<18xf32> to vector<18x1xf32>
    %cst_93 = arith.constant 3.200000e+01 : f32
    %203 = vector.broadcast %cst_93 : f32 to vector<18x1xf32>
    %204 = arith.divf %202, %203 : vector<18x1xf32>
    %205 = vector.broadcast %197 : vector<18x1xf32> to vector<18x32xf32>
    %206 = arith.subf %189, %205 : vector<18x32xf32>
    %cst_94 = arith.constant 9.99999974E-6 : f32
    %207 = vector.broadcast %cst_94 : f32 to vector<18x1xf32>
    %208 = arith.addf %204, %207 : vector<18x1xf32>
    %209 = math.rsqrt %208 : vector<18x1xf32>
    %210 = vector.broadcast %209 : vector<18x1xf32> to vector<18x32xf32>
    %211 = arith.mulf %206, %210 : vector<18x32xf32>
    %212 = vector.broadcast %191 : vector<1x32xf32> to vector<18x32xf32>
    %213 = arith.mulf %211, %212 : vector<18x32xf32>
    %214 = vector.broadcast %193 : vector<1x32xf32> to vector<18x32xf32>
    %215 = arith.addf %213, %214 : vector<18x32xf32>
    %c0_95 = arith.constant 0 : index
    %c0_96 = arith.constant 0 : index
    %c0_97 = arith.constant 0 : index
    %216 = vector.load %arg10[%c0_95, %c0_96, %c0_97] : memref<2x32x64xf32, #tpu.memory_space<vmem>>, vector<1x32x64xf32>
    %217 = vector.shape_cast %216 : vector<1x32x64xf32> to vector<32x64xf32>
    %cst_98 = arith.constant dense<0.000000e+00> : vector<18x64xf32>
    %218 = tpu.matmul %215, %217, %cst_98 {dimension_numbers = #tpu.dot_dimension_numbers<[1], [0], [0], [1], [0, 0, 1, 1], [], []>} : vector<18x32xf32>, vector<32x64xf32>, vector<18x64xf32> -> vector<18x64xf32>
    %c0_99 = arith.constant 0 : index
    %c0_100 = arith.constant 0 : index
    %c0_101 = arith.constant 0 : index
    %219 = vector.load %arg11[%c0_99, %c0_100, %c0_101] : memref<2x1x64xf32, #tpu.memory_space<vmem>>, vector<1x1x64xf32>
    %220 = vector.shape_cast %219 : vector<1x1x64xf32> to vector<1x64xf32>
    %221 = vector.broadcast %220 : vector<1x64xf32> to vector<18x64xf32>
    %222 = arith.addf %218, %221 : vector<18x64xf32>
    %cst_102 = arith.constant 5.000000e-01 : f32
    %223 = vector.broadcast %cst_102 : f32 to vector<18x64xf32>
    %224 = arith.mulf %223, %222 : vector<18x64xf32>
    %cst_103 = arith.constant 0.707106769 : f32
    %225 = vector.broadcast %cst_103 : f32 to vector<18x64xf32>
    %226 = arith.mulf %222, %225 : vector<18x64xf32>
    %227 = math.erf %226 : vector<18x64xf32>
    %cst_104 = arith.constant 1.000000e+00 : f32
    %228 = vector.broadcast %cst_104 : f32 to vector<18x64xf32>
    %229 = arith.addf %228, %227 : vector<18x64xf32>
    %230 = arith.mulf %224, %229 : vector<18x64xf32>
    %c0_105 = arith.constant 0 : index
    %c0_106 = arith.constant 0 : index
    %c0_107 = arith.constant 0 : index
    %231 = vector.load %arg12[%c0_105, %c0_106, %c0_107] : memref<2x64x32xf32, #tpu.memory_space<vmem>>, vector<1x64x32xf32>
    %232 = vector.shape_cast %231 : vector<1x64x32xf32> to vector<64x32xf32>
    %cst_108 = arith.constant dense<0.000000e+00> : vector<18x32xf32>
    %233 = tpu.matmul %230, %232, %cst_108 {dimension_numbers = #tpu.dot_dimension_numbers<[1], [0], [0], [1], [0, 0, 1, 1], [], []>} : vector<18x64xf32>, vector<64x32xf32>, vector<18x32xf32> -> vector<18x32xf32>
    %c0_109 = arith.constant 0 : index
    %c0_110 = arith.constant 0 : index
    %c0_111 = arith.constant 0 : index
    %234 = vector.load %arg13[%c0_109, %c0_110, %c0_111] : memref<2x1x32xf32, #tpu.memory_space<vmem>>, vector<1x1x32xf32>
    %235 = vector.shape_cast %234 : vector<1x1x32xf32> to vector<1x32xf32>
    %236 = vector.broadcast %235 : vector<1x32xf32> to vector<18x32xf32>
    %237 = arith.addf %233, %236 : vector<18x32xf32>
    %238 = arith.addf %189, %237 : vector<18x32xf32>
    %c0_112 = arith.constant 0 : index
    %c0_113 = arith.constant 0 : index
    %239 = vector.load %arg15[%c0_112, %c0_113] : memref<18x32xf32, #tpu.memory_space<vmem>>, vector<18x32xf32>
    tpu.vector_store %arg15[%c0_112, %c0_113], %238 {strides = array<i32>} : memref<18x32xf32, #tpu.memory_space<vmem>>, vector<18x32xf32>,
    %c1_114 = arith.constant 1 : index
    %c0_115 = arith.constant 0 : index
    %c0_116 = arith.constant 0 : index
    %240 = vector.load %arg3[%c1_114, %c0_115, %c0_116] : memref<2x1x32xf32, #tpu.memory_space<vmem>>, vector<1x1x32xf32>
    %241 = vector.shape_cast %240 : vector<1x1x32xf32> to vector<1x32xf32>
    %c1_117 = arith.constant 1 : index
    %c0_118 = arith.constant 0 : index
    %c0_119 = arith.constant 0 : index
    %242 = vector.load %arg4[%c1_117, %c0_118, %c0_119] : memref<2x1x32xf32, #tpu.memory_space<vmem>>, vector<1x1x32xf32>
    %243 = vector.shape_cast %242 : vector<1x1x32xf32> to vector<1x32xf32>
    %cst_120 = arith.constant dense<0.000000e+00> : vector<18xf32>
    %244 = vector.multi_reduction <add>, %238, %cst_120 [1] : vector<18x32xf32> to vector<18xf32>
    %245 = vector.shape_cast %244 : vector<18xf32> to vector<18x1xf32>
    %cst_121 = arith.constant 3.200000e+01 : f32
    %246 = vector.broadcast %cst_121 : f32 to vector<18x1xf32>
    %247 = arith.divf %245, %246 : vector<18x1xf32>
    %248 = vector.broadcast %247 : vector<18x1xf32> to vector<18x32xf32>
    %249 = arith.subf %238, %248 : vector<18x32xf32>
    %250 = arith.mulf %249, %249 : vector<18x32xf32>
    %cst_122 = arith.constant dense<0.000000e+00> : vector<18xf32>
    %251 = vector.multi_reduction <add>, %250, %cst_122 [1] : vector<18x32xf32> to vector<18xf32>
    %252 = vector.shape_cast %251 : vector<18xf32> to vector<18x1xf32>
    %cst_123 = arith.constant 3.200000e+01 : f32
    %253 = vector.broadcast %cst_123 : f32 to vector<18x1xf32>
    %254 = arith.divf %252, %253 : vector<18x1xf32>
    %255 = vector.broadcast %247 : vector<18x1xf32> to vector<18x32xf32>
    %256 = arith.subf %238, %255 : vector<18x32xf32>
    %cst_124 = arith.constant 9.99999974E-6 : f32
    %257 = vector.broadcast %cst_124 : f32 to vector<18x1xf32>
    %258 = arith.addf %254, %257 : vector<18x1xf32>
    %259 = math.rsqrt %258 : vector<18x1xf32>
    %260 = vector.broadcast %259 : vector<18x1xf32> to vector<18x32xf32>
    %261 = arith.mulf %256, %260 : vector<18x32xf32>
    %262 = vector.broadcast %241 : vector<1x32xf32> to vector<18x32xf32>
    %263 = arith.mulf %261, %262 : vector<18x32xf32>
    %264 = vector.broadcast %243 : vector<1x32xf32> to vector<18x32xf32>
    %265 = arith.addf %263, %264 : vector<18x32xf32>
    %c1_125 = arith.constant 1 : index
    %c0_126 = arith.constant 0 : index
    %c0_127 = arith.constant 0 : index
    %266 = vector.load %arg5[%c1_125, %c0_126, %c0_127] : memref<2x32x96xf32, #tpu.memory_space<vmem>>, vector<1x32x96xf32>
    %267 = vector.shape_cast %266 : vector<1x32x96xf32> to vector<32x96xf32>
    %cst_128 = arith.constant dense<0.000000e+00> : vector<18x96xf32>
    %268 = tpu.matmul %265, %267, %cst_128 {dimension_numbers = #tpu.dot_dimension_numbers<[1], [0], [0], [1], [0, 0, 1, 1], [], []>} : vector<18x32xf32>, vector<32x96xf32>, vector<18x96xf32> -> vector<18x96xf32>
    %269 = vector.extract_strided_slice %268 {offsets = [0, 0], sizes = [9, 8], strides = [1, 1]} : vector<18x96xf32> to vector<9x8xf32>
    %270 = vector.extract_strided_slice %268 {offsets = [0, 32], sizes = [9, 8], strides = [1, 1]} : vector<18x96xf32> to vector<9x8xf32>
    %271 = vector.extract_strided_slice %268 {offsets = [0, 64], sizes = [9, 8], strides = [1, 1]} : vector<18x96xf32> to vector<9x8xf32>
    %cst_129 = arith.constant dense<0.000000e+00> : vector<9x9xf32>
    %272 = tpu.matmul %269, %270, %cst_129 {dimension_numbers = #tpu.dot_dimension_numbers<[1], [1], [0], [0], [0, 0, 1, 0], [], []>} : vector<9x8xf32>, vector<9x8xf32>, vector<9x9xf32> -> vector<9x9xf32>
    %cst_130 = arith.constant dense<0xFF800000> : vector<9xf32>
    %273 = vector.multi_reduction <maximumf>, %272, %cst_130 [1] : vector<9x9xf32> to vector<9xf32>
    %274 = vector.shape_cast %273 : vector<9xf32> to vector<9x1xf32>
    %275 = vector.broadcast %274 : vector<9x1xf32> to vector<9x9xf32>
    %276 = arith.subf %272, %275 : vector<9x9xf32>
    %277 = math.exp %276 : vector<9x9xf32>
    %cst_131 = arith.constant dense<0.000000e+00> : vector<9xf32>
    %278 = vector.multi_reduction <add>, %277, %cst_131 [1] : vector<9x9xf32> to vector<9xf32>
    %279 = vector.shape_cast %278 : vector<9xf32> to vector<9x1xf32>
    %280 = tpu.reciprocal %279 : vector<9x1xf32> -> vector<9x1xf32>
    %281 = vector.broadcast %280 : vector<9x1xf32> to vector<9x9xf32>
    %282 = arith.mulf %277, %281 : vector<9x9xf32>
    %cst_132 = arith.constant dense<0.000000e+00> : vector<9x8xf32>
    %283 = tpu.matmul %282, %271, %cst_132 {dimension_numbers = #tpu.dot_dimension_numbers<[1], [0], [0], [1], [0, 0, 1, 1], [], []>} : vector<9x9xf32>, vector<9x8xf32>, vector<9x8xf32> -> vector<9x8xf32>
    %284 = vector.extract_strided_slice %268 {offsets = [0, 8], sizes = [9, 8], strides = [1, 1]} : vector<18x96xf32> to vector<9x8xf32>
    %285 = vector.extract_strided_slice %268 {offsets = [0, 40], sizes = [9, 8], strides = [1, 1]} : vector<18x96xf32> to vector<9x8xf32>
    %286 = vector.extract_strided_slice %268 {offsets = [0, 72], sizes = [9, 8], strides = [1, 1]} : vector<18x96xf32> to vector<9x8xf32>
    %cst_133 = arith.constant dense<0.000000e+00> : vector<9x9xf32>
    %287 = tpu.matmul %284, %285, %cst_133 {dimension_numbers = #tpu.dot_dimension_numbers<[1], [1], [0], [0], [0, 0, 1, 0], [], []>} : vector<9x8xf32>, vector<9x8xf32>, vector<9x9xf32> -> vector<9x9xf32>
    %cst_134 = arith.constant dense<0xFF800000> : vector<9xf32>
    %288 = vector.multi_reduction <maximumf>, %287, %cst_134 [1] : vector<9x9xf32> to vector<9xf32>
    %289 = vector.shape_cast %288 : vector<9xf32> to vector<9x1xf32>
    %290 = vector.broadcast %289 : vector<9x1xf32> to vector<9x9xf32>
    %291 = arith.subf %287, %290 : vector<9x9xf32>
    %292 = math.exp %291 : vector<9x9xf32>
    %cst_135 = arith.constant dense<0.000000e+00> : vector<9xf32>
    %293 = vector.multi_reduction <add>, %292, %cst_135 [1] : vector<9x9xf32> to vector<9xf32>
    %294 = vector.shape_cast %293 : vector<9xf32> to vector<9x1xf32>
    %295 = tpu.reciprocal %294 : vector<9x1xf32> -> vector<9x1xf32>
    %296 = vector.broadcast %295 : vector<9x1xf32> to vector<9x9xf32>
    %297 = arith.mulf %292, %296 : vector<9x9xf32>
    %cst_136 = arith.constant dense<0.000000e+00> : vector<9x8xf32>
    %298 = tpu.matmul %297, %286, %cst_136 {dimension_numbers = #tpu.dot_dimension_numbers<[1], [0], [0], [1], [0, 0, 1, 1], [], []>} : vector<9x9xf32>, vector<9x8xf32>, vector<9x8xf32> -> vector<9x8xf32>
    %299 = vector.extract_strided_slice %268 {offsets = [0, 16], sizes = [9, 8], strides = [1, 1]} : vector<18x96xf32> to vector<9x8xf32>
    %300 = vector.extract_strided_slice %268 {offsets = [0, 48], sizes = [9, 8], strides = [1, 1]} : vector<18x96xf32> to vector<9x8xf32>
    %301 = vector.extract_strided_slice %268 {offsets = [0, 80], sizes = [9, 8], strides = [1, 1]} : vector<18x96xf32> to vector<9x8xf32>
    %cst_137 = arith.constant dense<0.000000e+00> : vector<9x9xf32>
    %302 = tpu.matmul %299, %300, %cst_137 {dimension_numbers = #tpu.dot_dimension_numbers<[1], [1], [0], [0], [0, 0, 1, 0], [], []>} : vector<9x8xf32>, vector<9x8xf32>, vector<9x9xf32> -> vector<9x9xf32>
    %cst_138 = arith.constant dense<0xFF800000> : vector<9xf32>
    %303 = vector.multi_reduction <maximumf>, %302, %cst_138 [1] : vector<9x9xf32> to vector<9xf32>
    %304 = vector.shape_cast %303 : vector<9xf32> to vector<9x1xf32>
    %305 = vector.broadcast %304 : vector<9x1xf32> to vector<9x9xf32>
    %306 = arith.subf %302, %305 : vector<9x9xf32>
    %307 = math.exp %306 : vector<9x9xf32>
    %cst_139 = arith.constant dense<0.000000e+00> : vector<9xf32>
    %308 = vector.multi_reduction <add>, %307, %cst_139 [1] : vector<9x9xf32> to vector<9xf32>
    %309 = vector.shape_cast %308 : vector<9xf32> to vector<9x1xf32>
    %310 = tpu.reciprocal %309 : vector<9x1xf32> -> vector<9x1xf32>
    %311 = vector.broadcast %310 : vector<9x1xf32> to vector<9x9xf32>
    %312 = arith.mulf %307, %311 : vector<9x9xf32>
    %cst_140 = arith.constant dense<0.000000e+00> : vector<9x8xf32>
    %313 = tpu.matmul %312, %301, %cst_140 {dimension_numbers = #tpu.dot_dimension_numbers<[1], [0], [0], [1], [0, 0, 1, 1], [], []>} : vector<9x9xf32>, vector<9x8xf32>, vector<9x8xf32> -> vector<9x8xf32>
    %314 = vector.extract_strided_slice %268 {offsets = [0, 24], sizes = [9, 8], strides = [1, 1]} : vector<18x96xf32> to vector<9x8xf32>
    %315 = vector.extract_strided_slice %268 {offsets = [0, 56], sizes = [9, 8], strides = [1, 1]} : vector<18x96xf32> to vector<9x8xf32>
    %316 = vector.extract_strided_slice %268 {offsets = [0, 88], sizes = [9, 8], strides = [1, 1]} : vector<18x96xf32> to vector<9x8xf32>
    %cst_141 = arith.constant dense<0.000000e+00> : vector<9x9xf32>
    %317 = tpu.matmul %314, %315, %cst_141 {dimension_numbers = #tpu.dot_dimension_numbers<[1], [1], [0], [0], [0, 0, 1, 0], [], []>} : vector<9x8xf32>, vector<9x8xf32>, vector<9x9xf32> -> vector<9x9xf32>
    %cst_142 = arith.constant dense<0xFF800000> : vector<9xf32>
    %318 = vector.multi_reduction <maximumf>, %317, %cst_142 [1] : vector<9x9xf32> to vector<9xf32>
    %319 = vector.shape_cast %318 : vector<9xf32> to vector<9x1xf32>
    %320 = vector.broadcast %319 : vector<9x1xf32> to vector<9x9xf32>
    %321 = arith.subf %317, %320 : vector<9x9xf32>
    %322 = math.exp %321 : vector<9x9xf32>
    %cst_143 = arith.constant dense<0.000000e+00> : vector<9xf32>
    %323 = vector.multi_reduction <add>, %322, %cst_143 [1] : vector<9x9xf32> to vector<9xf32>
    %324 = vector.shape_cast %323 : vector<9xf32> to vector<9x1xf32>
    %325 = tpu.reciprocal %324 : vector<9x1xf32> -> vector<9x1xf32>
    %326 = vector.broadcast %325 : vector<9x1xf32> to vector<9x9xf32>
    %327 = arith.mulf %322, %326 : vector<9x9xf32>
    %cst_144 = arith.constant dense<0.000000e+00> : vector<9x8xf32>
    %328 = tpu.matmul %327, %316, %cst_144 {dimension_numbers = #tpu.dot_dimension_numbers<[1], [0], [0], [1], [0, 0, 1, 1], [], []>} : vector<9x9xf32>, vector<9x8xf32>, vector<9x8xf32> -> vector<9x8xf32>
    %329 = tpu.concatenate %283, %298, %313, %328 in 1 : vector<9x8xf32>, vector<9x8xf32>, vector<9x8xf32>, vector<9x8xf32> -> vector<9x32xf32>
    %c1_145 = arith.constant 1 : index
    %c0_146 = arith.constant 0 : index
    %c0_147 = arith.constant 0 : index
    %330 = vector.load %arg6[%c1_145, %c0_146, %c0_147] : memref<2x32x32xf32, #tpu.memory_space<vmem>>, vector<1x32x32xf32>
    %331 = vector.shape_cast %330 : vector<1x32x32xf32> to vector<32x32xf32>
    %cst_148 = arith.constant dense<0.000000e+00> : vector<9x32xf32>
    %332 = tpu.matmul %329, %331, %cst_148 {dimension_numbers = #tpu.dot_dimension_numbers<[1], [0], [0], [1], [0, 0, 1, 1], [], []>} : vector<9x32xf32>, vector<32x32xf32>, vector<9x32xf32> -> vector<9x32xf32>
    %c1_149 = arith.constant 1 : index
    %c0_150 = arith.constant 0 : index
    %c0_151 = arith.constant 0 : index
    %333 = vector.load %arg7[%c1_149, %c0_150, %c0_151] : memref<2x1x32xf32, #tpu.memory_space<vmem>>, vector<1x1x32xf32>
    %334 = vector.shape_cast %333 : vector<1x1x32xf32> to vector<1x32xf32>
    %335 = vector.broadcast %334 : vector<1x32xf32> to vector<9x32xf32>
    %336 = arith.addf %332, %335 : vector<9x32xf32>
    %337 = vector.extract_strided_slice %238 {offsets = [0, 0], sizes = [9, 32], strides = [1, 1]} : vector<18x32xf32> to vector<9x32xf32>
    %338 = arith.addf %337, %336 : vector<9x32xf32>
    %c0_152 = arith.constant 0 : index
    %c0_153 = arith.constant 0 : index
    %339 = vector.load %arg15[%c0_152, %c0_153] : memref<18x32xf32, #tpu.memory_space<vmem>>, vector<9x32xf32>
    tpu.vector_store %arg15[%c0_152, %c0_153], %338 {strides = array<i32>} : memref<18x32xf32, #tpu.memory_space<vmem>>, vector<9x32xf32>,
    %340 = vector.extract_strided_slice %268 {offsets = [9, 0], sizes = [9, 8], strides = [1, 1]} : vector<18x96xf32> to vector<9x8xf32>
    %341 = vector.extract_strided_slice %268 {offsets = [9, 32], sizes = [9, 8], strides = [1, 1]} : vector<18x96xf32> to vector<9x8xf32>
    %342 = vector.extract_strided_slice %268 {offsets = [9, 64], sizes = [9, 8], strides = [1, 1]} : vector<18x96xf32> to vector<9x8xf32>
    %cst_154 = arith.constant dense<0.000000e+00> : vector<9x9xf32>
    %343 = tpu.matmul %340, %341, %cst_154 {dimension_numbers = #tpu.dot_dimension_numbers<[1], [1], [0], [0], [0, 0, 1, 0], [], []>} : vector<9x8xf32>, vector<9x8xf32>, vector<9x9xf32> -> vector<9x9xf32>
    %cst_155 = arith.constant dense<0xFF800000> : vector<9xf32>
    %344 = vector.multi_reduction <maximumf>, %343, %cst_155 [1] : vector<9x9xf32> to vector<9xf32>
    %345 = vector.shape_cast %344 : vector<9xf32> to vector<9x1xf32>
    %346 = vector.broadcast %345 : vector<9x1xf32> to vector<9x9xf32>
    %347 = arith.subf %343, %346 : vector<9x9xf32>
    %348 = math.exp %347 : vector<9x9xf32>
    %cst_156 = arith.constant dense<0.000000e+00> : vector<9xf32>
    %349 = vector.multi_reduction <add>, %348, %cst_156 [1] : vector<9x9xf32> to vector<9xf32>
    %350 = vector.shape_cast %349 : vector<9xf32> to vector<9x1xf32>
    %351 = tpu.reciprocal %350 : vector<9x1xf32> -> vector<9x1xf32>
    %352 = vector.broadcast %351 : vector<9x1xf32> to vector<9x9xf32>
    %353 = arith.mulf %348, %352 : vector<9x9xf32>
    %cst_157 = arith.constant dense<0.000000e+00> : vector<9x8xf32>
    %354 = tpu.matmul %353, %342, %cst_157 {dimension_numbers = #tpu.dot_dimension_numbers<[1], [0], [0], [1], [0, 0, 1, 1], [], []>} : vector<9x9xf32>, vector<9x8xf32>, vector<9x8xf32> -> vector<9x8xf32>
    %355 = vector.extract_strided_slice %268 {offsets = [9, 8], sizes = [9, 8], strides = [1, 1]} : vector<18x96xf32> to vector<9x8xf32>
    %356 = vector.extract_strided_slice %268 {offsets = [9, 40], sizes = [9, 8], strides = [1, 1]} : vector<18x96xf32> to vector<9x8xf32>
    %357 = vector.extract_strided_slice %268 {offsets = [9, 72], sizes = [9, 8], strides = [1, 1]} : vector<18x96xf32> to vector<9x8xf32>
    %cst_158 = arith.constant dense<0.000000e+00> : vector<9x9xf32>
    %358 = tpu.matmul %355, %356, %cst_158 {dimension_numbers = #tpu.dot_dimension_numbers<[1], [1], [0], [0], [0, 0, 1, 0], [], []>} : vector<9x8xf32>, vector<9x8xf32>, vector<9x9xf32> -> vector<9x9xf32>
    %cst_159 = arith.constant dense<0xFF800000> : vector<9xf32>
    %359 = vector.multi_reduction <maximumf>, %358, %cst_159 [1] : vector<9x9xf32> to vector<9xf32>
    %360 = vector.shape_cast %359 : vector<9xf32> to vector<9x1xf32>
    %361 = vector.broadcast %360 : vector<9x1xf32> to vector<9x9xf32>
    %362 = arith.subf %358, %361 : vector<9x9xf32>
    %363 = math.exp %362 : vector<9x9xf32>
    %cst_160 = arith.constant dense<0.000000e+00> : vector<9xf32>
    %364 = vector.multi_reduction <add>, %363, %cst_160 [1] : vector<9x9xf32> to vector<9xf32>
    %365 = vector.shape_cast %364 : vector<9xf32> to vector<9x1xf32>
    %366 = tpu.reciprocal %365 : vector<9x1xf32> -> vector<9x1xf32>
    %367 = vector.broadcast %366 : vector<9x1xf32> to vector<9x9xf32>
    %368 = arith.mulf %363, %367 : vector<9x9xf32>
    %cst_161 = arith.constant dense<0.000000e+00> : vector<9x8xf32>
    %369 = tpu.matmul %368, %357, %cst_161 {dimension_numbers = #tpu.dot_dimension_numbers<[1], [0], [0], [1], [0, 0, 1, 1], [], []>} : vector<9x9xf32>, vector<9x8xf32>, vector<9x8xf32> -> vector<9x8xf32>
    %370 = vector.extract_strided_slice %268 {offsets = [9, 16], sizes = [9, 8], strides = [1, 1]} : vector<18x96xf32> to vector<9x8xf32>
    %371 = vector.extract_strided_slice %268 {offsets = [9, 48], sizes = [9, 8], strides = [1, 1]} : vector<18x96xf32> to vector<9x8xf32>
    %372 = vector.extract_strided_slice %268 {offsets = [9, 80], sizes = [9, 8], strides = [1, 1]} : vector<18x96xf32> to vector<9x8xf32>
    %cst_162 = arith.constant dense<0.000000e+00> : vector<9x9xf32>
    %373 = tpu.matmul %370, %371, %cst_162 {dimension_numbers = #tpu.dot_dimension_numbers<[1], [1], [0], [0], [0, 0, 1, 0], [], []>} : vector<9x8xf32>, vector<9x8xf32>, vector<9x9xf32> -> vector<9x9xf32>
    %cst_163 = arith.constant dense<0xFF800000> : vector<9xf32>
    %374 = vector.multi_reduction <maximumf>, %373, %cst_163 [1] : vector<9x9xf32> to vector<9xf32>
    %375 = vector.shape_cast %374 : vector<9xf32> to vector<9x1xf32>
    %376 = vector.broadcast %375 : vector<9x1xf32> to vector<9x9xf32>
    %377 = arith.subf %373, %376 : vector<9x9xf32>
    %378 = math.exp %377 : vector<9x9xf32>
    %cst_164 = arith.constant dense<0.000000e+00> : vector<9xf32>
    %379 = vector.multi_reduction <add>, %378, %cst_164 [1] : vector<9x9xf32> to vector<9xf32>
    %380 = vector.shape_cast %379 : vector<9xf32> to vector<9x1xf32>
    %381 = tpu.reciprocal %380 : vector<9x1xf32> -> vector<9x1xf32>
    %382 = vector.broadcast %381 : vector<9x1xf32> to vector<9x9xf32>
    %383 = arith.mulf %378, %382 : vector<9x9xf32>
    %cst_165 = arith.constant dense<0.000000e+00> : vector<9x8xf32>
    %384 = tpu.matmul %383, %372, %cst_165 {dimension_numbers = #tpu.dot_dimension_numbers<[1], [0], [0], [1], [0, 0, 1, 1], [], []>} : vector<9x9xf32>, vector<9x8xf32>, vector<9x8xf32> -> vector<9x8xf32>
    %385 = vector.extract_strided_slice %268 {offsets = [9, 24], sizes = [9, 8], strides = [1, 1]} : vector<18x96xf32> to vector<9x8xf32>
    %386 = vector.extract_strided_slice %268 {offsets = [9, 56], sizes = [9, 8], strides = [1, 1]} : vector<18x96xf32> to vector<9x8xf32>
    %387 = vector.extract_strided_slice %268 {offsets = [9, 88], sizes = [9, 8], strides = [1, 1]} : vector<18x96xf32> to vector<9x8xf32>
    %cst_166 = arith.constant dense<0.000000e+00> : vector<9x9xf32>
    %388 = tpu.matmul %385, %386, %cst_166 {dimension_numbers = #tpu.dot_dimension_numbers<[1], [1], [0], [0], [0, 0, 1, 0], [], []>} : vector<9x8xf32>, vector<9x8xf32>, vector<9x9xf32> -> vector<9x9xf32>
    %cst_167 = arith.constant dense<0xFF800000> : vector<9xf32>
    %389 = vector.multi_reduction <maximumf>, %388, %cst_167 [1] : vector<9x9xf32> to vector<9xf32>
    %390 = vector.shape_cast %389 : vector<9xf32> to vector<9x1xf32>
    %391 = vector.broadcast %390 : vector<9x1xf32> to vector<9x9xf32>
    %392 = arith.subf %388, %391 : vector<9x9xf32>
    %393 = math.exp %392 : vector<9x9xf32>
    %cst_168 = arith.constant dense<0.000000e+00> : vector<9xf32>
    %394 = vector.multi_reduction <add>, %393, %cst_168 [1] : vector<9x9xf32> to vector<9xf32>
    %395 = vector.shape_cast %394 : vector<9xf32> to vector<9x1xf32>
    %396 = tpu.reciprocal %395 : vector<9x1xf32> -> vector<9x1xf32>
    %397 = vector.broadcast %396 : vector<9x1xf32> to vector<9x9xf32>
    %398 = arith.mulf %393, %397 : vector<9x9xf32>
    %cst_169 = arith.constant dense<0.000000e+00> : vector<9x8xf32>
    %399 = tpu.matmul %398, %387, %cst_169 {dimension_numbers = #tpu.dot_dimension_numbers<[1], [0], [0], [1], [0, 0, 1, 1], [], []>} : vector<9x9xf32>, vector<9x8xf32>, vector<9x8xf32> -> vector<9x8xf32>
    %400 = tpu.concatenate %354, %369, %384, %399 in 1 : vector<9x8xf32>, vector<9x8xf32>, vector<9x8xf32>, vector<9x8xf32> -> vector<9x32xf32>
    %c1_170 = arith.constant 1 : index
    %c0_171 = arith.constant 0 : index
    %c0_172 = arith.constant 0 : index
    %401 = vector.load %arg6[%c1_170, %c0_171, %c0_172] : memref<2x32x32xf32, #tpu.memory_space<vmem>>, vector<1x32x32xf32>
    %402 = vector.shape_cast %401 : vector<1x32x32xf32> to vector<32x32xf32>
    %cst_173 = arith.constant dense<0.000000e+00> : vector<9x32xf32>
    %403 = tpu.matmul %400, %402, %cst_173 {dimension_numbers = #tpu.dot_dimension_numbers<[1], [0], [0], [1], [0, 0, 1, 1], [], []>} : vector<9x32xf32>, vector<32x32xf32>, vector<9x32xf32> -> vector<9x32xf32>
    %c1_174 = arith.constant 1 : index
    %c0_175 = arith.constant 0 : index
    %c0_176 = arith.constant 0 : index
    %404 = vector.load %arg7[%c1_174, %c0_175, %c0_176] : memref<2x1x32xf32, #tpu.memory_space<vmem>>, vector<1x1x32xf32>
    %405 = vector.shape_cast %404 : vector<1x1x32xf32> to vector<1x32xf32>
    %406 = vector.broadcast %405 : vector<1x32xf32> to vector<9x32xf32>
    %407 = arith.addf %403, %406 : vector<9x32xf32>
    %408 = vector.extract_strided_slice %238 {offsets = [9, 0], sizes = [9, 32], strides = [1, 1]} : vector<18x32xf32> to vector<9x32xf32>
    %409 = arith.addf %408, %407 : vector<9x32xf32>
    %c9_177 = arith.constant 9 : index
    %c0_178 = arith.constant 0 : index
    %410 = vector.load %arg15[%c9_177, %c0_178] : memref<18x32xf32, #tpu.memory_space<vmem>>, vector<9x32xf32>
    tpu.vector_store %arg15[%c9_177, %c0_178], %409 {strides = array<i32>} : memref<18x32xf32, #tpu.memory_space<vmem>>, vector<9x32xf32>,
    %c0_179 = arith.constant 0 : index
    %c0_180 = arith.constant 0 : index
    %411 = vector.load %arg15[%c0_179, %c0_180] : memref<18x32xf32, #tpu.memory_space<vmem>>, vector<18x32xf32>
    %c1_181 = arith.constant 1 : index
    %c0_182 = arith.constant 0 : index
    %c0_183 = arith.constant 0 : index
    %412 = vector.load %arg8[%c1_181, %c0_182, %c0_183] : memref<2x1x32xf32, #tpu.memory_space<vmem>>, vector<1x1x32xf32>
    %413 = vector.shape_cast %412 : vector<1x1x32xf32> to vector<1x32xf32>
    %c1_184 = arith.constant 1 : index
    %c0_185 = arith.constant 0 : index
    %c0_186 = arith.constant 0 : index
    %414 = vector.load %arg9[%c1_184, %c0_185, %c0_186] : memref<2x1x32xf32, #tpu.memory_space<vmem>>, vector<1x1x32xf32>
    %415 = vector.shape_cast %414 : vector<1x1x32xf32> to vector<1x32xf32>
    %cst_187 = arith.constant dense<0.000000e+00> : vector<18xf32>
    %416 = vector.multi_reduction <add>, %411, %cst_187 [1] : vector<18x32xf32> to vector<18xf32>
    %417 = vector.shape_cast %416 : vector<18xf32> to vector<18x1xf32>
    %cst_188 = arith.constant 3.200000e+01 : f32
    %418 = vector.broadcast %cst_188 : f32 to vector<18x1xf32>
    %419 = arith.divf %417, %418 : vector<18x1xf32>
    %420 = vector.broadcast %419 : vector<18x1xf32> to vector<18x32xf32>
    %421 = arith.subf %411, %420 : vector<18x32xf32>
    %422 = arith.mulf %421, %421 : vector<18x32xf32>
    %cst_189 = arith.constant dense<0.000000e+00> : vector<18xf32>
    %423 = vector.multi_reduction <add>, %422, %cst_189 [1] : vector<18x32xf32> to vector<18xf32>
    %424 = vector.shape_cast %423 : vector<18xf32> to vector<18x1xf32>
    %cst_190 = arith.constant 3.200000e+01 : f32
    %425 = vector.broadcast %cst_190 : f32 to vector<18x1xf32>
    %426 = arith.divf %424, %425 : vector<18x1xf32>
    %427 = vector.broadcast %419 : vector<18x1xf32> to vector<18x32xf32>
    %428 = arith.subf %411, %427 : vector<18x32xf32>
    %cst_191 = arith.constant 9.99999974E-6 : f32
    %429 = vector.broadcast %cst_191 : f32 to vector<18x1xf32>
    %430 = arith.addf %426, %429 : vector<18x1xf32>
    %431 = math.rsqrt %430 : vector<18x1xf32>
    %432 = vector.broadcast %431 : vector<18x1xf32> to vector<18x32xf32>
    %433 = arith.mulf %428, %432 : vector<18x32xf32>
    %434 = vector.broadcast %413 : vector<1x32xf32> to vector<18x32xf32>
    %435 = arith.mulf %433, %434 : vector<18x32xf32>
    %436 = vector.broadcast %415 : vector<1x32xf32> to vector<18x32xf32>
    %437 = arith.addf %435, %436 : vector<18x32xf32>
    %c1_192 = arith.constant 1 : index
    %c0_193 = arith.constant 0 : index
    %c0_194 = arith.constant 0 : index
    %438 = vector.load %arg10[%c1_192, %c0_193, %c0_194] : memref<2x32x64xf32, #tpu.memory_space<vmem>>, vector<1x32x64xf32>
    %439 = vector.shape_cast %438 : vector<1x32x64xf32> to vector<32x64xf32>
    %cst_195 = arith.constant dense<0.000000e+00> : vector<18x64xf32>
    %440 = tpu.matmul %437, %439, %cst_195 {dimension_numbers = #tpu.dot_dimension_numbers<[1], [0], [0], [1], [0, 0, 1, 1], [], []>} : vector<18x32xf32>, vector<32x64xf32>, vector<18x64xf32> -> vector<18x64xf32>
    %c1_196 = arith.constant 1 : index
    %c0_197 = arith.constant 0 : index
    %c0_198 = arith.constant 0 : index
    %441 = vector.load %arg11[%c1_196, %c0_197, %c0_198] : memref<2x1x64xf32, #tpu.memory_space<vmem>>, vector<1x1x64xf32>
    %442 = vector.shape_cast %441 : vector<1x1x64xf32> to vector<1x64xf32>
    %443 = vector.broadcast %442 : vector<1x64xf32> to vector<18x64xf32>
    %444 = arith.addf %440, %443 : vector<18x64xf32>
    %cst_199 = arith.constant 5.000000e-01 : f32
    %445 = vector.broadcast %cst_199 : f32 to vector<18x64xf32>
    %446 = arith.mulf %445, %444 : vector<18x64xf32>
    %cst_200 = arith.constant 0.707106769 : f32
    %447 = vector.broadcast %cst_200 : f32 to vector<18x64xf32>
    %448 = arith.mulf %444, %447 : vector<18x64xf32>
    %449 = math.erf %448 : vector<18x64xf32>
    %cst_201 = arith.constant 1.000000e+00 : f32
    %450 = vector.broadcast %cst_201 : f32 to vector<18x64xf32>
    %451 = arith.addf %450, %449 : vector<18x64xf32>
    %452 = arith.mulf %446, %451 : vector<18x64xf32>
    %c1_202 = arith.constant 1 : index
    %c0_203 = arith.constant 0 : index
    %c0_204 = arith.constant 0 : index
    %453 = vector.load %arg12[%c1_202, %c0_203, %c0_204] : memref<2x64x32xf32, #tpu.memory_space<vmem>>, vector<1x64x32xf32>
    %454 = vector.shape_cast %453 : vector<1x64x32xf32> to vector<64x32xf32>
    %cst_205 = arith.constant dense<0.000000e+00> : vector<18x32xf32>
    %455 = tpu.matmul %452, %454, %cst_205 {dimension_numbers = #tpu.dot_dimension_numbers<[1], [0], [0], [1], [0, 0, 1, 1], [], []>} : vector<18x64xf32>, vector<64x32xf32>, vector<18x32xf32> -> vector<18x32xf32>
    %c1_206 = arith.constant 1 : index
    %c0_207 = arith.constant 0 : index
    %c0_208 = arith.constant 0 : index
    %456 = vector.load %arg13[%c1_206, %c0_207, %c0_208] : memref<2x1x32xf32, #tpu.memory_space<vmem>>, vector<1x1x32xf32>
    %457 = vector.shape_cast %456 : vector<1x1x32xf32> to vector<1x32xf32>
    %458 = vector.broadcast %457 : vector<1x32xf32> to vector<18x32xf32>
    %459 = arith.addf %455, %458 : vector<18x32xf32>
    %460 = arith.addf %411, %459 : vector<18x32xf32>
    %461 = vector.extract_strided_slice %460 {offsets = [0, 0], sizes = [1, 32], strides = [1, 1]} : vector<18x32xf32> to vector<1x32xf32>
    %c0_209 = arith.constant 0 : index
    %c0_210 = arith.constant 0 : index
    %462 = vector.load %arg14[%c0_209, %c0_210] : memref<2x32xf32, #tpu.memory_space<vmem>>, vector<1x32xf32>
    tpu.vector_store %arg14[%c0_209, %c0_210], %461 {strides = array<i32>} : memref<2x32xf32, #tpu.memory_space<vmem>>, vector<1x32xf32>,
    %463 = vector.extract_strided_slice %460 {offsets = [9, 0], sizes = [1, 32], strides = [1, 1]} : vector<18x32xf32> to vector<1x32xf32>
    %c1_211 = arith.constant 1 : index
    %c0_212 = arith.constant 0 : index
    %464 = vector.load %arg14[%c1_211, %c0_212] : memref<2x32xf32, #tpu.memory_space<vmem>>, vector<1x32xf32>
    tpu.vector_store %arg14[%c1_211, %c0_212], %463 {strides = array<i32>} : memref<2x32xf32, #tpu.memory_space<vmem>>, vector<1x32xf32>,
    return
  }
}

</mosaic_0001>

<llo_original>
// kernel: tpu_custom_call.1
$region0: #{tpu_custom_call.1}
  #allocation0 [shape = 'u32[]', space=smem, size = 0x4, offset = 0x4, fixed_abs, tag = 'smem constant byte address 0x4 - core index']
  #allocation1 [shape = 'u32[144,128]{1,0:T(1,128)}', space=vmem, size = 0x12000, scoped, tag = 'internal scratch']
  #allocation2 [shape = 'f32[18,32]{1,0:T(8,128)}', space=vmem, size = 0x3000, scoped, tag = 'scratch operand']
  %s0 = inlined_call_operand.hbm [shape: f32[2,8,32], index: 0, kind: input, shape index: {}]
  %s1 = inlined_call_operand.hbm [shape: f32[1,1,32], index: 1, kind: input, shape index: {}]
  %s2 = inlined_call_operand.vmem [shape: f32[1,9,32], index: 2, kind: input, shape index: {}]
  %s3 = inlined_call_operand.vmem [shape: f32[2,1,32], index: 3, kind: input, shape index: {}]
  %s4 = inlined_call_operand.vmem [shape: f32[2,1,32], index: 4, kind: input, shape index: {}]
  %s5 = inlined_call_operand.vmem [shape: f32[2,32,96], index: 5, kind: input, shape index: {}]
  %s6 = inlined_call_operand.vmem [shape: f32[2,32,32], index: 6, kind: input, shape index: {}]
  %s7 = inlined_call_operand.vmem [shape: f32[2,1,32], index: 7, kind: input, shape index: {}]
  %s8 = inlined_call_operand.hbm [shape: f32[2,1,32], index: 8, kind: input, shape index: {}]
  %s9 = inlined_call_operand.hbm [shape: f32[2,1,32], index: 9, kind: input, shape index: {}]
  %s10 = inlined_call_operand.vmem [shape: f32[2,32,64], index: 10, kind: input, shape index: {}]
  %s11 = inlined_call_operand.hbm [shape: f32[2,1,64], index: 11, kind: input, shape index: {}]
  %s12 = inlined_call_operand.vmem [shape: f32[2,64,32], index: 12, kind: input, shape index: {}]
  %s13 = inlined_call_operand.vmem [shape: f32[2,1,32], index: 13, kind: input, shape index: {}]
  %s14 = inlined_call_operand.hbm [shape: f32[2,32], index: 14, kind: output, shape index: {}]
  %s15 = sld [smem:[#allocation0]]
  $region86: #{tpu_custom_call.1} parent=0
    _
  %s17 = ssub.s32 1, %s15
  %s18 = scalar_select 0, %s17, %s15
  $region1: #{tpu_custom_call.1} parent=0
    #allocation3 [shape = 'u8[8192]{0}', space=vmem, size = 0x2000, scoped, tag = 'input window, operand 0, single buffered']
    #allocation4 [shape = 's32[1]{0}', space=sflag, size = 0x4, scoped, tag = 'scoped memory for tpu_custom_call.1']
    #allocation5 [shape = 's32[1]{0}', space=sflag, size = 0x4, scoped, tag = 'scoped memory for tpu_custom_call.1']
    #allocation6 [shape = 'u8[512]{0}', space=vmem, size = 0x400, scoped, tag = 'input window, operand 1, single buffered']
    #allocation7 [shape = 's32[1]{0}', space=sflag, size = 0x4, scoped, tag = 'scoped memory for tpu_custom_call.1']
    #allocation8 [shape = 'u8[1024]{0}', space=vmem, size = 0x400, scoped, tag = 'input window, operand 8, single buffered']
    #allocation9 [shape = 'u8[1024]{0}', space=vmem, size = 0x400, scoped, tag = 'input window, operand 9, single buffered']
    #allocation10 [shape = 's32[1]{0}', space=sflag, size = 0x4, scoped, tag = 'scoped memory for tpu_custom_call.1']
    #allocation11 [shape = 'u8[1024]{0}', space=vmem, size = 0x400, scoped, tag = 'input window, operand 11, single buffered']
    #allocation12 [shape = 'u8[1024]{0}', space=vmem, size = 0x400, scoped, tag = 'output window, operand 0, single buffered']
    %19 = vsyncpa [#allocation4], 0
    %20 = vsyncpa [#allocation7], 0
    %21 = vsyncpa [#allocation10], 0
    %22 = vsyncpa [#allocation5], 0
    // Predicated region
    $region2: #{tpu_custom_call.1} parent=1 // pred_check
      _
    $region3: #{tpu_custom_call.1} parent=1 // pred_check_branch
      %24 = sbr.rel (0) target = $region5
    $region4: #{tpu_custom_call.1} parent=1 // pred_region
      %s26 = ssub.s32 256, 256
      %27 = vsyncadd [#allocation4], %s26
      %s28 = sshll.u32 [#allocation3], 4
      %s29 = int_to_ptr.vmem [resolvable:$true] %s28
      %34 = dma.hbm_to_vmem [thread:$0]  %s0, 256, %s29, [#allocation4], 128, 128, 8
    $region5: #{tpu_custom_call.1} parent=1 // pred_fallthru
      _
    // Predicated region
    $region6: #{tpu_custom_call.1} parent=1 // pred_check
      _
    $region7: #{tpu_custom_call.1} parent=1 // pred_check_branch
      %36 = sbr.rel (0) target = $region9
    $region8: #{tpu_custom_call.1} parent=1 // pred_region
      %s38 = ssub.s32 16, 16
      %39 = vsyncadd [#allocation7], %s38
      %s41 = sshll.u32 [#allocation6], 4
      %s42 = int_to_ptr.vmem [resolvable:$true] %s41
      %44 = dma.hbm_to_vmem [thread:$0]  %s1, 16, %s42, [#allocation7]
    $region9: #{tpu_custom_call.1} parent=1 // pred_fallthru
      _
    // Predicated region
    $region10: #{tpu_custom_call.1} parent=1 // pred_check
      _
    $region11: #{tpu_custom_call.1} parent=1 // pred_check_branch
      %46 = sbr.rel (0) target = $region13
    $region12: #{tpu_custom_call.1} parent=1 // pred_region
      _
    $region13: #{tpu_custom_call.1} parent=1 // pred_fallthru
      _
    // Predicated region
    $region14: #{tpu_custom_call.1} parent=1 // pred_check
      _
    $region15: #{tpu_custom_call.1} parent=1 // pred_check_branch
      %48 = sbr.rel (0) target = $region17
    $region16: #{tpu_custom_call.1} parent=1 // pred_region
      _
    $region17: #{tpu_custom_call.1} parent=1 // pred_fallthru
      _
    // Predicated region
    $region18: #{tpu_custom_call.1} parent=1 // pred_check
      _
    $region19: #{tpu_custom_call.1} parent=1 // pred_check_branch
      %50 = sbr.rel (0) target = $region21
    $region20: #{tpu_custom_call.1} parent=1 // pred_region
      _
    $region21: #{tpu_custom_call.1} parent=1 // pred_fallthru
      _
    // Predicated region
    $region22: #{tpu_custom_call.1} parent=1 // pred_check
      _
    $region23: #{tpu_custom_call.1} parent=1 // pred_check_branch
      %52 = sbr.rel (0) target = $region25
    $region24: #{tpu_custom_call.1} parent=1 // pred_region
      _
    $region25: #{tpu_custom_call.1} parent=1 // pred_fallthru
      _
    // Predicated region
    $region26: #{tpu_custom_call.1} parent=1 // pred_check
      _
    $region27: #{tpu_custom_call.1} parent=1 // pred_check_branch
      %54 = sbr.rel (0) target = $region29
    $region28: #{tpu_custom_call.1} parent=1 // pred_region
      _
    $region29: #{tpu_custom_call.1} parent=1 // pred_fallthru
      _
    // Predicated region
    $region30: #{tpu_custom_call.1} parent=1 // pred_check
      _
    $region31: #{tpu_custom_call.1} parent=1 // pred_check_branch
      %56 = sbr.rel (0) target = $region33
    $region32: #{tpu_custom_call.1} parent=1 // pred_region
      _
    $region33: #{tpu_custom_call.1} parent=1 // pred_fallthru
      _
    // Predicated region
    $region34: #{tpu_custom_call.1} parent=1 // pred_check
      _
    $region35: #{tpu_custom_call.1} parent=1 // pred_check_branch
      %58 = sbr.rel (0) target = $region37
    $region36: #{tpu_custom_call.1} parent=1 // pred_region
      %s60 = ssub.s32 32, 32
      %61 = vsyncadd [#allocation7], %s60
      %s62 = sshll.u32 [#allocation8], 4
      %s63 = int_to_ptr.vmem [resolvable:$true] %s62
      %68 = dma.hbm_to_vmem [thread:$0]  %s8, 32, %s63, [#allocation7], 16, 16, 1
    $region37: #{tpu_custom_call.1} parent=1 // pred_fallthru
      _
    // Predicated region
    $region38: #{tpu_custom_call.1} parent=1 // pred_check
      _
    $region39: #{tpu_custom_call.1} parent=1 // pred_check_branch
      %70 = sbr.rel (0) target = $region41
    $region40: #{tpu_custom_call.1} parent=1 // pred_region
      %s72 = ssub.s32 32, 32
      %73 = vsyncadd [#allocation10], %s72
      %s74 = sshll.u32 [#allocation9], 4
      %s75 = int_to_ptr.vmem [resolvable:$true] %s74
      %80 = dma.hbm_to_vmem [thread:$0]  %s9, 32, %s75, [#allocation10], 16, 16, 1
    $region41: #{tpu_custom_call.1} parent=1 // pred_fallthru
      _
    // Predicated region
    $region42: #{tpu_custom_call.1} parent=1 // pred_check
      _
    $region43: #{tpu_custom_call.1} parent=1 // pred_check_branch
      %82 = sbr.rel (0) target = $region45
    $region44: #{tpu_custom_call.1} parent=1 // pred_region
      _
    $region45: #{tpu_custom_call.1} parent=1 // pred_fallthru
      _
    // Predicated region
    $region46: #{tpu_custom_call.1} parent=1 // pred_check
      _
    $region47: #{tpu_custom_call.1} parent=1 // pred_check_branch
      %84 = sbr.rel (0) target = $region49
    $region48: #{tpu_custom_call.1} parent=1 // pred_region
      %s86 = ssub.s32 32, 32
      %87 = vsyncadd [#allocation10], %s86
      %s88 = sshll.u32 [#allocation11], 4
      %s89 = int_to_ptr.vmem [resolvable:$true] %s88
      %94 = dma.hbm_to_vmem [thread:$0]  %s11, 32, %s89, [#allocation10], 16, 16, 1
    $region49: #{tpu_custom_call.1} parent=1 // pred_fallthru
      _
    // Predicated region
    $region50: #{tpu_custom_call.1} parent=1 // pred_check
      _
    $region51: #{tpu_custom_call.1} parent=1 // pred_check_branch
      %96 = sbr.rel (0) target = $region53
    $region52: #{tpu_custom_call.1} parent=1 // pred_region
      _
    $region53: #{tpu_custom_call.1} parent=1 // pred_fallthru
      _
    // Predicated region
    $region54: #{tpu_custom_call.1} parent=1 // pred_check
      _
    $region55: #{tpu_custom_call.1} parent=1 // pred_check_branch
      %98 = sbr.rel (0) target = $region57
    $region56: #{tpu_custom_call.1} parent=1 // pred_region
      _
    $region57: #{tpu_custom_call.1} parent=1 // pred_fallthru
      _
    // Predicated region
    $region58: #{tpu_custom_call.1} parent=1 // pred_check
      _
    $region59: #{tpu_custom_call.1} parent=1 // pred_check_branch
      %100 = sbr.rel (0) target = $region61
    $region60: #{tpu_custom_call.1} parent=1 // pred_region
      %101 = dma.done [#allocation4], 256
    $region61: #{tpu_custom_call.1} parent=1 // pred_fallthru
      _
    // Predicated region
    $region62: #{tpu_custom_call.1} parent=1 // pred_check
      _
    $region63: #{tpu_custom_call.1} parent=1 // pred_check_branch
      %103 = sbr.rel (0) target = $region65
    $region64: #{tpu_custom_call.1} parent=1 // pred_region
      %104 = dma.done [#allocation7], 16
    $region65: #{tpu_custom_call.1} parent=1 // pred_fallthru
      _
    // Predicated region
    $region66: #{tpu_custom_call.1} parent=1 // pred_check
      _
    $region67: #{tpu_custom_call.1} parent=1 // pred_check_branch
      %106 = sbr.rel (0) target = $region69
    $region68: #{tpu_custom_call.1} parent=1 // pred_region
      %107 = dma.done [#allocation7], 32
    $region69: #{tpu_custom_call.1} parent=1 // pred_fallthru
      _
    // Predicated region
    $region70: #{tpu_custom_call.1} parent=1 // pred_check
      _
    $region71: #{tpu_custom_call.1} parent=1 // pred_check_branch
      %109 = sbr.rel (0) target = $region73
    $region72: #{tpu_custom_call.1} parent=1 // pred_region
      %110 = dma.done [#allocation10], 32
    $region73: #{tpu_custom_call.1} parent=1 // pred_fallthru
      _
    // Predicated region
    $region74: #{tpu_custom_call.1} parent=1 // pred_check
      _
    $region75: #{tpu_custom_call.1} parent=1 // pred_check_branch
      %112 = sbr.rel (0) target = $region77
    $region76: #{tpu_custom_call.1} parent=1 // pred_region
      %113 = dma.done [#allocation10], 32
    $region77: #{tpu_custom_call.1} parent=1 // pred_fallthru
      _
    %v114 = vld [vmem:[%s2] sm:$0xff]
    %v115 = vld [vmem:[%s2 + $0x8] sm:$0x1]
    %v116 = vld [vmem:[#allocation6] sm:$0x1]
    %v117 = vadd.f32 %v116, %v114
    %vm118 = vcmask 253952
    %119 = vst.msk [vmem:[#allocation2] sm:$0x1] %vm118, %v117
    %v120 = vld [vmem:[#allocation3] sm:$0xff]
    %vm123 = vcmask 1046528
    %v124 = vrot.slane %v114, 1
    %v125 = vrot.slane %v115, 1
    %v126 = vsel %vm123, %v124, %v125
    %v128 = vadd.f32 %v120, %v126
    %vm129 = vcmask 261120
    %130 = vst.msk [vmem:[#allocation2 + $0x1] sm:$0xff] %vm129, %v128
    %131 = vst.msk [vmem:[#allocation2 + $0x9] sm:$0x1] %vm118, %v117
    %s132 = scalar_lea.vmem [#allocation3], 8
    %v133 = vld [vmem:[%s132] sm:$0xff]
    %v134 = vadd.f32 %v133, %v126
    %135 = vst.msk [vmem:[#allocation2 + $0xa] sm:$0xff] %vm129, %v134
    %v136 = vld [vmem:[#allocation2] sm:$0xff]
    %v137 = vld [vmem:[#allocation2 + $0x8] sm:$0xff]
    %v138 = vld [vmem:[#allocation2 + $0x10] sm:$0x3]
    %v139 = vld [vmem:[%s3] sm:$0x1]
    %v140 = vld [vmem:[%s4] sm:$0x1]
    %v141 = vsel %vm129, %v136, 0.0
    %142 = vadd.xlane.f32.xlu0 %v141
    %v143 = vpop.xlane.xlu0 %142
    %v144 = vsel %vm129, %v137, 0.0
    %145 = vadd.xlane.f32.xlu0 %v144
    %v146 = vpop.xlane.xlu0 %145
    %vm147 = vcmask 254976
    %v148 = vsel %vm147, %v138, 0.0
    %149 = vadd.xlane.f32.xlu0 %v148
    %v150 = vpop.xlane.xlu0 %149
    %v151 = vrcp.pop 32.0
    %v152 = vmul.f32 %v143, %v151
    %v153 = vmul.f32 %v146, %v151
    %v154 = vmul.f32 %v150, %v151
    %v155 = vsub.f32 %v136, %v152
    %v156 = vsub.f32 %v137, %v153
    %v157 = vsub.f32 %v138, %v154
    %v158 = vmul.f32 %v155, %v155
    %v159 = vmul.f32 %v156, %v156
    %v160 = vmul.f32 %v157, %v157
    %v161 = vsel %vm129, %v158, 0.0
    %162 = vadd.xlane.f32.xlu0 %v161
    %v163 = vpop.xlane.xlu0 %162
    %v164 = vsel %vm129, %v159, 0.0
    %165 = vadd.xlane.f32.xlu0 %v164
    %v166 = vpop.xlane.xlu0 %165
    %v167 = vsel %vm147, %v160, 0.0
    %168 = vadd.xlane.f32.xlu0 %v167
    %v169 = vpop.xlane.xlu0 %168
    %v170 = vmul.f32 %v163, %v151
    %v171 = vmul.f32 %v166, %v151
    %v172 = vmul.f32 %v169, %v151
    %v173 = vadd.f32 %v170, 1e-05
    %v174 = vadd.f32 %v171, 1e-05
    %v175 = vadd.f32 %v172, 1e-05
    %v176 = vrsqrt.pop %v173
    %v177 = vrsqrt.pop %v174
    %v178 = vrsqrt.pop %v175
    %v179 = vmul.f32 %v155, %v176
    %v180 = vmul.f32 %v156, %v177
    %v181 = vmul.f32 %v157, %v178
    %v183 = vlaneseq
    %v184 = vshrl.u32 %v183, 7
    %v185 = vsub.s32 0, %v184
    %v186 = vrot.slane %v139, %v185
    %v188 = vmul.f32 %v179, %v186
    %v189 = vmul.f32 %v180, %v186
    %v190 = vmul.f32 %v181, %v186
    %v192 = vlaneseq
    %v193 = vshrl.u32 %v192, 7
    %v194 = vsub.s32 0, %v193
    %v195 = vrot.slane %v140, %v194
    %v197 = vadd.f32 %v188, %v195
    %v198 = vadd.f32 %v189, %v195
    %v199 = vadd.f32 %v190, %v195
    %v200 = vld [vmem:[%s5] sm:$0xff]
    %v201 = vld [vmem:[%s5 + $0x8] sm:$0xff]
    %v202 = vld [vmem:[%s5 + $0x10] sm:$0xff]
    %v203 = vld [vmem:[%s5 + $0x18] sm:$0xff]
    %v205 = vsel %vm129, %v197, 0
    %v208 = vsel %vm129, %v198, 0
    %v211 = vsel %vm129, %v199, 0
    %213 = vmatprep.subr.mxu0 0.0
    %214 = vmatpush1.msra.mxu0 %v200
    %215 = vmatprep.subr.mxu0 0.0
    %216 = vmatpush1.msra.mxu0 %v201
    %217 = vmatprep.subr.mxu0 0.0
    %218 = vmatpush1.msra.mxu0 %v202
    %219 = vmatprep.subr.mxu0 0.0
    %220 = vmatpush1.msra.mxu0 %v203
    %221 = vmatprep.subr.mxu0 0.0
    %222 = vmatpush1.msra.mxu0 0.0
    %223 = vmatprep.subr.mxu0 0.0
    %224 = vmatpush1.msra.mxu0 0.0
    %225 = vmatprep.subr.mxu0 0.0
    %226 = vmatpush1.msra.mxu0 0.0
    %227 = vmatprep.subr.mxu0 0.0
    %228 = vmatpush1.msra.mxu0 0.0
    %229 = vmatprep.subr.mxu0 0.0
    %230 = vmatpush1.msra.mxu0 0.0
    %231 = vmatprep.subr.mxu0 0.0
    %232 = vmatpush1.msra.mxu0 0.0
    %233 = vmatprep.subr.mxu0 0.0
    %234 = vmatpush1.msra.mxu0 0.0
    %235 = vmatprep.subr.mxu0 0.0
    %236 = vmatpush1.msra.mxu0 0.0
    %237 = vmatprep.subr.mxu0 0.0
    %238 = vmatpush1.msra.mxu0 0.0
    %239 = vmatprep.subr.mxu0 0.0
    %240 = vmatpush1.msra.mxu0 0.0
    %241 = vmatprep.subr.mxu0 0.0
    %242 = vmatpush1.msra.mxu0 0.0
    %243 = vmatprep.subr.mxu0 0.0
    %244 = vmatpush1.msra.mxu0 0.0
    %245 = vmatprep.subr.mxu0 0.0
    %246 = vmatpush1.msra.mxu0 0.0
    %247 = vmatprep.subr.mxu0 0.0
    %248 = vmatpush1.msra.mxu0 0.0
    %249 = vmatprep.subr.mxu0 0.0
    %250 = vmatpush1.msra.mxu0 0.0
    %251 = vmatprep.subr.mxu0 0.0
    %252 = vmatpush1.msra.mxu0 0.0
    %253 = vmatprep.subr.mxu0 0.0
    %254 = vmatpush1.msra.mxu0 0.0
    %255 = vmatprep.subr.mxu0 0.0
    %256 = vmatpush1.msra.mxu0 0.0
    %257 = vmatprep.subr.mxu0 0.0
    %258 = vmatpush1.msra.mxu0 0.0
    %259 = vmatprep.subr.mxu0 0.0
    %260 = vmatpush1.msra.mxu0 0.0
    %261 = vmatprep.subr.mxu0 0.0
    %262 = vmatpush1.msra.mxu0 0.0
    %263 = vmatprep.subr.mxu0 0.0
    %264 = vmatpush1.msra.mxu0 0.0
    %265 = vmatprep.subr.mxu0 0.0
    %266 = vmatpush1.msra.mxu0 0.0
    %267 = vmatprep.subr.mxu0 0.0
    %268 = vmatpush1.msra.mxu0 0.0
    %269 = vmatprep.subr.mxu0 0.0
    %270 = vmatpush1.msra.mxu0 0.0
    %271 = vmatprep.subr.mxu0 0.0
    %272 = vmatpush1.msra.mxu0 0.0
    %273 = vmatprep.subr.mxu0 0.0
    %274 = vmatpush1.msra.mxu0 0.0
    %275 = vmatprep.subr.mxu0 0.0
    %276 = vmatpush1.msra.mxu0 0.0
    %277 = vmatprep.mubr.f32.mxu0 0.0
    %278 = vmatmul.mubr.f32.gmra.mrb[0].mxu0 %v205
    %v279 = vpop.f32.mrb[0].mxu0
    %v280 = vadd.f32 0.0, %v279
    %v281 = vpop.f32.mrb[0].mxu0
    %282 = vmatprep.mubr.f32.mxu0 0.0
    %283 = vmatmul.mubr.f32.gmra.mrb[0].mxu0 %v208
    %v284 = vpop.f32.mrb[0].mxu0
    %v285 = vadd.f32 0.0, %v284
    %v286 = vpop.f32.mrb[0].mxu0
    %287 = vmatprep.mubr.f32.mxu0 0.0
    %288 = vmatmul.mubr.f32.gmra.mrb[0].mxu0 %v211
    %v289 = vpop.f32.mrb[0].mxu0
    %v290 = vadd.f32 0.0, %v289
    %v291 = vpop.f32.mrb[0].mxu0
    %292 = vdwg.mxu0
    %295 = vrot.lane.b32.xlu0 %v280, 96
    %v296 = vpop.permute.xlu0 %295
    %297 = vrot.lane.b32.xlu0 %v285, 96
    %v298 = vpop.permute.xlu0 %297
    %vm299 = vcmask 64512
    %v300 = vsel %vm299, %v280, 0
    %v302 = vsel %vm299, %v285, 0
    %v304 = vsel %vm299, %v296, 0
    %v306 = vsel %vm299, %v298, 0
    %308 = vmatprep.subr.mxu0 0.0
    %309 = vmatpush1.xpose.msra.mxu0 %v304
    %310 = vmatprep.subr.mxu0 0.0
    %311 = vmatpush1.xpose.msra.mxu0 %v306
    %312 = vmatprep.subr.mxu0 0.0
    %313 = vmatpush1.xpose.msra.mxu0 0.0
    %314 = vmatprep.subr.mxu0 0.0
    %315 = vmatpush1.xpose.msra.mxu0 0.0
    %316 = vmatprep.subr.mxu0 0.0
    %317 = vmatpush1.xpose.msra.mxu0 0.0
    %318 = vmatprep.subr.mxu0 0.0
    %319 = vmatpush1.xpose.msra.mxu0 0.0
    %320 = vmatprep.subr.mxu0 0.0
    %321 = vmatpush1.xpose.msra.mxu0 0.0
    %322 = vmatprep.subr.mxu0 0.0
    %323 = vmatpush1.xpose.msra.mxu0 0.0
    %324 = vmatprep.subr.mxu0 0.0
    %325 = vmatpush1.xpose.msra.mxu0 0.0
    %326 = vmatprep.subr.mxu0 0.0
    %327 = vmatpush1.xpose.msra.mxu0 0.0
    %328 = vmatprep.subr.mxu0 0.0
    %329 = vmatpush1.xpose.msra.mxu0 0.0
    %330 = vmatprep.subr.mxu0 0.0
    %331 = vmatpush1.xpose.msra.mxu0 0.0
    %332 = vmatprep.subr.mxu0 0.0
    %333 = vmatpush1.xpose.msra.mxu0 0.0
    %334 = vmatprep.subr.mxu0 0.0
    %335 = vmatpush1.xpose.msra.mxu0 0.0
    %336 = vmatprep.subr.mxu0 0.0
    %337 = vmatpush1.xpose.msra.mxu0 0.0
    %338 = vmatprep.subr.mxu0 0.0
    %339 = vmatpush1.xpose.msra.mxu0 0.0
    %340 = vmatprep.subr.mxu0 0.0
    %341 = vmatpush1.xpose.msra.mxu0 0.0
    %342 = vmatprep.subr.mxu0 0.0
    %343 = vmatpush1.xpose.msra.mxu0 0.0
    %344 = vmatprep.subr.mxu0 0.0
    %345 = vmatpush1.xpose.msra.mxu0 0.0
    %346 = vmatprep.subr.mxu0 0.0
    %347 = vmatpush1.xpose.msra.mxu0 0.0
    %348 = vmatprep.subr.mxu0 0.0
    %349 = vmatpush1.xpose.msra.mxu0 0.0
    %350 = vmatprep.subr.mxu0 0.0
    %351 = vmatpush1.xpose.msra.mxu0 0.0
    %352 = vmatprep.subr.mxu0 0.0
    %353 = vmatpush1.xpose.msra.mxu0 0.0
    %354 = vmatprep.subr.mxu0 0.0
    %355 = vmatpush1.xpose.msra.mxu0 0.0
    %356 = vmatprep.subr.mxu0 0.0
    %357 = vmatpush1.xpose.msra.mxu0 0.0
    %358 = vmatprep.subr.mxu0 0.0
    %359 = vmatpush1.xpose.msra.mxu0 0.0
    %360 = vmatprep.subr.mxu0 0.0
    %361 = vmatpush1.xpose.msra.mxu0 0.0
    %362 = vmatprep.subr.mxu0 0.0
    %363 = vmatpush1.xpose.msra.mxu0 0.0
    %364 = vmatprep.subr.mxu0 0.0
    %365 = vmatpush1.xpose.msra.mxu0 0.0
    %366 = vmatprep.subr.mxu0 0.0
    %367 = vmatpush1.xpose.msra.mxu0 0.0
    %368 = vmatprep.subr.mxu0 0.0
    %369 = vmatpush1.xpose.msra.mxu0 0.0
    %370 = vmatprep.subr.mxu0 0.0
    %371 = vmatpush1.xpose.msra.mxu0 0.0
    %372 = vmatprep.mubr.f32.mxu0 0.0
    %373 = vmatmul.mubr.f32.gmra.mrb[0].mxu0 %v300
    %v374 = vpop.f32.mrb[0].mxu0
    %v375 = vadd.f32 0.0, %v374
    %v376 = vpop.f32.mrb[0].mxu0
    %377 = vmatprep.mubr.f32.mxu0 0.0
    %378 = vmatmul.mubr.f32.gmra.mrb[0].mxu0 %v302
    %v379 = vpop.f32.mrb[0].mxu0
    %v380 = vadd.f32 0.0, %v379
    %v381 = vpop.f32.mrb[0].mxu0
    %382 = vdwg.mxu0
    %vm383 = vcmask 72704
    %v384 = vsel %vm383, %v375, -inf
    %385 = vmax.xlane.f32.xlu0 %v384
    %v386 = vpop.xlane.xlu0 %385
    %vm387 = vcmask 65536
    %v388 = vsel %vm387, %v380, -inf
    %389 = vmax.xlane.f32.xlu0 %v388
    %v390 = vpop.xlane.xlu0 %389
    %v391 = vsub.f32 %v375, %v386
    %v392 = vsub.f32 %v380, %v390
    %v393 = vmul.f32 %v391, 1.442695
    %v394 = vpow.pop %v393
    %v395 = vmul.f32 %v392, 1.442695
    %v396 = vpow.pop %v395
    %v397 = vsel %vm383, %v394, 0.0
    %398 = vadd.xlane.f32.xlu0 %v397
    %v399 = vpop.xlane.xlu0 %398
    %v400 = vsel %vm387, %v396, 0.0
    %401 = vadd.xlane.f32.xlu0 %v400
    %v402 = vpop.xlane.xlu0 %401
    %v403 = vrcp.pop %v399
    %v404 = vrcp.pop %v402
    %v405 = vmul.f32 %v394, %v403
    %v406 = vmul.f32 %v396, %v404
    %407 = vrot.lane.b32.xlu0 %v280, 64
    %v408 = vpop.permute.xlu0 %407
    %409 = vrot.lane.b32.xlu0 %v285, 64
    %v410 = vpop.permute.xlu0 %409
    %v413 = vsel %vm383, %v405, 0
    %v416 = vsel %vm383, %v406, 0
    %vm418 = vcmask 1040384
    %v419 = vsel %vm418, %v410, 0
    %421 = vmatprep.subr.mxu0 0.0
    %422 = vmatpush1.msra.mxu0 %v408
    %423 = vmatprep.subr.mxu0 0.0
    %424 = vmatpush1.msra.mxu0 %v419
    %425 = vmatprep.subr.mxu0 0.0
    %426 = vmatpush1.msra.mxu0 0.0
    %427 = vmatprep.subr.mxu0 0.0
    %428 = vmatpush1.msra.mxu0 0.0
    %429 = vmatprep.subr.mxu0 0.0
    %430 = vmatpush1.msra.mxu0 0.0
    %431 = vmatprep.subr.mxu0 0.0
    %432 = vmatpush1.msra.mxu0 0.0
    %433 = vmatprep.subr.mxu0 0.0
    %434 = vmatpush1.msra.mxu0 0.0
    %435 = vmatprep.subr.mxu0 0.0
    %436 = vmatpush1.msra.mxu0 0.0
    %437 = vmatprep.subr.mxu0 0.0
    %438 = vmatpush1.msra.mxu0 0.0
    %439 = vmatprep.subr.mxu0 0.0
    %440 = vmatpush1.msra.mxu0 0.0
    %441 = vmatprep.subr.mxu0 0.0
    %442 = vmatpush1.msra.mxu0 0.0
    %443 = vmatprep.subr.mxu0 0.0
    %444 = vmatpush1.msra.mxu0 0.0
    %445 = vmatprep.subr.mxu0 0.0
    %446 = vmatpush1.msra.mxu0 0.0
    %447 = vmatprep.subr.mxu0 0.0
    %448 = vmatpush1.msra.mxu0 0.0
    %449 = vmatprep.subr.mxu0 0.0
    %450 = vmatpush1.msra.mxu0 0.0
    %451 = vmatprep.subr.mxu0 0.0
    %452 = vmatpush1.msra.mxu0 0.0
    %453 = vmatprep.subr.mxu0 0.0
    %454 = vmatpush1.msra.mxu0 0.0
    %455 = vmatprep.subr.mxu0 0.0
    %456 = vmatpush1.msra.mxu0 0.0
    %457 = vmatprep.subr.mxu0 0.0
    %458 = vmatpush1.msra.mxu0 0.0
    %459 = vmatprep.subr.mxu0 0.0
    %460 = vmatpush1.msra.mxu0 0.0
    %461 = vmatprep.subr.mxu0 0.0
    %462 = vmatpush1.msra.mxu0 0.0
    %463 = vmatprep.subr.mxu0 0.0
    %464 = vmatpush1.msra.mxu0 0.0
    %465 = vmatprep.subr.mxu0 0.0
    %466 = vmatpush1.msra.mxu0 0.0
    %467 = vmatprep.subr.mxu0 0.0
    %468 = vmatpush1.msra.mxu0 0.0
    %469 = vmatprep.subr.mxu0 0.0
    %470 = vmatpush1.msra.mxu0 0.0
    %471 = vmatprep.subr.mxu0 0.0
    %472 = vmatpush1.msra.mxu0 0.0
    %473 = vmatprep.subr.mxu0 0.0
    %474 = vmatpush1.msra.mxu0 0.0
    %475 = vmatprep.subr.mxu0 0.0
    %476 = vmatpush1.msra.mxu0 0.0
    %477 = vmatprep.subr.mxu0 0.0
    %478 = vmatpush1.msra.mxu0 0.0
    %479 = vmatprep.subr.mxu0 0.0
    %480 = vmatpush1.msra.mxu0 0.0
    %481 = vmatprep.subr.mxu0 0.0
    %482 = vmatpush1.msra.mxu0 0.0
    %483 = vmatprep.subr.mxu0 0.0
    %484 = vmatpush1.msra.mxu0 0.0
    %485 = vmatprep.mubr.f32.mxu0 0.0
    %486 = vmatmul.mubr.f32.gmra.mrb[0].mxu0 %v413
    %v487 = vpop.f32.mrb[0].mxu0
    %v488 = vadd.f32 0.0, %v487
    %v489 = vpop.f32.mrb[0].mxu0
    %490 = vmatprep.mubr.f32.mxu0 0.0
    %491 = vmatmul.mubr.f32.gmra.mrb[0].mxu0 %v416
    %v492 = vpop.f32.mrb[0].mxu0
    %v493 = vadd.f32 0.0, %v492
    %v494 = vpop.f32.mrb[0].mxu0
    %495 = vdwg.mxu0
    %496 = vrot.lane.b32.xlu0 %v280, 120
    %v497 = vpop.permute.xlu0 %496
    %498 = vrot.lane.b32.xlu0 %v285, 120
    %v499 = vpop.permute.xlu0 %498
    %500 = vrot.lane.b32.xlu0 %v280, 88
    %v501 = vpop.permute.xlu0 %500
    %502 = vrot.lane.b32.xlu0 %v285, 88
    %v503 = vpop.permute.xlu0 %502
    %v504 = vsel %vm299, %v497, 0
    %v506 = vsel %vm299, %v499, 0
    %v508 = vsel %vm299, %v501, 0
    %v510 = vsel %vm299, %v503, 0
    %512 = vmatprep.subr.mxu0 0.0
    %513 = vmatpush1.xpose.msra.mxu0 %v508
    %514 = vmatprep.subr.mxu0 0.0
    %515 = vmatpush1.xpose.msra.mxu0 %v510
    %516 = vmatprep.subr.mxu0 0.0
    %517 = vmatpush1.xpose.msra.mxu0 0.0
    %518 = vmatprep.subr.mxu0 0.0
    %519 = vmatpush1.xpose.msra.mxu0 0.0
    %520 = vmatprep.subr.mxu0 0.0
    %521 = vmatpush1.xpose.msra.mxu0 0.0
    %522 = vmatprep.subr.mxu0 0.0
    %523 = vmatpush1.xpose.msra.mxu0 0.0
    %524 = vmatprep.subr.mxu0 0.0
    %525 = vmatpush1.xpose.msra.mxu0 0.0
    %526 = vmatprep.subr.mxu0 0.0
    %527 = vmatpush1.xpose.msra.mxu0 0.0
    %528 = vmatprep.subr.mxu0 0.0
    %529 = vmatpush1.xpose.msra.mxu0 0.0
    %530 = vmatprep.subr.mxu0 0.0
    %531 = vmatpush1.xpose.msra.mxu0 0.0
    %532 = vmatprep.subr.mxu0 0.0
    %533 = vmatpush1.xpose.msra.mxu0 0.0
    %534 = vmatprep.subr.mxu0 0.0
    %535 = vmatpush1.xpose.msra.mxu0 0.0
    %536 = vmatprep.subr.mxu0 0.0
    %537 = vmatpush1.xpose.msra.mxu0 0.0
    %538 = vmatprep.subr.mxu0 0.0
    %539 = vmatpush1.xpose.msra.mxu0 0.0
    %540 = vmatprep.subr.mxu0 0.0
    %541 = vmatpush1.xpose.msra.mxu0 0.0
    %542 = vmatprep.subr.mxu0 0.0
    %543 = vmatpush1.xpose.msra.mxu0 0.0
    %544 = vmatprep.subr.mxu0 0.0
    %545 = vmatpush1.xpose.msra.mxu0 0.0
    %546 = vmatprep.subr.mxu0 0.0
    %547 = vmatpush1.xpose.msra.mxu0 0.0
    %548 = vmatprep.subr.mxu0 0.0
    %549 = vmatpush1.xpose.msra.mxu0 0.0
    %550 = vmatprep.subr.mxu0 0.0
    %551 = vmatpush1.xpose.msra.mxu0 0.0
    %552 = vmatprep.subr.mxu0 0.0
    %553 = vmatpush1.xpose.msra.mxu0 0.0
    %554 = vmatprep.subr.mxu0 0.0
    %555 = vmatpush1.xpose.msra.mxu0 0.0
    %556 = vmatprep.subr.mxu0 0.0
    %557 = vmatpush1.xpose.msra.mxu0 0.0
    %558 = vmatprep.subr.mxu0 0.0
    %559 = vmatpush1.xpose.msra.mxu0 0.0
    %560 = vmatprep.subr.mxu0 0.0
    %561 = vmatpush1.xpose.msra.mxu0 0.0
    %562 = vmatprep.subr.mxu0 0.0
    %563 = vmatpush1.xpose.msra.mxu0 0.0
    %564 = vmatprep.subr.mxu0 0.0
    %565 = vmatpush1.xpose.msra.mxu0 0.0
    %566 = vmatprep.subr.mxu0 0.0
    %567 = vmatpush1.xpose.msra.mxu0 0.0
    %568 = vmatprep.subr.mxu0 0.0
    %569 = vmatpush1.xpose.msra.mxu0 0.0
    %570 = vmatprep.subr.mxu0 0.0
    %571 = vmatpush1.xpose.msra.mxu0 0.0
    %572 = vmatprep.subr.mxu0 0.0
    %573 = vmatpush1.xpose.msra.mxu0 0.0
    %574 = vmatprep.subr.mxu0 0.0
    %575 = vmatpush1.xpose.msra.mxu0 0.0
    %576 = vmatprep.mubr.f32.mxu0 0.0
    %577 = vmatmul.mubr.f32.gmra.mrb[0].mxu0 %v504
    %v578 = vpop.f32.mrb[0].mxu0
    %v579 = vadd.f32 0.0, %v578
    %v580 = vpop.f32.mrb[0].mxu0
    %581 = vmatprep.mubr.f32.mxu0 0.0
    %582 = vmatmul.mubr.f32.gmra.mrb[0].mxu0 %v506
    %v583 = vpop.f32.mrb[0].mxu0
    %v584 = vadd.f32 0.0, %v583
    %v585 = vpop.f32.mrb[0].mxu0
    %586 = vdwg.mxu0
    %v587 = vsel %vm383, %v579, -inf
    %588 = vmax.xlane.f32.xlu0 %v587
    %v589 = vpop.xlane.xlu0 %588
    %v590 = vsel %vm387, %v584, -inf
    %591 = vmax.xlane.f32.xlu0 %v590
    %v592 = vpop.xlane.xlu0 %591
    %v593 = vsub.f32 %v579, %v589
    %v594 = vsub.f32 %v584, %v592
    %v595 = vmul.f32 %v593, 1.442695
    %v596 = vpow.pop %v595
    %v597 = vmul.f32 %v594, 1.442695
    %v598 = vpow.pop %v597
    %v599 = vsel %vm383, %v596, 0.0
    %600 = vadd.xlane.f32.xlu0 %v599
    %v601 = vpop.xlane.xlu0 %600
    %v602 = vsel %vm387, %v598, 0.0
    %603 = vadd.xlane.f32.xlu0 %v602
    %v604 = vpop.xlane.xlu0 %603
    %v605 = vrcp.pop %v601
    %v606 = vrcp.pop %v604
    %v607 = vmul.f32 %v596, %v605
    %v608 = vmul.f32 %v598, %v606
    %609 = vrot.lane.b32.xlu0 %v280, 56
    %v610 = vpop.permute.xlu0 %609
    %611 = vrot.lane.b32.xlu0 %v285, 56
    %v612 = vpop.permute.xlu0 %611
    %v615 = vsel %vm383, %v607, 0
    %v618 = vsel %vm383, %v608, 0
    %v620 = vsel %vm418, %v612, 0
    %622 = vmatprep.subr.mxu0 0.0
    %623 = vmatpush1.msra.mxu0 %v610
    %624 = vmatprep.subr.mxu0 0.0
    %625 = vmatpush1.msra.mxu0 %v620
    %626 = vmatprep.subr.mxu0 0.0
    %627 = vmatpush1.msra.mxu0 0.0
    %628 = vmatprep.subr.mxu0 0.0
    %629 = vmatpush1.msra.mxu0 0.0
    %630 = vmatprep.subr.mxu0 0.0
    %631 = vmatpush1.msra.mxu0 0.0
    %632 = vmatprep.subr.mxu0 0.0
    %633 = vmatpush1.msra.mxu0 0.0
    %634 = vmatprep.subr.mxu0 0.0
    %635 = vmatpush1.msra.mxu0 0.0
    %636 = vmatprep.subr.mxu0 0.0
    %637 = vmatpush1.msra.mxu0 0.0
    %638 = vmatprep.subr.mxu0 0.0
    %639 = vmatpush1.msra.mxu0 0.0
    %640 = vmatprep.subr.mxu0 0.0
    %641 = vmatpush1.msra.mxu0 0.0
    %642 = vmatprep.subr.mxu0 0.0
    %643 = vmatpush1.msra.mxu0 0.0
    %644 = vmatprep.subr.mxu0 0.0
    %645 = vmatpush1.msra.mxu0 0.0
    %646 = vmatprep.subr.mxu0 0.0
    %647 = vmatpush1.msra.mxu0 0.0
    %648 = vmatprep.subr.mxu0 0.0
    %649 = vmatpush1.msra.mxu0 0.0
    %650 = vmatprep.subr.mxu0 0.0
    %651 = vmatpush1.msra.mxu0 0.0
    %652 = vmatprep.subr.mxu0 0.0
    %653 = vmatpush1.msra.mxu0 0.0
    %654 = vmatprep.subr.mxu0 0.0
    %655 = vmatpush1.msra.mxu0 0.0
    %656 = vmatprep.subr.mxu0 0.0
    %657 = vmatpush1.msra.mxu0 0.0
    %658 = vmatprep.subr.mxu0 0.0
    %659 = vmatpush1.msra.mxu0 0.0
    %660 = vmatprep.subr.mxu0 0.0
    %661 = vmatpush1.msra.mxu0 0.0
    %662 = vmatprep.subr.mxu0 0.0
    %663 = vmatpush1.msra.mxu0 0.0
    %664 = vmatprep.subr.mxu0 0.0
    %665 = vmatpush1.msra.mxu0 0.0
    %666 = vmatprep.subr.mxu0 0.0
    %667 = vmatpush1.msra.mxu0 0.0
    %668 = vmatprep.subr.mxu0 0.0
    %669 = vmatpush1.msra.mxu0 0.0
    %670 = vmatprep.subr.mxu0 0.0
    %671 = vmatpush1.msra.mxu0 0.0
    %672 = vmatprep.subr.mxu0 0.0
    %673 = vmatpush1.msra.mxu0 0.0
    %674 = vmatprep.subr.mxu0 0.0
    %675 = vmatpush1.msra.mxu0 0.0
    %676 = vmatprep.subr.mxu0 0.0
    %677 = vmatpush1.msra.mxu0 0.0
    %678 = vmatprep.subr.mxu0 0.0
    %679 = vmatpush1.msra.mxu0 0.0
    %680 = vmatprep.subr.mxu0 0.0
    %681 = vmatpush1.msra.mxu0 0.0
    %682 = vmatprep.subr.mxu0 0.0
    %683 = vmatpush1.msra.mxu0 0.0
    %684 = vmatprep.subr.mxu0 0.0
    %685 = vmatpush1.msra.mxu0 0.0
    %686 = vmatprep.mubr.f32.mxu0 0.0
    %687 = vmatmul.mubr.f32.gmra.mrb[0].mxu0 %v615
    %v688 = vpop.f32.mrb[0].mxu0
    %v689 = vadd.f32 0.0, %v688
    %v690 = vpop.f32.mrb[0].mxu0
    %691 = vmatprep.mubr.f32.mxu0 0.0
    %692 = vmatmul.mubr.f32.gmra.mrb[0].mxu0 %v618
    %v693 = vpop.f32.mrb[0].mxu0
    %v694 = vadd.f32 0.0, %v693
    %v695 = vpop.f32.mrb[0].mxu0
    %696 = vdwg.mxu0
    %697 = vrot.lane.b32.xlu0 %v280, 112
    %v698 = vpop.permute.xlu0 %697
    %699 = vrot.lane.b32.xlu0 %v285, 112
    %v700 = vpop.permute.xlu0 %699
    %701 = vrot.lane.b32.xlu0 %v280, 80
    %v702 = vpop.permute.xlu0 %701
    %703 = vrot.lane.b32.xlu0 %v285, 80
    %v704 = vpop.permute.xlu0 %703
    %v705 = vsel %vm299, %v698, 0
    %v707 = vsel %vm299, %v700, 0
    %v709 = vsel %vm299, %v702, 0
    %v711 = vsel %vm299, %v704, 0
    %713 = vmatprep.subr.mxu0 0.0
    %714 = vmatpush1.xpose.msra.mxu0 %v709
    %715 = vmatprep.subr.mxu0 0.0
    %716 = vmatpush1.xpose.msra.mxu0 %v711
    %717 = vmatprep.subr.mxu0 0.0
    %718 = vmatpush1.xpose.msra.mxu0 0.0
    %719 = vmatprep.subr.mxu0 0.0
    %720 = vmatpush1.xpose.msra.mxu0 0.0
    %721 = vmatprep.subr.mxu0 0.0
    %722 = vmatpush1.xpose.msra.mxu0 0.0
    %723 = vmatprep.subr.mxu0 0.0
    %724 = vmatpush1.xpose.msra.mxu0 0.0
    %725 = vmatprep.subr.mxu0 0.0
    %726 = vmatpush1.xpose.msra.mxu0 0.0
    %727 = vmatprep.subr.mxu0 0.0
    %728 = vmatpush1.xpose.msra.mxu0 0.0
    %729 = vmatprep.subr.mxu0 0.0
    %730 = vmatpush1.xpose.msra.mxu0 0.0
    %731 = vmatprep.subr.mxu0 0.0
    %732 = vmatpush1.xpose.msra.mxu0 0.0
    %733 = vmatprep.subr.mxu0 0.0
    %734 = vmatpush1.xpose.msra.mxu0 0.0
    %735 = vmatprep.subr.mxu0 0.0
    %736 = vmatpush1.xpose.msra.mxu0 0.0
    %737 = vmatprep.subr.mxu0 0.0
    %738 = vmatpush1.xpose.msra.mxu0 0.0
    %739 = vmatprep.subr.mxu0 0.0
    %740 = vmatpush1.xpose.msra.mxu0 0.0
    %741 = vmatprep.subr.mxu0 0.0
    %742 = vmatpush1.xpose.msra.mxu0 0.0
    %743 = vmatprep.subr.mxu0 0.0
    %744 = vmatpush1.xpose.msra.mxu0 0.0
    %745 = vmatprep.subr.mxu0 0.0
    %746 = vmatpush1.xpose.msra.mxu0 0.0
    %747 = vmatprep.subr.mxu0 0.0
    %748 = vmatpush1.xpose.msra.mxu0 0.0
    %749 = vmatprep.subr.mxu0 0.0
    %750 = vmatpush1.xpose.msra.mxu0 0.0
    %751 = vmatprep.subr.mxu0 0.0
    %752 = vmatpush1.xpose.msra.mxu0 0.0
    %753 = vmatprep.subr.mxu0 0.0
    %754 = vmatpush1.xpose.msra.mxu0 0.0
    %755 = vmatprep.subr.mxu0 0.0
    %756 = vmatpush1.xpose.msra.mxu0 0.0
    %757 = vmatprep.subr.mxu0 0.0
    %758 = vmatpush1.xpose.msra.mxu0 0.0
    %759 = vmatprep.subr.mxu0 0.0
    %760 = vmatpush1.xpose.msra.mxu0 0.0
    %761 = vmatprep.subr.mxu0 0.0
    %762 = vmatpush1.xpose.msra.mxu0 0.0
    %763 = vmatprep.subr.mxu0 0.0
    %764 = vmatpush1.xpose.msra.mxu0 0.0
    %765 = vmatprep.subr.mxu0 0.0
    %766 = vmatpush1.xpose.msra.mxu0 0.0
    %767 = vmatprep.subr.mxu0 0.0
    %768 = vmatpush1.xpose.msra.mxu0 0.0
    %769 = vmatprep.subr.mxu0 0.0
    %770 = vmatpush1.xpose.msra.mxu0 0.0
    %771 = vmatprep.subr.mxu0 0.0
    %772 = vmatpush1.xpose.msra.mxu0 0.0
    %773 = vmatprep.subr.mxu0 0.0
    %774 = vmatpush1.xpose.msra.mxu0 0.0
    %775 = vmatprep.subr.mxu0 0.0
    %776 = vmatpush1.xpose.msra.mxu0 0.0
    %777 = vmatprep.mubr.f32.mxu0 0.0
    %778 = vmatmul.mubr.f32.gmra.mrb[0].mxu0 %v705
    %v779 = vpop.f32.mrb[0].mxu0
    %v780 = vadd.f32 0.0, %v779
    %v781 = vpop.f32.mrb[0].mxu0
    %782 = vmatprep.mubr.f32.mxu0 0.0
    %783 = vmatmul.mubr.f32.gmra.mrb[0].mxu0 %v707
    %v784 = vpop.f32.mrb[0].mxu0
    %v785 = vadd.f32 0.0, %v784
    %v786 = vpop.f32.mrb[0].mxu0
    %787 = vdwg.mxu0
    %v788 = vsel %vm383, %v780, -inf
    %789 = vmax.xlane.f32.xlu0 %v788
    %v790 = vpop.xlane.xlu0 %789
    %v791 = vsel %vm387, %v785, -inf
    %792 = vmax.xlane.f32.xlu0 %v791
    %v793 = vpop.xlane.xlu0 %792
    %v794 = vsub.f32 %v780, %v790
    %v795 = vsub.f32 %v785, %v793
    %v796 = vmul.f32 %v794, 1.442695
    %v797 = vpow.pop %v796
    %v798 = vmul.f32 %v795, 1.442695
    %v799 = vpow.pop %v798
    %v800 = vsel %vm383, %v797, 0.0
    %801 = vadd.xlane.f32.xlu0 %v800
    %v802 = vpop.xlane.xlu0 %801
    %v803 = vsel %vm387, %v799, 0.0
    %804 = vadd.xlane.f32.xlu0 %v803
    %v805 = vpop.xlane.xlu0 %804
    %v806 = vrcp.pop %v802
    %v807 = vrcp.pop %v805
    %v808 = vmul.f32 %v797, %v806
    %v809 = vmul.f32 %v799, %v807
    %810 = vrot.lane.b32.xlu0 %v280, 48
    %v811 = vpop.permute.xlu0 %810
    %812 = vrot.lane.b32.xlu0 %v285, 48
    %v813 = vpop.permute.xlu0 %812
    %v816 = vsel %vm383, %v808, 0
    %v819 = vsel %vm383, %v809, 0
    %v821 = vsel %vm418, %v813, 0
    %823 = vmatprep.subr.mxu0 0.0
    %824 = vmatpush1.msra.mxu0 %v811
    %825 = vmatprep.subr.mxu0 0.0
    %826 = vmatpush1.msra.mxu0 %v821
    %827 = vmatprep.subr.mxu0 0.0
    %828 = vmatpush1.msra.mxu0 0.0
    %829 = vmatprep.subr.mxu0 0.0
    %830 = vmatpush1.msra.mxu0 0.0
    %831 = vmatprep.subr.mxu0 0.0
    %832 = vmatpush1.msra.mxu0 0.0
    %833 = vmatprep.subr.mxu0 0.0
    %834 = vmatpush1.msra.mxu0 0.0
    %835 = vmatprep.subr.mxu0 0.0
    %836 = vmatpush1.msra.mxu0 0.0
    %837 = vmatprep.subr.mxu0 0.0
    %838 = vmatpush1.msra.mxu0 0.0
    %839 = vmatprep.subr.mxu0 0.0
    %840 = vmatpush1.msra.mxu0 0.0
    %841 = vmatprep.subr.mxu0 0.0
    %842 = vmatpush1.msra.mxu0 0.0
    %843 = vmatprep.subr.mxu0 0.0
    %844 = vmatpush1.msra.mxu0 0.0
    %845 = vmatprep.subr.mxu0 0.0
    %846 = vmatpush1.msra.mxu0 0.0
    %847 = vmatprep.subr.mxu0 0.0
    %848 = vmatpush1.msra.mxu0 0.0
    %849 = vmatprep.subr.mxu0 0.0
    %850 = vmatpush1.msra.mxu0 0.0
    %851 = vmatprep.subr.mxu0 0.0
    %852 = vmatpush1.msra.mxu0 0.0
    %853 = vmatprep.subr.mxu0 0.0
    %854 = vmatpush1.msra.mxu0 0.0
    %855 = vmatprep.subr.mxu0 0.0
    %856 = vmatpush1.msra.mxu0 0.0
    %857 = vmatprep.subr.mxu0 0.0
    %858 = vmatpush1.msra.mxu0 0.0
    %859 = vmatprep.subr.mxu0 0.0
    %860 = vmatpush1.msra.mxu0 0.0
    %861 = vmatprep.subr.mxu0 0.0
    %862 = vmatpush1.msra.mxu0 0.0
    %863 = vmatprep.subr.mxu0 0.0
    %864 = vmatpush1.msra.mxu0 0.0
    %865 = vmatprep.subr.mxu0 0.0
    %866 = vmatpush1.msra.mxu0 0.0
    %867 = vmatprep.subr.mxu0 0.0
    %868 = vmatpush1.msra.mxu0 0.0
    %869 = vmatprep.subr.mxu0 0.0
    %870 = vmatpush1.msra.mxu0 0.0
    %871 = vmatprep.subr.mxu0 0.0
    %872 = vmatpush1.msra.mxu0 0.0
    %873 = vmatprep.subr.mxu0 0.0
    %874 = vmatpush1.msra.mxu0 0.0
    %875 = vmatprep.subr.mxu0 0.0
    %876 = vmatpush1.msra.mxu0 0.0
    %877 = vmatprep.subr.mxu0 0.0
    %878 = vmatpush1.msra.mxu0 0.0
    %879 = vmatprep.subr.mxu0 0.0
    %880 = vmatpush1.msra.mxu0 0.0
    %881 = vmatprep.subr.mxu0 0.0
    %882 = vmatpush1.msra.mxu0 0.0
    %883 = vmatprep.subr.mxu0 0.0
    %884 = vmatpush1.msra.mxu0 0.0
    %885 = vmatprep.subr.mxu0 0.0
    %886 = vmatpush1.msra.mxu0 0.0
    %887 = vmatprep.mubr.f32.mxu0 0.0
    %888 = vmatmul.mubr.f32.gmra.mrb[0].mxu0 %v816
    %v889 = vpop.f32.mrb[0].mxu0
    %v890 = vadd.f32 0.0, %v889
    %v891 = vpop.f32.mrb[0].mxu0
    %892 = vmatprep.mubr.f32.mxu0 0.0
    %893 = vmatmul.mubr.f32.gmra.mrb[0].mxu0 %v819
    %v894 = vpop.f32.mrb[0].mxu0
    %v895 = vadd.f32 0.0, %v894
    %v896 = vpop.f32.mrb[0].mxu0
    %897 = vdwg.mxu0
    %898 = vrot.lane.b32.xlu0 %v280, 104
    %v899 = vpop.permute.xlu0 %898
    %900 = vrot.lane.b32.xlu0 %v285, 104
    %v901 = vpop.permute.xlu0 %900
    %902 = vrot.lane.b32.xlu0 %v280, 72
    %v903 = vpop.permute.xlu0 %902
    %904 = vrot.lane.b32.xlu0 %v285, 72
    %v905 = vpop.permute.xlu0 %904
    %v906 = vsel %vm299, %v899, 0
    %v908 = vsel %vm299, %v901, 0
    %v910 = vsel %vm299, %v903, 0
    %v912 = vsel %vm299, %v905, 0
    %914 = vmatprep.subr.mxu0 0.0
    %915 = vmatpush1.xpose.msra.mxu0 %v910
    %916 = vmatprep.subr.mxu0 0.0
    %917 = vmatpush1.xpose.msra.mxu0 %v912
    %918 = vmatprep.subr.mxu0 0.0
    %919 = vmatpush1.xpose.msra.mxu0 0.0
    %920 = vmatprep.subr.mxu0 0.0
    %921 = vmatpush1.xpose.msra.mxu0 0.0
    %922 = vmatprep.subr.mxu0 0.0
    %923 = vmatpush1.xpose.msra.mxu0 0.0
    %924 = vmatprep.subr.mxu0 0.0
    %925 = vmatpush1.xpose.msra.mxu0 0.0
    %926 = vmatprep.subr.mxu0 0.0
    %927 = vmatpush1.xpose.msra.mxu0 0.0
    %928 = vmatprep.subr.mxu0 0.0
    %929 = vmatpush1.xpose.msra.mxu0 0.0
    %930 = vmatprep.subr.mxu0 0.0
    %931 = vmatpush1.xpose.msra.mxu0 0.0
    %932 = vmatprep.subr.mxu0 0.0
    %933 = vmatpush1.xpose.msra.mxu0 0.0
    %934 = vmatprep.subr.mxu0 0.0
    %935 = vmatpush1.xpose.msra.mxu0 0.0
    %936 = vmatprep.subr.mxu0 0.0
    %937 = vmatpush1.xpose.msra.mxu0 0.0
    %938 = vmatprep.subr.mxu0 0.0
    %939 = vmatpush1.xpose.msra.mxu0 0.0
    %940 = vmatprep.subr.mxu0 0.0
    %941 = vmatpush1.xpose.msra.mxu0 0.0
    %942 = vmatprep.subr.mxu0 0.0
    %943 = vmatpush1.xpose.msra.mxu0 0.0
    %944 = vmatprep.subr.mxu0 0.0
    %945 = vmatpush1.xpose.msra.mxu0 0.0
    %946 = vmatprep.subr.mxu0 0.0
    %947 = vmatpush1.xpose.msra.mxu0 0.0
    %948 = vmatprep.subr.mxu0 0.0
    %949 = vmatpush1.xpose.msra.mxu0 0.0
    %950 = vmatprep.subr.mxu0 0.0
    %951 = vmatpush1.xpose.msra.mxu0 0.0
    %952 = vmatprep.subr.mxu0 0.0
    %953 = vmatpush1.xpose.msra.mxu0 0.0
    %954 = vmatprep.subr.mxu0 0.0
    %955 = vmatpush1.xpose.msra.mxu0 0.0
    %956 = vmatprep.subr.mxu0 0.0
    %957 = vmatpush1.xpose.msra.mxu0 0.0
    %958 = vmatprep.subr.mxu0 0.0
    %959 = vmatpush1.xpose.msra.mxu0 0.0
    %960 = vmatprep.subr.mxu0 0.0
    %961 = vmatpush1.xpose.msra.mxu0 0.0
    %962 = vmatprep.subr.mxu0 0.0
    %963 = vmatpush1.xpose.msra.mxu0 0.0
    %964 = vmatprep.subr.mxu0 0.0
    %965 = vmatpush1.xpose.msra.mxu0 0.0
    %966 = vmatprep.subr.mxu0 0.0
    %967 = vmatpush1.xpose.msra.mxu0 0.0
    %968 = vmatprep.subr.mxu0 0.0
    %969 = vmatpush1.xpose.msra.mxu0 0.0
    %970 = vmatprep.subr.mxu0 0.0
    %971 = vmatpush1.xpose.msra.mxu0 0.0
    %972 = vmatprep.subr.mxu0 0.0
    %973 = vmatpush1.xpose.msra.mxu0 0.0
    %974 = vmatprep.subr.mxu0 0.0
    %975 = vmatpush1.xpose.msra.mxu0 0.0
    %976 = vmatprep.subr.mxu0 0.0
    %977 = vmatpush1.xpose.msra.mxu0 0.0
    %978 = vmatprep.mubr.f32.mxu0 0.0
    %979 = vmatmul.mubr.f32.gmra.mrb[0].mxu0 %v906
    %v980 = vpop.f32.mrb[0].mxu0
    %v981 = vadd.f32 0.0, %v980
    %v982 = vpop.f32.mrb[0].mxu0
    %983 = vmatprep.mubr.f32.mxu0 0.0
    %984 = vmatmul.mubr.f32.gmra.mrb[0].mxu0 %v908
    %v985 = vpop.f32.mrb[0].mxu0
    %v986 = vadd.f32 0.0, %v985
    %v987 = vpop.f32.mrb[0].mxu0
    %988 = vdwg.mxu0
    %v989 = vsel %vm383, %v981, -inf
    %990 = vmax.xlane.f32.xlu0 %v989
    %v991 = vpop.xlane.xlu0 %990
    %v992 = vsel %vm387, %v986, -inf
    %993 = vmax.xlane.f32.xlu0 %v992
    %v994 = vpop.xlane.xlu0 %993
    %v995 = vsub.f32 %v981, %v991
    %v996 = vsub.f32 %v986, %v994
    %v997 = vmul.f32 %v995, 1.442695
    %v998 = vpow.pop %v997
    %v999 = vmul.f32 %v996, 1.442695
    %v1000 = vpow.pop %v999
    %v1001 = vsel %vm383, %v998, 0.0
    %1002 = vadd.xlane.f32.xlu0 %v1001
    %v1003 = vpop.xlane.xlu0 %1002
    %v1004 = vsel %vm387, %v1000, 0.0
    %1005 = vadd.xlane.f32.xlu0 %v1004
    %v1006 = vpop.xlane.xlu0 %1005
    %v1007 = vrcp.pop %v1003
    %v1008 = vrcp.pop %v1006
    %v1009 = vmul.f32 %v998, %v1007
    %v1010 = vmul.f32 %v1000, %v1008
    %1011 = vrot.lane.b32.xlu0 %v280, 40
    %v1012 = vpop.permute.xlu0 %1011
    %1013 = vrot.lane.b32.xlu0 %v285, 40
    %v1014 = vpop.permute.xlu0 %1013
    %v1017 = vsel %vm383, %v1009, 0
    %v1020 = vsel %vm383, %v1010, 0
    %v1022 = vsel %vm418, %v1014, 0
    %1024 = vmatprep.subr.mxu0 0.0
    %1025 = vmatpush1.msra.mxu0 %v1012
    %1026 = vmatprep.subr.mxu0 0.0
    %1027 = vmatpush1.msra.mxu0 %v1022
    %1028 = vmatprep.subr.mxu0 0.0
    %1029 = vmatpush1.msra.mxu0 0.0
    %1030 = vmatprep.subr.mxu0 0.0
    %1031 = vmatpush1.msra.mxu0 0.0
    %1032 = vmatprep.subr.mxu0 0.0
    %1033 = vmatpush1.msra.mxu0 0.0
    %1034 = vmatprep.subr.mxu0 0.0
    %1035 = vmatpush1.msra.mxu0 0.0
    %1036 = vmatprep.subr.mxu0 0.0
    %1037 = vmatpush1.msra.mxu0 0.0
    %1038 = vmatprep.subr.mxu0 0.0
    %1039 = vmatpush1.msra.mxu0 0.0
    %1040 = vmatprep.subr.mxu0 0.0
    %1041 = vmatpush1.msra.mxu0 0.0
    %1042 = vmatprep.subr.mxu0 0.0
    %1043 = vmatpush1.msra.mxu0 0.0
    %1044 = vmatprep.subr.mxu0 0.0
    %1045 = vmatpush1.msra.mxu0 0.0
    %1046 = vmatprep.subr.mxu0 0.0
    %1047 = vmatpush1.msra.mxu0 0.0
    %1048 = vmatprep.subr.mxu0 0.0
    %1049 = vmatpush1.msra.mxu0 0.0
    %1050 = vmatprep.subr.mxu0 0.0
    %1051 = vmatpush1.msra.mxu0 0.0
    %1052 = vmatprep.subr.mxu0 0.0
    %1053 = vmatpush1.msra.mxu0 0.0
    %1054 = vmatprep.subr.mxu0 0.0
    %1055 = vmatpush1.msra.mxu0 0.0
    %1056 = vmatprep.subr.mxu0 0.0
    %1057 = vmatpush1.msra.mxu0 0.0
    %1058 = vmatprep.subr.mxu0 0.0
    %1059 = vmatpush1.msra.mxu0 0.0
    %1060 = vmatprep.subr.mxu0 0.0
    %1061 = vmatpush1.msra.mxu0 0.0
    %1062 = vmatprep.subr.mxu0 0.0
    %1063 = vmatpush1.msra.mxu0 0.0
    %1064 = vmatprep.subr.mxu0 0.0
    %1065 = vmatpush1.msra.mxu0 0.0
    %1066 = vmatprep.subr.mxu0 0.0
    %1067 = vmatpush1.msra.mxu0 0.0
    %1068 = vmatprep.subr.mxu0 0.0
    %1069 = vmatpush1.msra.mxu0 0.0
    %1070 = vmatprep.subr.mxu0 0.0
    %1071 = vmatpush1.msra.mxu0 0.0
    %1072 = vmatprep.subr.mxu0 0.0
    %1073 = vmatpush1.msra.mxu0 0.0
    %1074 = vmatprep.subr.mxu0 0.0
    %1075 = vmatpush1.msra.mxu0 0.0
    %1076 = vmatprep.subr.mxu0 0.0
    %1077 = vmatpush1.msra.mxu0 0.0
    %1078 = vmatprep.subr.mxu0 0.0
    %1079 = vmatpush1.msra.mxu0 0.0
    %1080 = vmatprep.subr.mxu0 0.0
    %1081 = vmatpush1.msra.mxu0 0.0
    %1082 = vmatprep.subr.mxu0 0.0
    %1083 = vmatpush1.msra.mxu0 0.0
    %1084 = vmatprep.subr.mxu0 0.0
    %1085 = vmatpush1.msra.mxu0 0.0
    %1086 = vmatprep.subr.mxu0 0.0
    %1087 = vmatpush1.msra.mxu0 0.0
    %1088 = vmatprep.mubr.f32.mxu0 0.0
    %1089 = vmatmul.mubr.f32.gmra.mrb[0].mxu0 %v1017
    %v1090 = vpop.f32.mrb[0].mxu0
    %v1091 = vadd.f32 0.0, %v1090
    %v1092 = vpop.f32.mrb[0].mxu0
    %1093 = vmatprep.mubr.f32.mxu0 0.0
    %1094 = vmatmul.mubr.f32.gmra.mrb[0].mxu0 %v1020
    %v1095 = vpop.f32.mrb[0].mxu0
    %v1096 = vadd.f32 0.0, %v1095
    %v1097 = vpop.f32.mrb[0].mxu0
    %1098 = vdwg.mxu0
    %1101 = vrot.lane.b32.xlu0 %v689, 8
    %v1102 = vpop.permute.xlu0 %1101
    %1103 = vrot.lane.b32.xlu0 %v694, 8
    %v1104 = vpop.permute.xlu0 %1103
    %1109 = vrot.lane.b32.xlu0 %v890, 16
    %v1110 = vpop.permute.xlu0 %1109
    %1111 = vrot.lane.b32.xlu0 %v895, 16
    %v1112 = vpop.permute.xlu0 %1111
    %1117 = vrot.lane.b32.xlu0 %v1091, 24
    %v1118 = vpop.permute.xlu0 %1117
    %1119 = vrot.lane.b32.xlu0 %v1096, 24
    %v1120 = vpop.permute.xlu0 %1119
    %v1123 = vsel %vm299, %v488, %v1102
    %v1124 = vsel %vm299, %v493, %v1104
    %vm1125 = vcmask 130048
    %v1126 = vsel %vm1125, %v1123, %v1110
    %v1127 = vsel %vm1125, %v1124, %v1112
    %vm1128 = vcmask 195584
    %v1129 = vsel %vm1128, %v1126, %v1118
    %v1130 = vsel %vm1128, %v1127, %v1120
    %v1131 = vld [vmem:[%s6] sm:$0xff]
    %v1132 = vld [vmem:[%s6 + $0x8] sm:$0xff]
    %v1133 = vld [vmem:[%s6 + $0x10] sm:$0xff]
    %v1134 = vld [vmem:[%s6 + $0x18] sm:$0xff]
    %v1135 = vld [vmem:[%s7] sm:$0x1]
    %v1137 = vlaneseq
    %v1138 = vshrl.u32 %v1137, 7
    %v1139 = vsub.s32 0, %v1138
    %v1140 = vrot.slane %v1135, %v1139
    %v1143 = vsel %vm129, %v1129, 0
    %v1146 = vsel %vm129, %v1130, 0
    %1148 = vmatprep.subr.mxu0 0.0
    %1149 = vmatpush1.msra.mxu0 %v1131
    %1150 = vmatprep.subr.mxu0 0.0
    %1151 = vmatpush1.msra.mxu0 %v1132
    %1152 = vmatprep.subr.mxu0 0.0
    %1153 = vmatpush1.msra.mxu0 %v1133
    %1154 = vmatprep.subr.mxu0 0.0
    %1155 = vmatpush1.msra.mxu0 %v1134
    %1156 = vmatprep.subr.mxu0 0.0
    %1157 = vmatpush1.msra.mxu0 0.0
    %1158 = vmatprep.subr.mxu0 0.0
    %1159 = vmatpush1.msra.mxu0 0.0
    %1160 = vmatprep.subr.mxu0 0.0
    %1161 = vmatpush1.msra.mxu0 0.0
    %1162 = vmatprep.subr.mxu0 0.0
    %1163 = vmatpush1.msra.mxu0 0.0
    %1164 = vmatprep.subr.mxu0 0.0
    %1165 = vmatpush1.msra.mxu0 0.0
    %1166 = vmatprep.subr.mxu0 0.0
    %1167 = vmatpush1.msra.mxu0 0.0
    %1168 = vmatprep.subr.mxu0 0.0
    %1169 = vmatpush1.msra.mxu0 0.0
    %1170 = vmatprep.subr.mxu0 0.0
    %1171 = vmatpush1.msra.mxu0 0.0
    %1172 = vmatprep.subr.mxu0 0.0
    %1173 = vmatpush1.msra.mxu0 0.0
    %1174 = vmatprep.subr.mxu0 0.0
    %1175 = vmatpush1.msra.mxu0 0.0
    %1176 = vmatprep.subr.mxu0 0.0
    %1177 = vmatpush1.msra.mxu0 0.0
    %1178 = vmatprep.subr.mxu0 0.0
    %1179 = vmatpush1.msra.mxu0 0.0
    %1180 = vmatprep.subr.mxu0 0.0
    %1181 = vmatpush1.msra.mxu0 0.0
    %1182 = vmatprep.subr.mxu0 0.0
    %1183 = vmatpush1.msra.mxu0 0.0
    %1184 = vmatprep.subr.mxu0 0.0
    %1185 = vmatpush1.msra.mxu0 0.0
    %1186 = vmatprep.subr.mxu0 0.0
    %1187 = vmatpush1.msra.mxu0 0.0
    %1188 = vmatprep.subr.mxu0 0.0
    %1189 = vmatpush1.msra.mxu0 0.0
    %1190 = vmatprep.subr.mxu0 0.0
    %1191 = vmatpush1.msra.mxu0 0.0
    %1192 = vmatprep.subr.mxu0 0.0
    %1193 = vmatpush1.msra.mxu0 0.0
    %1194 = vmatprep.subr.mxu0 0.0
    %1195 = vmatpush1.msra.mxu0 0.0
    %1196 = vmatprep.subr.mxu0 0.0
    %1197 = vmatpush1.msra.mxu0 0.0
    %1198 = vmatprep.subr.mxu0 0.0
    %1199 = vmatpush1.msra.mxu0 0.0
    %1200 = vmatprep.subr.mxu0 0.0
    %1201 = vmatpush1.msra.mxu0 0.0
    %1202 = vmatprep.subr.mxu0 0.0
    %1203 = vmatpush1.msra.mxu0 0.0
    %1204 = vmatprep.subr.mxu0 0.0
    %1205 = vmatpush1.msra.mxu0 0.0
    %1206 = vmatprep.subr.mxu0 0.0
    %1207 = vmatpush1.msra.mxu0 0.0
    %1208 = vmatprep.subr.mxu0 0.0
    %1209 = vmatpush1.msra.mxu0 0.0
    %1210 = vmatprep.subr.mxu0 0.0
    %1211 = vmatpush1.msra.mxu0 0.0
    %1212 = vmatprep.mubr.f32.mxu0 0.0
    %1213 = vmatmul.mubr.f32.gmra.mrb[0].mxu0 %v1143
    %v1214 = vpop.f32.mrb[0].mxu0
    %v1215 = vadd.f32 %v1140, %v1214
    %v1216 = vpop.f32.mrb[0].mxu0
    %1217 = vmatprep.mubr.f32.mxu0 0.0
    %1218 = vmatmul.mubr.f32.gmra.mrb[0].mxu0 %v1146
    %v1219 = vpop.f32.mrb[0].mxu0
    %v1220 = vadd.f32 %v1140, %v1219
    %v1221 = vpop.f32.mrb[0].mxu0
    %1222 = vdwg.mxu0
    %v1223 = vadd.f32 %v136, %v1215
    %v1224 = vadd.f32 %v137, %v1220
    %1225 = vst.msk [vmem:[#allocation2] sm:$0xff] %vm129, %v1223
    %1226 = vst.msk [vmem:[#allocation2 + $0x8] sm:$0x1] %vm118, %v1224
    %v1228 = vrot.slane %v285, 1
    %v1229 = vrot.slane %v290, 1
    %v1230 = vsel %vm123, %v1228, %v1229
    %1231 = vrot.lane.b32.xlu0 %v1230, 96
    %v1232 = vpop.permute.xlu0 %1231
    %1233 = vrot.lane.b32.xlu0 %v1229, 96
    %v1234 = vpop.permute.xlu0 %1233
    %v1235 = vsel %vm299, %v1230, 0
    %v1237 = vsel %vm299, %v1229, 0
    %v1239 = vsel %vm299, %v1232, 0
    %v1241 = vsel %vm299, %v1234, 0
    %1243 = vmatprep.subr.mxu0 0.0
    %1244 = vmatpush1.xpose.msra.mxu0 %v1239
    %1245 = vmatprep.subr.mxu0 0.0
    %1246 = vmatpush1.xpose.msra.mxu0 %v1241
    %1247 = vmatprep.subr.mxu0 0.0
    %1248 = vmatpush1.xpose.msra.mxu0 0.0
    %1249 = vmatprep.subr.mxu0 0.0
    %1250 = vmatpush1.xpose.msra.mxu0 0.0
    %1251 = vmatprep.subr.mxu0 0.0
    %1252 = vmatpush1.xpose.msra.mxu0 0.0
    %1253 = vmatprep.subr.mxu0 0.0
    %1254 = vmatpush1.xpose.msra.mxu0 0.0
    %1255 = vmatprep.subr.mxu0 0.0
    %1256 = vmatpush1.xpose.msra.mxu0 0.0
    %1257 = vmatprep.subr.mxu0 0.0
    %1258 = vmatpush1.xpose.msra.mxu0 0.0
    %1259 = vmatprep.subr.mxu0 0.0
    %1260 = vmatpush1.xpose.msra.mxu0 0.0
    %1261 = vmatprep.subr.mxu0 0.0
    %1262 = vmatpush1.xpose.msra.mxu0 0.0
    %1263 = vmatprep.subr.mxu0 0.0
    %1264 = vmatpush1.xpose.msra.mxu0 0.0
    %1265 = vmatprep.subr.mxu0 0.0
    %1266 = vmatpush1.xpose.msra.mxu0 0.0
    %1267 = vmatprep.subr.mxu0 0.0
    %1268 = vmatpush1.xpose.msra.mxu0 0.0
    %1269 = vmatprep.subr.mxu0 0.0
    %1270 = vmatpush1.xpose.msra.mxu0 0.0
    %1271 = vmatprep.subr.mxu0 0.0
    %1272 = vmatpush1.xpose.msra.mxu0 0.0
    %1273 = vmatprep.subr.mxu0 0.0
    %1274 = vmatpush1.xpose.msra.mxu0 0.0
    %1275 = vmatprep.subr.mxu0 0.0
    %1276 = vmatpush1.xpose.msra.mxu0 0.0
    %1277 = vmatprep.subr.mxu0 0.0
    %1278 = vmatpush1.xpose.msra.mxu0 0.0
    %1279 = vmatprep.subr.mxu0 0.0
    %1280 = vmatpush1.xpose.msra.mxu0 0.0
    %1281 = vmatprep.subr.mxu0 0.0
    %1282 = vmatpush1.xpose.msra.mxu0 0.0
    %1283 = vmatprep.subr.mxu0 0.0
    %1284 = vmatpush1.xpose.msra.mxu0 0.0
    %1285 = vmatprep.subr.mxu0 0.0
    %1286 = vmatpush1.xpose.msra.mxu0 0.0
    %1287 = vmatprep.subr.mxu0 0.0
    %1288 = vmatpush1.xpose.msra.mxu0 0.0
    %1289 = vmatprep.subr.mxu0 0.0
    %1290 = vmatpush1.xpose.msra.mxu0 0.0
    %1291 = vmatprep.subr.mxu0 0.0
    %1292 = vmatpush1.xpose.msra.mxu0 0.0
    %1293 = vmatprep.subr.mxu0 0.0
    %1294 = vmatpush1.xpose.msra.mxu0 0.0
    %1295 = vmatprep.subr.mxu0 0.0
    %1296 = vmatpush1.xpose.msra.mxu0 0.0
    %1297 = vmatprep.subr.mxu0 0.0
    %1298 = vmatpush1.xpose.msra.mxu0 0.0
    %1299 = vmatprep.subr.mxu0 0.0
    %1300 = vmatpush1.xpose.msra.mxu0 0.0
    %1301 = vmatprep.subr.mxu0 0.0
    %1302 = vmatpush1.xpose.msra.mxu0 0.0
    %1303 = vmatprep.subr.mxu0 0.0
    %1304 = vmatpush1.xpose.msra.mxu0 0.0
    %1305 = vmatprep.subr.mxu0 0.0
    %1306 = vmatpush1.xpose.msra.mxu0 0.0
    %1307 = vmatprep.mubr.f32.mxu0 0.0
    %1308 = vmatmul.mubr.f32.gmra.mrb[0].mxu0 %v1235
    %v1309 = vpop.f32.mrb[0].mxu0
    %v1310 = vadd.f32 0.0, %v1309
    %v1311 = vpop.f32.mrb[0].mxu0
    %1312 = vmatprep.mubr.f32.mxu0 0.0
    %1313 = vmatmul.mubr.f32.gmra.mrb[0].mxu0 %v1237
    %v1314 = vpop.f32.mrb[0].mxu0
    %v1315 = vadd.f32 0.0, %v1314
    %v1316 = vpop.f32.mrb[0].mxu0
    %1317 = vdwg.mxu0
    %v1318 = vsel %vm383, %v1310, -inf
    %1319 = vmax.xlane.f32.xlu0 %v1318
    %v1320 = vpop.xlane.xlu0 %1319
    %v1321 = vsel %vm387, %v1315, -inf
    %1322 = vmax.xlane.f32.xlu0 %v1321
    %v1323 = vpop.xlane.xlu0 %1322
    %v1324 = vsub.f32 %v1310, %v1320
    %v1325 = vsub.f32 %v1315, %v1323
    %v1326 = vmul.f32 %v1324, 1.442695
    %v1327 = vpow.pop %v1326
    %v1328 = vmul.f32 %v1325, 1.442695
    %v1329 = vpow.pop %v1328
    %v1330 = vsel %vm383, %v1327, 0.0
    %1331 = vadd.xlane.f32.xlu0 %v1330
    %v1332 = vpop.xlane.xlu0 %1331
    %v1333 = vsel %vm387, %v1329, 0.0
    %1334 = vadd.xlane.f32.xlu0 %v1333
    %v1335 = vpop.xlane.xlu0 %1334
    %v1336 = vrcp.pop %v1332
    %v1337 = vrcp.pop %v1335
    %v1338 = vmul.f32 %v1327, %v1336
    %v1339 = vmul.f32 %v1329, %v1337
    %1340 = vrot.lane.b32.xlu0 %v1230, 64
    %v1341 = vpop.permute.xlu0 %1340
    %1342 = vrot.lane.b32.xlu0 %v1229, 64
    %v1343 = vpop.permute.xlu0 %1342
    %v1346 = vsel %vm383, %v1338, 0
    %v1349 = vsel %vm383, %v1339, 0
    %v1351 = vsel %vm418, %v1343, 0
    %1353 = vmatprep.subr.mxu0 0.0
    %1354 = vmatpush1.msra.mxu0 %v1341
    %1355 = vmatprep.subr.mxu0 0.0
    %1356 = vmatpush1.msra.mxu0 %v1351
    %1357 = vmatprep.subr.mxu0 0.0
    %1358 = vmatpush1.msra.mxu0 0.0
    %1359 = vmatprep.subr.mxu0 0.0
    %1360 = vmatpush1.msra.mxu0 0.0
    %1361 = vmatprep.subr.mxu0 0.0
    %1362 = vmatpush1.msra.mxu0 0.0
    %1363 = vmatprep.subr.mxu0 0.0
    %1364 = vmatpush1.msra.mxu0 0.0
    %1365 = vmatprep.subr.mxu0 0.0
    %1366 = vmatpush1.msra.mxu0 0.0
    %1367 = vmatprep.subr.mxu0 0.0
    %1368 = vmatpush1.msra.mxu0 0.0
    %1369 = vmatprep.subr.mxu0 0.0
    %1370 = vmatpush1.msra.mxu0 0.0
    %1371 = vmatprep.subr.mxu0 0.0
    %1372 = vmatpush1.msra.mxu0 0.0
    %1373 = vmatprep.subr.mxu0 0.0
    %1374 = vmatpush1.msra.mxu0 0.0
    %1375 = vmatprep.subr.mxu0 0.0
    %1376 = vmatpush1.msra.mxu0 0.0
    %1377 = vmatprep.subr.mxu0 0.0
    %1378 = vmatpush1.msra.mxu0 0.0
    %1379 = vmatprep.subr.mxu0 0.0
    %1380 = vmatpush1.msra.mxu0 0.0
    %1381 = vmatprep.subr.mxu0 0.0
    %1382 = vmatpush1.msra.mxu0 0.0
    %1383 = vmatprep.subr.mxu0 0.0
    %1384 = vmatpush1.msra.mxu0 0.0
    %1385 = vmatprep.subr.mxu0 0.0
    %1386 = vmatpush1.msra.mxu0 0.0
    %1387 = vmatprep.subr.mxu0 0.0
    %1388 = vmatpush1.msra.mxu0 0.0
    %1389 = vmatprep.subr.mxu0 0.0
    %1390 = vmatpush1.msra.mxu0 0.0
    %1391 = vmatprep.subr.mxu0 0.0
    %1392 = vmatpush1.msra.mxu0 0.0
    %1393 = vmatprep.subr.mxu0 0.0
    %1394 = vmatpush1.msra.mxu0 0.0
    %1395 = vmatprep.subr.mxu0 0.0
    %1396 = vmatpush1.msra.mxu0 0.0
    %1397 = vmatprep.subr.mxu0 0.0
    %1398 = vmatpush1.msra.mxu0 0.0
    %1399 = vmatprep.subr.mxu0 0.0
    %1400 = vmatpush1.msra.mxu0 0.0
    %1401 = vmatprep.subr.mxu0 0.0
    %1402 = vmatpush1.msra.mxu0 0.0
    %1403 = vmatprep.subr.mxu0 0.0
    %1404 = vmatpush1.msra.mxu0 0.0
    %1405 = vmatprep.subr.mxu0 0.0
    %1406 = vmatpush1.msra.mxu0 0.0
    %1407 = vmatprep.subr.mxu0 0.0
    %1408 = vmatpush1.msra.mxu0 0.0
    %1409 = vmatprep.subr.mxu0 0.0
    %1410 = vmatpush1.msra.mxu0 0.0
    %1411 = vmatprep.subr.mxu0 0.0
    %1412 = vmatpush1.msra.mxu0 0.0
    %1413 = vmatprep.subr.mxu0 0.0
    %1414 = vmatpush1.msra.mxu0 0.0
    %1415 = vmatprep.subr.mxu0 0.0
    %1416 = vmatpush1.msra.mxu0 0.0
    %1417 = vmatprep.mubr.f32.mxu0 0.0
    %1418 = vmatmul.mubr.f32.gmra.mrb[0].mxu0 %v1346
    %v1419 = vpop.f32.mrb[0].mxu0
    %v1420 = vadd.f32 0.0, %v1419
    %v1421 = vpop.f32.mrb[0].mxu0
    %1422 = vmatprep.mubr.f32.mxu0 0.0
    %1423 = vmatmul.mubr.f32.gmra.mrb[0].mxu0 %v1349
    %v1424 = vpop.f32.mrb[0].mxu0
    %v1425 = vadd.f32 0.0, %v1424
    %v1426 = vpop.f32.mrb[0].mxu0
    %1427 = vdwg.mxu0
    %1428 = vrot.lane.b32.xlu0 %v1230, 120
    %v1429 = vpop.permute.xlu0 %1428
    %1430 = vrot.lane.b32.xlu0 %v1229, 120
    %v1431 = vpop.permute.xlu0 %1430
    %1432 = vrot.lane.b32.xlu0 %v1230, 88
    %v1433 = vpop.permute.xlu0 %1432
    %1434 = vrot.lane.b32.xlu0 %v1229, 88
    %v1435 = vpop.permute.xlu0 %1434
    %v1436 = vsel %vm299, %v1429, 0
    %v1438 = vsel %vm299, %v1431, 0
    %v1440 = vsel %vm299, %v1433, 0
    %v1442 = vsel %vm299, %v1435, 0
    %1444 = vmatprep.subr.mxu0 0.0
    %1445 = vmatpush1.xpose.msra.mxu0 %v1440
    %1446 = vmatprep.subr.mxu0 0.0
    %1447 = vmatpush1.xpose.msra.mxu0 %v1442
    %1448 = vmatprep.subr.mxu0 0.0
    %1449 = vmatpush1.xpose.msra.mxu0 0.0
    %1450 = vmatprep.subr.mxu0 0.0
    %1451 = vmatpush1.xpose.msra.mxu0 0.0
    %1452 = vmatprep.subr.mxu0 0.0
    %1453 = vmatpush1.xpose.msra.mxu0 0.0
    %1454 = vmatprep.subr.mxu0 0.0
    %1455 = vmatpush1.xpose.msra.mxu0 0.0
    %1456 = vmatprep.subr.mxu0 0.0
    %1457 = vmatpush1.xpose.msra.mxu0 0.0
    %1458 = vmatprep.subr.mxu0 0.0
    %1459 = vmatpush1.xpose.msra.mxu0 0.0
    %1460 = vmatprep.subr.mxu0 0.0
    %1461 = vmatpush1.xpose.msra.mxu0 0.0
    %1462 = vmatprep.subr.mxu0 0.0
    %1463 = vmatpush1.xpose.msra.mxu0 0.0
    %1464 = vmatprep.subr.mxu0 0.0
    %1465 = vmatpush1.xpose.msra.mxu0 0.0
    %1466 = vmatprep.subr.mxu0 0.0
    %1467 = vmatpush1.xpose.msra.mxu0 0.0
    %1468 = vmatprep.subr.mxu0 0.0
    %1469 = vmatpush1.xpose.msra.mxu0 0.0
    %1470 = vmatprep.subr.mxu0 0.0
    %1471 = vmatpush1.xpose.msra.mxu0 0.0
    %1472 = vmatprep.subr.mxu0 0.0
    %1473 = vmatpush1.xpose.msra.mxu0 0.0
    %1474 = vmatprep.subr.mxu0 0.0
    %1475 = vmatpush1.xpose.msra.mxu0 0.0
    %1476 = vmatprep.subr.mxu0 0.0
    %1477 = vmatpush1.xpose.msra.mxu0 0.0
    %1478 = vmatprep.subr.mxu0 0.0
    %1479 = vmatpush1.xpose.msra.mxu0 0.0
    %1480 = vmatprep.subr.mxu0 0.0
    %1481 = vmatpush1.xpose.msra.mxu0 0.0
    %1482 = vmatprep.subr.mxu0 0.0
    %1483 = vmatpush1.xpose.msra.mxu0 0.0
    %1484 = vmatprep.subr.mxu0 0.0
    %1485 = vmatpush1.xpose.msra.mxu0 0.0
    %1486 = vmatprep.subr.mxu0 0.0
    %1487 = vmatpush1.xpose.msra.mxu0 0.0
    %1488 = vmatprep.subr.mxu0 0.0
    %1489 = vmatpush1.xpose.msra.mxu0 0.0
    %1490 = vmatprep.subr.mxu0 0.0
    %1491 = vmatpush1.xpose.msra.mxu0 0.0
    %1492 = vmatprep.subr.mxu0 0.0
    %1493 = vmatpush1.xpose.msra.mxu0 0.0
    %1494 = vmatprep.subr.mxu0 0.0
    %1495 = vmatpush1.xpose.msra.mxu0 0.0
    %1496 = vmatprep.subr.mxu0 0.0
    %1497 = vmatpush1.xpose.msra.mxu0 0.0
    %1498 = vmatprep.subr.mxu0 0.0
    %1499 = vmatpush1.xpose.msra.mxu0 0.0
    %1500 = vmatprep.subr.mxu0 0.0
    %1501 = vmatpush1.xpose.msra.mxu0 0.0
    %1502 = vmatprep.subr.mxu0 0.0
    %1503 = vmatpush1.xpose.msra.mxu0 0.0
    %1504 = vmatprep.subr.mxu0 0.0
    %1505 = vmatpush1.xpose.msra.mxu0 0.0
    %1506 = vmatprep.subr.mxu0 0.0
    %1507 = vmatpush1.xpose.msra.mxu0 0.0
    %1508 = vmatprep.mubr.f32.mxu0 0.0
    %1509 = vmatmul.mubr.f32.gmra.mrb[0].mxu0 %v1436
    %v1510 = vpop.f32.mrb[0].mxu0
    %v1511 = vadd.f32 0.0, %v1510
    %v1512 = vpop.f32.mrb[0].mxu0
    %1513 = vmatprep.mubr.f32.mxu0 0.0
    %1514 = vmatmul.mubr.f32.gmra.mrb[0].mxu0 %v1438
    %v1515 = vpop.f32.mrb[0].mxu0
    %v1516 = vadd.f32 0.0, %v1515
    %v1517 = vpop.f32.mrb[0].mxu0
    %1518 = vdwg.mxu0
    %v1519 = vsel %vm383, %v1511, -inf
    %1520 = vmax.xlane.f32.xlu0 %v1519
    %v1521 = vpop.xlane.xlu0 %1520
    %v1522 = vsel %vm387, %v1516, -inf
    %1523 = vmax.xlane.f32.xlu0 %v1522
    %v1524 = vpop.xlane.xlu0 %1523
    %v1525 = vsub.f32 %v1511, %v1521
    %v1526 = vsub.f32 %v1516, %v1524
    %v1527 = vmul.f32 %v1525, 1.442695
    %v1528 = vpow.pop %v1527
    %v1529 = vmul.f32 %v1526, 1.442695
    %v1530 = vpow.pop %v1529
    %v1531 = vsel %vm383, %v1528, 0.0
    %1532 = vadd.xlane.f32.xlu0 %v1531
    %v1533 = vpop.xlane.xlu0 %1532
    %v1534 = vsel %vm387, %v1530, 0.0
    %1535 = vadd.xlane.f32.xlu0 %v1534
    %v1536 = vpop.xlane.xlu0 %1535
    %v1537 = vrcp.pop %v1533
    %v1538 = vrcp.pop %v1536
    %v1539 = vmul.f32 %v1528, %v1537
    %v1540 = vmul.f32 %v1530, %v1538
    %1541 = vrot.lane.b32.xlu0 %v1230, 56
    %v1542 = vpop.permute.xlu0 %1541
    %1543 = vrot.lane.b32.xlu0 %v1229, 56
    %v1544 = vpop.permute.xlu0 %1543
    %v1547 = vsel %vm383, %v1539, 0
    %v1550 = vsel %vm383, %v1540, 0
    %v1552 = vsel %vm418, %v1544, 0
    %1554 = vmatprep.subr.mxu0 0.0
    %1555 = vmatpush1.msra.mxu0 %v1542
    %1556 = vmatprep.subr.mxu0 0.0
    %1557 = vmatpush1.msra.mxu0 %v1552
    %1558 = vmatprep.subr.mxu0 0.0
    %1559 = vmatpush1.msra.mxu0 0.0
    %1560 = vmatprep.subr.mxu0 0.0
    %1561 = vmatpush1.msra.mxu0 0.0
    %1562 = vmatprep.subr.mxu0 0.0
    %1563 = vmatpush1.msra.mxu0 0.0
    %1564 = vmatprep.subr.mxu0 0.0
    %1565 = vmatpush1.msra.mxu0 0.0
    %1566 = vmatprep.subr.mxu0 0.0
    %1567 = vmatpush1.msra.mxu0 0.0
    %1568 = vmatprep.subr.mxu0 0.0
    %1569 = vmatpush1.msra.mxu0 0.0
    %1570 = vmatprep.subr.mxu0 0.0
    %1571 = vmatpush1.msra.mxu0 0.0
    %1572 = vmatprep.subr.mxu0 0.0
    %1573 = vmatpush1.msra.mxu0 0.0
    %1574 = vmatprep.subr.mxu0 0.0
    %1575 = vmatpush1.msra.mxu0 0.0
    %1576 = vmatprep.subr.mxu0 0.0
    %1577 = vmatpush1.msra.mxu0 0.0
    %1578 = vmatprep.subr.mxu0 0.0
    %1579 = vmatpush1.msra.mxu0 0.0
    %1580 = vmatprep.subr.mxu0 0.0
    %1581 = vmatpush1.msra.mxu0 0.0
    %1582 = vmatprep.subr.mxu0 0.0
    %1583 = vmatpush1.msra.mxu0 0.0
    %1584 = vmatprep.subr.mxu0 0.0
    %1585 = vmatpush1.msra.mxu0 0.0
    %1586 = vmatprep.subr.mxu0 0.0
    %1587 = vmatpush1.msra.mxu0 0.0
    %1588 = vmatprep.subr.mxu0 0.0
    %1589 = vmatpush1.msra.mxu0 0.0
    %1590 = vmatprep.subr.mxu0 0.0
    %1591 = vmatpush1.msra.mxu0 0.0
    %1592 = vmatprep.subr.mxu0 0.0
    %1593 = vmatpush1.msra.mxu0 0.0
    %1594 = vmatprep.subr.mxu0 0.0
    %1595 = vmatpush1.msra.mxu0 0.0
    %1596 = vmatprep.subr.mxu0 0.0
    %1597 = vmatpush1.msra.mxu0 0.0
    %1598 = vmatprep.subr.mxu0 0.0
    %1599 = vmatpush1.msra.mxu0 0.0
    %1600 = vmatprep.subr.mxu0 0.0
    %1601 = vmatpush1.msra.mxu0 0.0
    %1602 = vmatprep.subr.mxu0 0.0
    %1603 = vmatpush1.msra.mxu0 0.0
    %1604 = vmatprep.subr.mxu0 0.0
    %1605 = vmatpush1.msra.mxu0 0.0
    %1606 = vmatprep.subr.mxu0 0.0
    %1607 = vmatpush1.msra.mxu0 0.0
    %1608 = vmatprep.subr.mxu0 0.0
    %1609 = vmatpush1.msra.mxu0 0.0
    %1610 = vmatprep.subr.mxu0 0.0
    %1611 = vmatpush1.msra.mxu0 0.0
    %1612 = vmatprep.subr.mxu0 0.0
    %1613 = vmatpush1.msra.mxu0 0.0
    %1614 = vmatprep.subr.mxu0 0.0
    %1615 = vmatpush1.msra.mxu0 0.0
    %1616 = vmatprep.subr.mxu0 0.0
    %1617 = vmatpush1.msra.mxu0 0.0
    %1618 = vmatprep.mubr.f32.mxu0 0.0
    %1619 = vmatmul.mubr.f32.gmra.mrb[0].mxu0 %v1547
    %v1620 = vpop.f32.mrb[0].mxu0
    %v1621 = vadd.f32 0.0, %v1620
    %v1622 = vpop.f32.mrb[0].mxu0
    %1623 = vmatprep.mubr.f32.mxu0 0.0
    %1624 = vmatmul.mubr.f32.gmra.mrb[0].mxu0 %v1550
    %v1625 = vpop.f32.mrb[0].mxu0
    %v1626 = vadd.f32 0.0, %v1625
    %v1627 = vpop.f32.mrb[0].mxu0
    %1628 = vdwg.mxu0
    %1629 = vrot.lane.b32.xlu0 %v1230, 112
    %v1630 = vpop.permute.xlu0 %1629
    %1631 = vrot.lane.b32.xlu0 %v1229, 112
    %v1632 = vpop.permute.xlu0 %1631
    %1633 = vrot.lane.b32.xlu0 %v1230, 80
    %v1634 = vpop.permute.xlu0 %1633
    %1635 = vrot.lane.b32.xlu0 %v1229, 80
    %v1636 = vpop.permute.xlu0 %1635
    %v1637 = vsel %vm299, %v1630, 0
    %v1639 = vsel %vm299, %v1632, 0
    %v1641 = vsel %vm299, %v1634, 0
    %v1643 = vsel %vm299, %v1636, 0
    %1645 = vmatprep.subr.mxu0 0.0
    %1646 = vmatpush1.xpose.msra.mxu0 %v1641
    %1647 = vmatprep.subr.mxu0 0.0
    %1648 = vmatpush1.xpose.msra.mxu0 %v1643
    %1649 = vmatprep.subr.mxu0 0.0
    %1650 = vmatpush1.xpose.msra.mxu0 0.0
    %1651 = vmatprep.subr.mxu0 0.0
    %1652 = vmatpush1.xpose.msra.mxu0 0.0
    %1653 = vmatprep.subr.mxu0 0.0
    %1654 = vmatpush1.xpose.msra.mxu0 0.0
    %1655 = vmatprep.subr.mxu0 0.0
    %1656 = vmatpush1.xpose.msra.mxu0 0.0
    %1657 = vmatprep.subr.mxu0 0.0
    %1658 = vmatpush1.xpose.msra.mxu0 0.0
    %1659 = vmatprep.subr.mxu0 0.0
    %1660 = vmatpush1.xpose.msra.mxu0 0.0
    %1661 = vmatprep.subr.mxu0 0.0
    %1662 = vmatpush1.xpose.msra.mxu0 0.0
    %1663 = vmatprep.subr.mxu0 0.0
    %1664 = vmatpush1.xpose.msra.mxu0 0.0
    %1665 = vmatprep.subr.mxu0 0.0
    %1666 = vmatpush1.xpose.msra.mxu0 0.0
    %1667 = vmatprep.subr.mxu0 0.0
    %1668 = vmatpush1.xpose.msra.mxu0 0.0
    %1669 = vmatprep.subr.mxu0 0.0
    %1670 = vmatpush1.xpose.msra.mxu0 0.0
    %1671 = vmatprep.subr.mxu0 0.0
    %1672 = vmatpush1.xpose.msra.mxu0 0.0
    %1673 = vmatprep.subr.mxu0 0.0
    %1674 = vmatpush1.xpose.msra.mxu0 0.0
    %1675 = vmatprep.subr.mxu0 0.0
    %1676 = vmatpush1.xpose.msra.mxu0 0.0
    %1677 = vmatprep.subr.mxu0 0.0
    %1678 = vmatpush1.xpose.msra.mxu0 0.0
    %1679 = vmatprep.subr.mxu0 0.0
    %1680 = vmatpush1.xpose.msra.mxu0 0.0
    %1681 = vmatprep.subr.mxu0 0.0
    %1682 = vmatpush1.xpose.msra.mxu0 0.0
    %1683 = vmatprep.subr.mxu0 0.0
    %1684 = vmatpush1.xpose.msra.mxu0 0.0
    %1685 = vmatprep.subr.mxu0 0.0
    %1686 = vmatpush1.xpose.msra.mxu0 0.0
    %1687 = vmatprep.subr.mxu0 0.0
    %1688 = vmatpush1.xpose.msra.mxu0 0.0
    %1689 = vmatprep.subr.mxu0 0.0
    %1690 = vmatpush1.xpose.msra.mxu0 0.0
    %1691 = vmatprep.subr.mxu0 0.0
    %1692 = vmatpush1.xpose.msra.mxu0 0.0
    %1693 = vmatprep.subr.mxu0 0.0
    %1694 = vmatpush1.xpose.msra.mxu0 0.0
    %1695 = vmatprep.subr.mxu0 0.0
    %1696 = vmatpush1.xpose.msra.mxu0 0.0
    %1697 = vmatprep.subr.mxu0 0.0
    %1698 = vmatpush1.xpose.msra.mxu0 0.0
    %1699 = vmatprep.subr.mxu0 0.0
    %1700 = vmatpush1.xpose.msra.mxu0 0.0
    %1701 = vmatprep.subr.mxu0 0.0
    %1702 = vmatpush1.xpose.msra.mxu0 0.0
    %1703 = vmatprep.subr.mxu0 0.0
    %1704 = vmatpush1.xpose.msra.mxu0 0.0
    %1705 = vmatprep.subr.mxu0 0.0
    %1706 = vmatpush1.xpose.msra.mxu0 0.0
    %1707 = vmatprep.subr.mxu0 0.0
    %1708 = vmatpush1.xpose.msra.mxu0 0.0
    %1709 = vmatprep.mubr.f32.mxu0 0.0
    %1710 = vmatmul.mubr.f32.gmra.mrb[0].mxu0 %v1637
    %v1711 = vpop.f32.mrb[0].mxu0
    %v1712 = vadd.f32 0.0, %v1711
    %v1713 = vpop.f32.mrb[0].mxu0
    %1714 = vmatprep.mubr.f32.mxu0 0.0
    %1715 = vmatmul.mubr.f32.gmra.mrb[0].mxu0 %v1639
    %v1716 = vpop.f32.mrb[0].mxu0
    %v1717 = vadd.f32 0.0, %v1716
    %v1718 = vpop.f32.mrb[0].mxu0
    %1719 = vdwg.mxu0
    %v1720 = vsel %vm383, %v1712, -inf
    %1721 = vmax.xlane.f32.xlu0 %v1720
    %v1722 = vpop.xlane.xlu0 %1721
    %v1723 = vsel %vm387, %v1717, -inf
    %1724 = vmax.xlane.f32.xlu0 %v1723
    %v1725 = vpop.xlane.xlu0 %1724
    %v1726 = vsub.f32 %v1712, %v1722
    %v1727 = vsub.f32 %v1717, %v1725
    %v1728 = vmul.f32 %v1726, 1.442695
    %v1729 = vpow.pop %v1728
    %v1730 = vmul.f32 %v1727, 1.442695
    %v1731 = vpow.pop %v1730
    %v1732 = vsel %vm383, %v1729, 0.0
    %1733 = vadd.xlane.f32.xlu0 %v1732
    %v1734 = vpop.xlane.xlu0 %1733
    %v1735 = vsel %vm387, %v1731, 0.0
    %1736 = vadd.xlane.f32.xlu0 %v1735
    %v1737 = vpop.xlane.xlu0 %1736
    %v1738 = vrcp.pop %v1734
    %v1739 = vrcp.pop %v1737
    %v1740 = vmul.f32 %v1729, %v1738
    %v1741 = vmul.f32 %v1731, %v1739
    %1742 = vrot.lane.b32.xlu0 %v1230, 48
    %v1743 = vpop.permute.xlu0 %1742
    %1744 = vrot.lane.b32.xlu0 %v1229, 48
    %v1745 = vpop.permute.xlu0 %1744
    %v1748 = vsel %vm383, %v1740, 0
    %v1751 = vsel %vm383, %v1741, 0
    %v1753 = vsel %vm418, %v1745, 0
    %1755 = vmatprep.subr.mxu0 0.0
    %1756 = vmatpush1.msra.mxu0 %v1743
    %1757 = vmatprep.subr.mxu0 0.0
    %1758 = vmatpush1.msra.mxu0 %v1753
    %1759 = vmatprep.subr.mxu0 0.0
    %1760 = vmatpush1.msra.mxu0 0.0
    %1761 = vmatprep.subr.mxu0 0.0
    %1762 = vmatpush1.msra.mxu0 0.0
    %1763 = vmatprep.subr.mxu0 0.0
    %1764 = vmatpush1.msra.mxu0 0.0
    %1765 = vmatprep.subr.mxu0 0.0
    %1766 = vmatpush1.msra.mxu0 0.0
    %1767 = vmatprep.subr.mxu0 0.0
    %1768 = vmatpush1.msra.mxu0 0.0
    %1769 = vmatprep.subr.mxu0 0.0
    %1770 = vmatpush1.msra.mxu0 0.0
    %1771 = vmatprep.subr.mxu0 0.0
    %1772 = vmatpush1.msra.mxu0 0.0
    %1773 = vmatprep.subr.mxu0 0.0
    %1774 = vmatpush1.msra.mxu0 0.0
    %1775 = vmatprep.subr.mxu0 0.0
    %1776 = vmatpush1.msra.mxu0 0.0
    %1777 = vmatprep.subr.mxu0 0.0
    %1778 = vmatpush1.msra.mxu0 0.0
    %1779 = vmatprep.subr.mxu0 0.0
    %1780 = vmatpush1.msra.mxu0 0.0
    %1781 = vmatprep.subr.mxu0 0.0
    %1782 = vmatpush1.msra.mxu0 0.0
    %1783 = vmatprep.subr.mxu0 0.0
    %1784 = vmatpush1.msra.mxu0 0.0
    %1785 = vmatprep.subr.mxu0 0.0
    %1786 = vmatpush1.msra.mxu0 0.0
    %1787 = vmatprep.subr.mxu0 0.0
    %1788 = vmatpush1.msra.mxu0 0.0
    %1789 = vmatprep.subr.mxu0 0.0
    %1790 = vmatpush1.msra.mxu0 0.0
    %1791 = vmatprep.subr.mxu0 0.0
    %1792 = vmatpush1.msra.mxu0 0.0
    %1793 = vmatprep.subr.mxu0 0.0
    %1794 = vmatpush1.msra.mxu0 0.0
    %1795 = vmatprep.subr.mxu0 0.0
    %1796 = vmatpush1.msra.mxu0 0.0
    %1797 = vmatprep.subr.mxu0 0.0
    %1798 = vmatpush1.msra.mxu0 0.0
    %1799 = vmatprep.subr.mxu0 0.0
    %1800 = vmatpush1.msra.mxu0 0.0
    %1801 = vmatprep.subr.mxu0 0.0
    %1802 = vmatpush1.msra.mxu0 0.0
    %1803 = vmatprep.subr.mxu0 0.0
    %1804 = vmatpush1.msra.mxu0 0.0
    %1805 = vmatprep.subr.mxu0 0.0
    %1806 = vmatpush1.msra.mxu0 0.0
    %1807 = vmatprep.subr.mxu0 0.0
    %1808 = vmatpush1.msra.mxu0 0.0
    %1809 = vmatprep.subr.mxu0 0.0
    %1810 = vmatpush1.msra.mxu0 0.0
    %1811 = vmatprep.subr.mxu0 0.0
    %1812 = vmatpush1.msra.mxu0 0.0
    %1813 = vmatprep.subr.mxu0 0.0
    %1814 = vmatpush1.msra.mxu0 0.0
    %1815 = vmatprep.subr.mxu0 0.0
    %1816 = vmatpush1.msra.mxu0 0.0
    %1817 = vmatprep.subr.mxu0 0.0
    %1818 = vmatpush1.msra.mxu0 0.0
    %1819 = vmatprep.mubr.f32.mxu0 0.0
    %1820 = vmatmul.mubr.f32.gmra.mrb[0].mxu0 %v1748
    %v1821 = vpop.f32.mrb[0].mxu0
    %v1822 = vadd.f32 0.0, %v1821
    %v1823 = vpop.f32.mrb[0].mxu0
    %1824 = vmatprep.mubr.f32.mxu0 0.0
    %1825 = vmatmul.mubr.f32.gmra.mrb[0].mxu0 %v1751
    %v1826 = vpop.f32.mrb[0].mxu0
    %v1827 = vadd.f32 0.0, %v1826
    %v1828 = vpop.f32.mrb[0].mxu0
    %1829 = vdwg.mxu0
    %1830 = vrot.lane.b32.xlu0 %v1230, 104
    %v1831 = vpop.permute.xlu0 %1830
    %1832 = vrot.lane.b32.xlu0 %v1229, 104
    %v1833 = vpop.permute.xlu0 %1832
    %1834 = vrot.lane.b32.xlu0 %v1230, 72
    %v1835 = vpop.permute.xlu0 %1834
    %1836 = vrot.lane.b32.xlu0 %v1229, 72
    %v1837 = vpop.permute.xlu0 %1836
    %v1838 = vsel %vm299, %v1831, 0
    %v1840 = vsel %vm299, %v1833, 0
    %v1842 = vsel %vm299, %v1835, 0
    %v1844 = vsel %vm299, %v1837, 0
    %1846 = vmatprep.subr.mxu0 0.0
    %1847 = vmatpush1.xpose.msra.mxu0 %v1842
    %1848 = vmatprep.subr.mxu0 0.0
    %1849 = vmatpush1.xpose.msra.mxu0 %v1844
    %1850 = vmatprep.subr.mxu0 0.0
    %1851 = vmatpush1.xpose.msra.mxu0 0.0
    %1852 = vmatprep.subr.mxu0 0.0
    %1853 = vmatpush1.xpose.msra.mxu0 0.0
    %1854 = vmatprep.subr.mxu0 0.0
    %1855 = vmatpush1.xpose.msra.mxu0 0.0
    %1856 = vmatprep.subr.mxu0 0.0
    %1857 = vmatpush1.xpose.msra.mxu0 0.0
    %1858 = vmatprep.subr.mxu0 0.0
    %1859 = vmatpush1.xpose.msra.mxu0 0.0
    %1860 = vmatprep.subr.mxu0 0.0
    %1861 = vmatpush1.xpose.msra.mxu0 0.0
    %1862 = vmatprep.subr.mxu0 0.0
    %1863 = vmatpush1.xpose.msra.mxu0 0.0
    %1864 = vmatprep.subr.mxu0 0.0
    %1865 = vmatpush1.xpose.msra.mxu0 0.0
    %1866 = vmatprep.subr.mxu0 0.0
    %1867 = vmatpush1.xpose.msra.mxu0 0.0
    %1868 = vmatprep.subr.mxu0 0.0
    %1869 = vmatpush1.xpose.msra.mxu0 0.0
    %1870 = vmatprep.subr.mxu0 0.0
    %1871 = vmatpush1.xpose.msra.mxu0 0.0
    %1872 = vmatprep.subr.mxu0 0.0
    %1873 = vmatpush1.xpose.msra.mxu0 0.0
    %1874 = vmatprep.subr.mxu0 0.0
    %1875 = vmatpush1.xpose.msra.mxu0 0.0
    %1876 = vmatprep.subr.mxu0 0.0
    %1877 = vmatpush1.xpose.msra.mxu0 0.0
    %1878 = vmatprep.subr.mxu0 0.0
    %1879 = vmatpush1.xpose.msra.mxu0 0.0
    %1880 = vmatprep.subr.mxu0 0.0
    %1881 = vmatpush1.xpose.msra.mxu0 0.0
    %1882 = vmatprep.subr.mxu0 0.0
    %1883 = vmatpush1.xpose.msra.mxu0 0.0
    %1884 = vmatprep.subr.mxu0 0.0
    %1885 = vmatpush1.xpose.msra.mxu0 0.0
    %1886 = vmatprep.subr.mxu0 0.0
    %1887 = vmatpush1.xpose.msra.mxu0 0.0
    %1888 = vmatprep.subr.mxu0 0.0
    %1889 = vmatpush1.xpose.msra.mxu0 0.0
    %1890 = vmatprep.subr.mxu0 0.0
    %1891 = vmatpush1.xpose.msra.mxu0 0.0
    %1892 = vmatprep.subr.mxu0 0.0
    %1893 = vmatpush1.xpose.msra.mxu0 0.0
    %1894 = vmatprep.subr.mxu0 0.0
    %1895 = vmatpush1.xpose.msra.mxu0 0.0
    %1896 = vmatprep.subr.mxu0 0.0
    %1897 = vmatpush1.xpose.msra.mxu0 0.0
    %1898 = vmatprep.subr.mxu0 0.0
    %1899 = vmatpush1.xpose.msra.mxu0 0.0
    %1900 = vmatprep.subr.mxu0 0.0
    %1901 = vmatpush1.xpose.msra.mxu0 0.0
    %1902 = vmatprep.subr.mxu0 0.0
    %1903 = vmatpush1.xpose.msra.mxu0 0.0
    %1904 = vmatprep.subr.mxu0 0.0
    %1905 = vmatpush1.xpose.msra.mxu0 0.0
    %1906 = vmatprep.subr.mxu0 0.0
    %1907 = vmatpush1.xpose.msra.mxu0 0.0
    %1908 = vmatprep.subr.mxu0 0.0
    %1909 = vmatpush1.xpose.msra.mxu0 0.0
    %1910 = vmatprep.mubr.f32.mxu0 0.0
    %1911 = vmatmul.mubr.f32.gmra.mrb[0].mxu0 %v1838
    %v1912 = vpop.f32.mrb[0].mxu0
    %v1913 = vadd.f32 0.0, %v1912
    %v1914 = vpop.f32.mrb[0].mxu0
    %1915 = vmatprep.mubr.f32.mxu0 0.0
    %1916 = vmatmul.mubr.f32.gmra.mrb[0].mxu0 %v1840
    %v1917 = vpop.f32.mrb[0].mxu0
    %v1918 = vadd.f32 0.0, %v1917
    %v1919 = vpop.f32.mrb[0].mxu0
    %1920 = vdwg.mxu0
    %v1921 = vsel %vm383, %v1913, -inf
    %1922 = vmax.xlane.f32.xlu0 %v1921
    %v1923 = vpop.xlane.xlu0 %1922
    %v1924 = vsel %vm387, %v1918, -inf
    %1925 = vmax.xlane.f32.xlu0 %v1924
    %v1926 = vpop.xlane.xlu0 %1925
    %v1927 = vsub.f32 %v1913, %v1923
    %v1928 = vsub.f32 %v1918, %v1926
    %v1929 = vmul.f32 %v1927, 1.442695
    %v1930 = vpow.pop %v1929
    %v1931 = vmul.f32 %v1928, 1.442695
    %v1932 = vpow.pop %v1931
    %v1933 = vsel %vm383, %v1930, 0.0
    %1934 = vadd.xlane.f32.xlu0 %v1933
    %v1935 = vpop.xlane.xlu0 %1934
    %v1936 = vsel %vm387, %v1932, 0.0
    %1937 = vadd.xlane.f32.xlu0 %v1936
    %v1938 = vpop.xlane.xlu0 %1937
    %v1939 = vrcp.pop %v1935
    %v1940 = vrcp.pop %v1938
    %v1941 = vmul.f32 %v1930, %v1939
    %v1942 = vmul.f32 %v1932, %v1940
    %1943 = vrot.lane.b32.xlu0 %v1230, 40
    %v1944 = vpop.permute.xlu0 %1943
    %1945 = vrot.lane.b32.xlu0 %v1229, 40
    %v1946 = vpop.permute.xlu0 %1945
    %v1949 = vsel %vm383, %v1941, 0
    %v1952 = vsel %vm383, %v1942, 0
    %v1954 = vsel %vm418, %v1946, 0
    %1956 = vmatprep.subr.mxu0 0.0
    %1957 = vmatpush1.msra.mxu0 %v1944
    %1958 = vmatprep.subr.mxu0 0.0
    %1959 = vmatpush1.msra.mxu0 %v1954
    %1960 = vmatprep.subr.mxu0 0.0
    %1961 = vmatpush1.msra.mxu0 0.0
    %1962 = vmatprep.subr.mxu0 0.0
    %1963 = vmatpush1.msra.mxu0 0.0
    %1964 = vmatprep.subr.mxu0 0.0
    %1965 = vmatpush1.msra.mxu0 0.0
    %1966 = vmatprep.subr.mxu0 0.0
    %1967 = vmatpush1.msra.mxu0 0.0
    %1968 = vmatprep.subr.mxu0 0.0
    %1969 = vmatpush1.msra.mxu0 0.0
    %1970 = vmatprep.subr.mxu0 0.0
    %1971 = vmatpush1.msra.mxu0 0.0
    %1972 = vmatprep.subr.mxu0 0.0
    %1973 = vmatpush1.msra.mxu0 0.0
    %1974 = vmatprep.subr.mxu0 0.0
    %1975 = vmatpush1.msra.mxu0 0.0
    %1976 = vmatprep.subr.mxu0 0.0
    %1977 = vmatpush1.msra.mxu0 0.0
    %1978 = vmatprep.subr.mxu0 0.0
    %1979 = vmatpush1.msra.mxu0 0.0
    %1980 = vmatprep.subr.mxu0 0.0
    %1981 = vmatpush1.msra.mxu0 0.0
    %1982 = vmatprep.subr.mxu0 0.0
    %1983 = vmatpush1.msra.mxu0 0.0
    %1984 = vmatprep.subr.mxu0 0.0
    %1985 = vmatpush1.msra.mxu0 0.0
    %1986 = vmatprep.subr.mxu0 0.0
    %1987 = vmatpush1.msra.mxu0 0.0
    %1988 = vmatprep.subr.mxu0 0.0
    %1989 = vmatpush1.msra.mxu0 0.0
    %1990 = vmatprep.subr.mxu0 0.0
    %1991 = vmatpush1.msra.mxu0 0.0
    %1992 = vmatprep.subr.mxu0 0.0
    %1993 = vmatpush1.msra.mxu0 0.0
    %1994 = vmatprep.subr.mxu0 0.0
    %1995 = vmatpush1.msra.mxu0 0.0
    %1996 = vmatprep.subr.mxu0 0.0
    %1997 = vmatpush1.msra.mxu0 0.0
    %1998 = vmatprep.subr.mxu0 0.0
    %1999 = vmatpush1.msra.mxu0 0.0
    %2000 = vmatprep.subr.mxu0 0.0
    %2001 = vmatpush1.msra.mxu0 0.0
    %2002 = vmatprep.subr.mxu0 0.0
    %2003 = vmatpush1.msra.mxu0 0.0
    %2004 = vmatprep.subr.mxu0 0.0
    %2005 = vmatpush1.msra.mxu0 0.0
    %2006 = vmatprep.subr.mxu0 0.0
    %2007 = vmatpush1.msra.mxu0 0.0
    %2008 = vmatprep.subr.mxu0 0.0
    %2009 = vmatpush1.msra.mxu0 0.0
    %2010 = vmatprep.subr.mxu0 0.0
    %2011 = vmatpush1.msra.mxu0 0.0
    %2012 = vmatprep.subr.mxu0 0.0
    %2013 = vmatpush1.msra.mxu0 0.0
    %2014 = vmatprep.subr.mxu0 0.0
    %2015 = vmatpush1.msra.mxu0 0.0
    %2016 = vmatprep.subr.mxu0 0.0
    %2017 = vmatpush1.msra.mxu0 0.0
    %2018 = vmatprep.subr.mxu0 0.0
    %2019 = vmatpush1.msra.mxu0 0.0
    %2020 = vmatprep.mubr.f32.mxu0 0.0
    %2021 = vmatmul.mubr.f32.gmra.mrb[0].mxu0 %v1949
    %v2022 = vpop.f32.mrb[0].mxu0
    %v2023 = vadd.f32 0.0, %v2022
    %v2024 = vpop.f32.mrb[0].mxu0
    %2025 = vmatprep.mubr.f32.mxu0 0.0
    %2026 = vmatmul.mubr.f32.gmra.mrb[0].mxu0 %v1952
    %v2027 = vpop.f32.mrb[0].mxu0
    %v2028 = vadd.f32 0.0, %v2027
    %v2029 = vpop.f32.mrb[0].mxu0
    %2030 = vdwg.mxu0
    %2033 = vrot.lane.b32.xlu0 %v1621, 8
    %v2034 = vpop.permute.xlu0 %2033
    %2035 = vrot.lane.b32.xlu0 %v1626, 8
    %v2036 = vpop.permute.xlu0 %2035
    %2041 = vrot.lane.b32.xlu0 %v1822, 16
    %v2042 = vpop.permute.xlu0 %2041
    %2043 = vrot.lane.b32.xlu0 %v1827, 16
    %v2044 = vpop.permute.xlu0 %2043
    %2049 = vrot.lane.b32.xlu0 %v2023, 24
    %v2050 = vpop.permute.xlu0 %2049
    %2051 = vrot.lane.b32.xlu0 %v2028, 24
    %v2052 = vpop.permute.xlu0 %2051
    %v2055 = vsel %vm299, %v1420, %v2034
    %v2056 = vsel %vm299, %v1425, %v2036
    %v2057 = vsel %vm1125, %v2055, %v2042
    %v2058 = vsel %vm1125, %v2056, %v2044
    %v2059 = vsel %vm1128, %v2057, %v2050
    %v2060 = vsel %vm1128, %v2058, %v2052
    %v2061 = vld [vmem:[%s6] sm:$0xff]
    %v2062 = vld [vmem:[%s6 + $0x8] sm:$0xff]
    %v2063 = vld [vmem:[%s6 + $0x10] sm:$0xff]
    %v2064 = vld [vmem:[%s6 + $0x18] sm:$0xff]
    %v2065 = vld [vmem:[%s7] sm:$0x1]
    %v2067 = vlaneseq
    %v2068 = vshrl.u32 %v2067, 7
    %v2069 = vsub.s32 0, %v2068
    %v2070 = vrot.slane %v2065, %v2069
    %v2073 = vsel %vm129, %v2059, 0
    %v2076 = vsel %vm129, %v2060, 0
    %2078 = vmatprep.subr.mxu0 0.0
    %2079 = vmatpush1.msra.mxu0 %v2061
    %2080 = vmatprep.subr.mxu0 0.0
    %2081 = vmatpush1.msra.mxu0 %v2062
    %2082 = vmatprep.subr.mxu0 0.0
    %2083 = vmatpush1.msra.mxu0 %v2063
    %2084 = vmatprep.subr.mxu0 0.0
    %2085 = vmatpush1.msra.mxu0 %v2064
    %2086 = vmatprep.subr.mxu0 0.0
    %2087 = vmatpush1.msra.mxu0 0.0
    %2088 = vmatprep.subr.mxu0 0.0
    %2089 = vmatpush1.msra.mxu0 0.0
    %2090 = vmatprep.subr.mxu0 0.0
    %2091 = vmatpush1.msra.mxu0 0.0
    %2092 = vmatprep.subr.mxu0 0.0
    %2093 = vmatpush1.msra.mxu0 0.0
    %2094 = vmatprep.subr.mxu0 0.0
    %2095 = vmatpush1.msra.mxu0 0.0
    %2096 = vmatprep.subr.mxu0 0.0
    %2097 = vmatpush1.msra.mxu0 0.0
    %2098 = vmatprep.subr.mxu0 0.0
    %2099 = vmatpush1.msra.mxu0 0.0
    %2100 = vmatprep.subr.mxu0 0.0
    %2101 = vmatpush1.msra.mxu0 0.0
    %2102 = vmatprep.subr.mxu0 0.0
    %2103 = vmatpush1.msra.mxu0 0.0
    %2104 = vmatprep.subr.mxu0 0.0
    %2105 = vmatpush1.msra.mxu0 0.0
    %2106 = vmatprep.subr.mxu0 0.0
    %2107 = vmatpush1.msra.mxu0 0.0
    %2108 = vmatprep.subr.mxu0 0.0
    %2109 = vmatpush1.msra.mxu0 0.0
    %2110 = vmatprep.subr.mxu0 0.0
    %2111 = vmatpush1.msra.mxu0 0.0
    %2112 = vmatprep.subr.mxu0 0.0
    %2113 = vmatpush1.msra.mxu0 0.0
    %2114 = vmatprep.subr.mxu0 0.0
    %2115 = vmatpush1.msra.mxu0 0.0
    %2116 = vmatprep.subr.mxu0 0.0
    %2117 = vmatpush1.msra.mxu0 0.0
    %2118 = vmatprep.subr.mxu0 0.0
    %2119 = vmatpush1.msra.mxu0 0.0
    %2120 = vmatprep.subr.mxu0 0.0
    %2121 = vmatpush1.msra.mxu0 0.0
    %2122 = vmatprep.subr.mxu0 0.0
    %2123 = vmatpush1.msra.mxu0 0.0
    %2124 = vmatprep.subr.mxu0 0.0
    %2125 = vmatpush1.msra.mxu0 0.0
    %2126 = vmatprep.subr.mxu0 0.0
    %2127 = vmatpush1.msra.mxu0 0.0
    %2128 = vmatprep.subr.mxu0 0.0
    %2129 = vmatpush1.msra.mxu0 0.0
    %2130 = vmatprep.subr.mxu0 0.0
    %2131 = vmatpush1.msra.mxu0 0.0
    %2132 = vmatprep.subr.mxu0 0.0
    %2133 = vmatpush1.msra.mxu0 0.0
    %2134 = vmatprep.subr.mxu0 0.0
    %2135 = vmatpush1.msra.mxu0 0.0
    %2136 = vmatprep.subr.mxu0 0.0
    %2137 = vmatpush1.msra.mxu0 0.0
    %2138 = vmatprep.subr.mxu0 0.0
    %2139 = vmatpush1.msra.mxu0 0.0
    %2140 = vmatprep.subr.mxu0 0.0
    %2141 = vmatpush1.msra.mxu0 0.0
    %2142 = vmatprep.mubr.f32.mxu0 0.0
    %2143 = vmatmul.mubr.f32.gmra.mrb[0].mxu0 %v2073
    %v2144 = vpop.f32.mrb[0].mxu0
    %v2145 = vadd.f32 %v2070, %v2144
    %v2146 = vpop.f32.mrb[0].mxu0
    %2147 = vmatprep.mubr.f32.mxu0 0.0
    %2148 = vmatmul.mubr.f32.gmra.mrb[0].mxu0 %v2076
    %v2149 = vpop.f32.mrb[0].mxu0
    %v2150 = vadd.f32 %v2070, %v2149
    %v2151 = vpop.f32.mrb[0].mxu0
    %2152 = vdwg.mxu0
    %v2155 = vrot.slane %v2145, 7
    %v2156 = vrot.slane %v2150, 7
    %v2157 = vsel %vm418, %v2155, %v2156
    %v2160 = vadd.f32 %v137, %v2155
    %v2161 = vadd.f32 %v138, %v2157
    %vm2162 = vcmask 261121
    %2163 = vst.msk [vmem:[#allocation2 + $0x8] sm:$0xfe] %vm2162, %v2160
    %2164 = vst.msk [vmem:[#allocation2 + $0x10] sm:$0x3] %vm147, %v2161
    %v2165 = vld [vmem:[#allocation2] sm:$0xff]
    %v2166 = vld [vmem:[#allocation2 + $0x8] sm:$0xff]
    %v2167 = vld [vmem:[#allocation2 + $0x10] sm:$0x3]
    %v2168 = vld [vmem:[#allocation8] sm:$0x1]
    %v2169 = vld [vmem:[#allocation9] sm:$0x1]
    %v2170 = vsel %vm129, %v2165, 0.0
    %2171 = vadd.xlane.f32.xlu0 %v2170
    %v2172 = vpop.xlane.xlu0 %2171
    %v2173 = vsel %vm129, %v2166, 0.0
    %2174 = vadd.xlane.f32.xlu0 %v2173
    %v2175 = vpop.xlane.xlu0 %2174
    %v2176 = vsel %vm147, %v2167, 0.0
    %2177 = vadd.xlane.f32.xlu0 %v2176
    %v2178 = vpop.xlane.xlu0 %2177
    %v2179 = vmul.f32 %v2172, %v151
    %v2180 = vmul.f32 %v2175, %v151
    %v2181 = vmul.f32 %v2178, %v151
    %v2182 = vsub.f32 %v2165, %v2179
    %v2183 = vsub.f32 %v2166, %v2180
    %v2184 = vsub.f32 %v2167, %v2181
    %v2185 = vmul.f32 %v2182, %v2182
    %v2186 = vmul.f32 %v2183, %v2183
    %v2187 = vmul.f32 %v2184, %v2184
    %v2188 = vsel %vm129, %v2185, 0.0
    %2189 = vadd.xlane.f32.xlu0 %v2188
    %v2190 = vpop.xlane.xlu0 %2189
    %v2191 = vsel %vm129, %v2186, 0.0
    %2192 = vadd.xlane.f32.xlu0 %v2191
    %v2193 = vpop.xlane.xlu0 %2192
    %v2194 = vsel %vm147, %v2187, 0.0
    %2195 = vadd.xlane.f32.xlu0 %v2194
    %v2196 = vpop.xlane.xlu0 %2195
    %v2197 = vmul.f32 %v2190, %v151
    %v2198 = vmul.f32 %v2193, %v151
    %v2199 = vmul.f32 %v2196, %v151
    %v2200 = vadd.f32 %v2197, 1e-05
    %v2201 = vadd.f32 %v2198, 1e-05
    %v2202 = vadd.f32 %v2199, 1e-05
    %v2203 = vrsqrt.pop %v2200
    %v2204 = vrsqrt.pop %v2201
    %v2205 = vrsqrt.pop %v2202
    %v2206 = vmul.f32 %v2182, %v2203
    %v2207 = vmul.f32 %v2183, %v2204
    %v2208 = vmul.f32 %v2184, %v2205
    %v2210 = vlaneseq
    %v2211 = vshrl.u32 %v2210, 7
    %v2212 = vsub.s32 0, %v2211
    %v2213 = vrot.slane %v2168, %v2212
    %v2215 = vmul.f32 %v2206, %v2213
    %v2216 = vmul.f32 %v2207, %v2213
    %v2217 = vmul.f32 %v2208, %v2213
    %v2219 = vlaneseq
    %v2220 = vshrl.u32 %v2219, 7
    %v2221 = vsub.s32 0, %v2220
    %v2222 = vrot.slane %v2169, %v2221
    %v2224 = vadd.f32 %v2215, %v2222
    %v2225 = vadd.f32 %v2216, %v2222
    %v2226 = vadd.f32 %v2217, %v2222
    %v2227 = vld [vmem:[%s10] sm:$0xff]
    %v2228 = vld [vmem:[%s10 + $0x8] sm:$0xff]
    %v2229 = vld [vmem:[%s10 + $0x10] sm:$0xff]
    %v2230 = vld [vmem:[%s10 + $0x18] sm:$0xff]
    %v2231 = vld [vmem:[#allocation11] sm:$0x1]
    %v2233 = vlaneseq
    %v2234 = vshrl.u32 %v2233, 7
    %v2235 = vsub.s32 0, %v2234
    %v2236 = vrot.slane %v2231, %v2235
    %v2239 = vsel %vm129, %v2224, 0
    %v2242 = vsel %vm129, %v2225, 0
    %v2245 = vsel %vm129, %v2226, 0
    %2247 = vmatprep.subr.mxu0 0.0
    %2248 = vmatpush1.msra.mxu0 %v2227
    %2249 = vmatprep.subr.mxu0 0.0
    %2250 = vmatpush1.msra.mxu0 %v2228
    %2251 = vmatprep.subr.mxu0 0.0
    %2252 = vmatpush1.msra.mxu0 %v2229
    %2253 = vmatprep.subr.mxu0 0.0
    %2254 = vmatpush1.msra.mxu0 %v2230
    %2255 = vmatprep.subr.mxu0 0.0
    %2256 = vmatpush1.msra.mxu0 0.0
    %2257 = vmatprep.subr.mxu0 0.0
    %2258 = vmatpush1.msra.mxu0 0.0
    %2259 = vmatprep.subr.mxu0 0.0
    %2260 = vmatpush1.msra.mxu0 0.0
    %2261 = vmatprep.subr.mxu0 0.0
    %2262 = vmatpush1.msra.mxu0 0.0
    %2263 = vmatprep.subr.mxu0 0.0
    %2264 = vmatpush1.msra.mxu0 0.0
    %2265 = vmatprep.subr.mxu0 0.0
    %2266 = vmatpush1.msra.mxu0 0.0
    %2267 = vmatprep.subr.mxu0 0.0
    %2268 = vmatpush1.msra.mxu0 0.0
    %2269 = vmatprep.subr.mxu0 0.0
    %2270 = vmatpush1.msra.mxu0 0.0
    %2271 = vmatprep.subr.mxu0 0.0
    %2272 = vmatpush1.msra.mxu0 0.0
    %2273 = vmatprep.subr.mxu0 0.0
    %2274 = vmatpush1.msra.mxu0 0.0
    %2275 = vmatprep.subr.mxu0 0.0
    %2276 = vmatpush1.msra.mxu0 0.0
    %2277 = vmatprep.subr.mxu0 0.0
    %2278 = vmatpush1.msra.mxu0 0.0
    %2279 = vmatprep.subr.mxu0 0.0
    %2280 = vmatpush1.msra.mxu0 0.0
    %2281 = vmatprep.subr.mxu0 0.0
    %2282 = vmatpush1.msra.mxu0 0.0
    %2283 = vmatprep.subr.mxu0 0.0
    %2284 = vmatpush1.msra.mxu0 0.0
    %2285 = vmatprep.subr.mxu0 0.0
    %2286 = vmatpush1.msra.mxu0 0.0
    %2287 = vmatprep.subr.mxu0 0.0
    %2288 = vmatpush1.msra.mxu0 0.0
    %2289 = vmatprep.subr.mxu0 0.0
    %2290 = vmatpush1.msra.mxu0 0.0
    %2291 = vmatprep.subr.mxu0 0.0
    %2292 = vmatpush1.msra.mxu0 0.0
    %2293 = vmatprep.subr.mxu0 0.0
    %2294 = vmatpush1.msra.mxu0 0.0
    %2295 = vmatprep.subr.mxu0 0.0
    %2296 = vmatpush1.msra.mxu0 0.0
    %2297 = vmatprep.subr.mxu0 0.0
    %2298 = vmatpush1.msra.mxu0 0.0
    %2299 = vmatprep.subr.mxu0 0.0
    %2300 = vmatpush1.msra.mxu0 0.0
    %2301 = vmatprep.subr.mxu0 0.0
    %2302 = vmatpush1.msra.mxu0 0.0
    %2303 = vmatprep.subr.mxu0 0.0
    %2304 = vmatpush1.msra.mxu0 0.0
    %2305 = vmatprep.subr.mxu0 0.0
    %2306 = vmatpush1.msra.mxu0 0.0
    %2307 = vmatprep.subr.mxu0 0.0
    %2308 = vmatpush1.msra.mxu0 0.0
    %2309 = vmatprep.subr.mxu0 0.0
    %2310 = vmatpush1.msra.mxu0 0.0
    %2311 = vmatprep.mubr.f32.mxu0 0.0
    %2312 = vmatmul.mubr.f32.gmra.mrb[0].mxu0 %v2239
    %v2313 = vpop.f32.mrb[0].mxu0
    %v2314 = vadd.f32 %v2236, %v2313
    %v2315 = vpop.f32.mrb[0].mxu0
    %2316 = vmatprep.mubr.f32.mxu0 0.0
    %2317 = vmatmul.mubr.f32.gmra.mrb[0].mxu0 %v2242
    %v2318 = vpop.f32.mrb[0].mxu0
    %v2319 = vadd.f32 %v2236, %v2318
    %v2320 = vpop.f32.mrb[0].mxu0
    %2321 = vmatprep.mubr.f32.mxu0 0.0
    %2322 = vmatmul.mubr.f32.gmra.mrb[0].mxu0 %v2245
    %v2323 = vpop.f32.mrb[0].mxu0
    %v2324 = vadd.f32 %v2236, %v2323
    %v2325 = vpop.f32.mrb[0].mxu0
    %2326 = vdwg.mxu0
    %v2327 = vmul.f32 %v2314, 0.5
    %v2328 = vmul.f32 %v2319, 0.5
    %v2329 = vmul.f32 %v2324, 0.5
    %v2330 = vmul.f32 %v2314, 0.70710677
    %v2331 = vmul.f32 %v2319, 0.70710677
    %v2332 = vmul.f32 %v2324, 0.70710677
    %v2333 = verf.f32.pop %v2330
    %v2334 = verf.f32.pop %v2331
    %v2335 = verf.f32.pop %v2332
    %v2336 = vadd.f32 %v2333, 1.0
    %v2337 = vadd.f32 %v2334, 1.0
    %v2338 = vadd.f32 %v2335, 1.0
    %v2339 = vmul.f32 %v2327, %v2336
    %v2340 = vmul.f32 %v2328, %v2337
    %v2341 = vmul.f32 %v2329, %v2338
    %v2342 = vld [vmem:[%s12] sm:$0xff]
    %v2343 = vld [vmem:[%s12 + $0x8] sm:$0xff]
    %v2344 = vld [vmem:[%s12 + $0x10] sm:$0xff]
    %v2345 = vld [vmem:[%s12 + $0x18] sm:$0xff]
    %v2346 = vld [vmem:[%s12 + $0x20] sm:$0xff]
    %v2347 = vld [vmem:[%s12 + $0x28] sm:$0xff]
    %v2348 = vld [vmem:[%s12 + $0x30] sm:$0xff]
    %v2349 = vld [vmem:[%s12 + $0x38] sm:$0xff]
    %v2350 = vld [vmem:[%s13] sm:$0x1]
    %v2352 = vlaneseq
    %v2353 = vshrl.u32 %v2352, 7
    %v2354 = vsub.s32 0, %v2353
    %v2355 = vrot.slane %v2350, %v2354
    %vm2357 = vcmask 523264
    %v2359 = vsel %vm2357, %v2339, 0
    %v2362 = vsel %vm2357, %v2340, 0
    %v2365 = vsel %vm2357, %v2341, 0
    %2367 = vmatprep.subr.mxu0 0.0
    %2368 = vmatpush1.msra.mxu0 %v2342
    %2369 = vmatprep.subr.mxu0 0.0
    %2370 = vmatpush1.msra.mxu0 %v2343
    %2371 = vmatprep.subr.mxu0 0.0
    %2372 = vmatpush1.msra.mxu0 %v2344
    %2373 = vmatprep.subr.mxu0 0.0
    %2374 = vmatpush1.msra.mxu0 %v2345
    %2375 = vmatprep.subr.mxu0 0.0
    %2376 = vmatpush1.msra.mxu0 %v2346
    %2377 = vmatprep.subr.mxu0 0.0
    %2378 = vmatpush1.msra.mxu0 %v2347
    %2379 = vmatprep.subr.mxu0 0.0
    %2380 = vmatpush1.msra.mxu0 %v2348
    %2381 = vmatprep.subr.mxu0 0.0
    %2382 = vmatpush1.msra.mxu0 %v2349
    %2383 = vmatprep.subr.mxu0 0.0
    %2384 = vmatpush1.msra.mxu0 0.0
    %2385 = vmatprep.subr.mxu0 0.0
    %2386 = vmatpush1.msra.mxu0 0.0
    %2387 = vmatprep.subr.mxu0 0.0
    %2388 = vmatpush1.msra.mxu0 0.0
    %2389 = vmatprep.subr.mxu0 0.0
    %2390 = vmatpush1.msra.mxu0 0.0
    %2391 = vmatprep.subr.mxu0 0.0
    %2392 = vmatpush1.msra.mxu0 0.0
    %2393 = vmatprep.subr.mxu0 0.0
    %2394 = vmatpush1.msra.mxu0 0.0
    %2395 = vmatprep.subr.mxu0 0.0
    %2396 = vmatpush1.msra.mxu0 0.0
    %2397 = vmatprep.subr.mxu0 0.0
    %2398 = vmatpush1.msra.mxu0 0.0
    %2399 = vmatprep.subr.mxu0 0.0
    %2400 = vmatpush1.msra.mxu0 0.0
    %2401 = vmatprep.subr.mxu0 0.0
    %2402 = vmatpush1.msra.mxu0 0.0
    %2403 = vmatprep.subr.mxu0 0.0
    %2404 = vmatpush1.msra.mxu0 0.0
    %2405 = vmatprep.subr.mxu0 0.0
    %2406 = vmatpush1.msra.mxu0 0.0
    %2407 = vmatprep.subr.mxu0 0.0
    %2408 = vmatpush1.msra.mxu0 0.0
    %2409 = vmatprep.subr.mxu0 0.0
    %2410 = vmatpush1.msra.mxu0 0.0
    %2411 = vmatprep.subr.mxu0 0.0
    %2412 = vmatpush1.msra.mxu0 0.0
    %2413 = vmatprep.subr.mxu0 0.0
    %2414 = vmatpush1.msra.mxu0 0.0
    %2415 = vmatprep.subr.mxu0 0.0
    %2416 = vmatpush1.msra.mxu0 0.0
    %2417 = vmatprep.subr.mxu0 0.0
    %2418 = vmatpush1.msra.mxu0 0.0
    %2419 = vmatprep.subr.mxu0 0.0
    %2420 = vmatpush1.msra.mxu0 0.0
    %2421 = vmatprep.subr.mxu0 0.0
    %2422 = vmatpush1.msra.mxu0 0.0
    %2423 = vmatprep.subr.mxu0 0.0
    %2424 = vmatpush1.msra.mxu0 0.0
    %2425 = vmatprep.subr.mxu0 0.0
    %2426 = vmatpush1.msra.mxu0 0.0
    %2427 = vmatprep.subr.mxu0 0.0
    %2428 = vmatpush1.msra.mxu0 0.0
    %2429 = vmatprep.subr.mxu0 0.0
    %2430 = vmatpush1.msra.mxu0 0.0
    %2431 = vmatprep.mubr.f32.mxu0 0.0
    %2432 = vmatmul.mubr.f32.gmra.mrb[0].mxu0 %v2359
    %v2433 = vpop.f32.mrb[0].mxu0
    %v2434 = vadd.f32 %v2355, %v2433
    %v2435 = vpop.f32.mrb[0].mxu0
    %2436 = vmatprep.mubr.f32.mxu0 0.0
    %2437 = vmatmul.mubr.f32.gmra.mrb[0].mxu0 %v2362
    %v2438 = vpop.f32.mrb[0].mxu0
    %v2439 = vadd.f32 %v2355, %v2438
    %v2440 = vpop.f32.mrb[0].mxu0
    %2441 = vmatprep.mubr.f32.mxu0 0.0
    %2442 = vmatmul.mubr.f32.gmra.mrb[0].mxu0 %v2365
    %v2443 = vpop.f32.mrb[0].mxu0
    %v2444 = vadd.f32 %v2355, %v2443
    %v2445 = vpop.f32.mrb[0].mxu0
    %2446 = vdwg.mxu0
    %v2447 = vadd.f32 %v2165, %v2434
    %v2448 = vadd.f32 %v2166, %v2439
    %v2449 = vadd.f32 %v2167, %v2444
    %2450 = vst.msk [vmem:[#allocation2] sm:$0xff] %vm129, %v2447
    %2451 = vst.msk [vmem:[#allocation2 + $0x8] sm:$0xff] %vm129, %v2448
    %2452 = vst.msk [vmem:[#allocation2 + $0x10] sm:$0x3] %vm147, %v2449
    %s2453 = scalar_lea.vmem %s3, 1
    %v2454 = vld [vmem:[%s2453] sm:$0x1]
    %s2455 = scalar_lea.vmem %s4, 1
    %v2456 = vld [vmem:[%s2455] sm:$0x1]
    %v2457 = vsel %vm129, %v2447, 0.0
    %2458 = vadd.xlane.f32.xlu0 %v2457
    %v2459 = vpop.xlane.xlu0 %2458
    %v2460 = vsel %vm129, %v2448, 0.0
    %2461 = vadd.xlane.f32.xlu0 %v2460
    %v2462 = vpop.xlane.xlu0 %2461
    %v2463 = vsel %vm147, %v2449, 0.0
    %2464 = vadd.xlane.f32.xlu0 %v2463
    %v2465 = vpop.xlane.xlu0 %2464
    %v2466 = vmul.f32 %v2459, %v151
    %v2467 = vmul.f32 %v2462, %v151
    %v2468 = vmul.f32 %v2465, %v151
    %v2469 = vsub.f32 %v2447, %v2466
    %v2470 = vsub.f32 %v2448, %v2467
    %v2471 = vsub.f32 %v2449, %v2468
    %v2472 = vmul.f32 %v2469, %v2469
    %v2473 = vmul.f32 %v2470, %v2470
    %v2474 = vmul.f32 %v2471, %v2471
    %v2475 = vsel %vm129, %v2472, 0.0
    %2476 = vadd.xlane.f32.xlu0 %v2475
    %v2477 = vpop.xlane.xlu0 %2476
    %v2478 = vsel %vm129, %v2473, 0.0
    %2479 = vadd.xlane.f32.xlu0 %v2478
    %v2480 = vpop.xlane.xlu0 %2479
    %v2481 = vsel %vm147, %v2474, 0.0
    %2482 = vadd.xlane.f32.xlu0 %v2481
    %v2483 = vpop.xlane.xlu0 %2482
    %v2484 = vmul.f32 %v2477, %v151
    %v2485 = vmul.f32 %v2480, %v151
    %v2486 = vmul.f32 %v2483, %v151
    %v2487 = vadd.f32 %v2484, 1e-05
    %v2488 = vadd.f32 %v2485, 1e-05
    %v2489 = vadd.f32 %v2486, 1e-05
    %v2490 = vrsqrt.pop %v2487
    %v2491 = vrsqrt.pop %v2488
    %v2492 = vrsqrt.pop %v2489
    %v2493 = vmul.f32 %v2469, %v2490
    %v2494 = vmul.f32 %v2470, %v2491
    %v2495 = vmul.f32 %v2471, %v2492
    %v2497 = vlaneseq
    %v2498 = vshrl.u32 %v2497, 7
    %v2499 = vsub.s32 0, %v2498
    %v2500 = vrot.slane %v2454, %v2499
    %v2502 = vmul.f32 %v2493, %v2500
    %v2503 = vmul.f32 %v2494, %v2500
    %v2504 = vmul.f32 %v2495, %v2500
    %v2506 = vlaneseq
    %v2507 = vshrl.u32 %v2506, 7
    %v2508 = vsub.s32 0, %v2507
    %v2509 = vrot.slane %v2456, %v2508
    %v2511 = vadd.f32 %v2502, %v2509
    %v2512 = vadd.f32 %v2503, %v2509
    %v2513 = vadd.f32 %v2504, %v2509
    %s2514 = scalar_lea.vmem %s5, 32
    %v2515 = vld [vmem:[%s2514] sm:$0xff]
    %v2516 = vld [vmem:[%s2514 + $0x8] sm:$0xff]
    %v2517 = vld [vmem:[%s2514 + $0x10] sm:$0xff]
    %v2518 = vld [vmem:[%s2514 + $0x18] sm:$0xff]
    %v2520 = vsel %vm129, %v2511, 0
    %v2523 = vsel %vm129, %v2512, 0
    %v2526 = vsel %vm129, %v2513, 0
    %2528 = vmatprep.subr.mxu0 0.0
    %2529 = vmatpush1.msra.mxu0 %v2515
    %2530 = vmatprep.subr.mxu0 0.0
    %2531 = vmatpush1.msra.mxu0 %v2516
    %2532 = vmatprep.subr.mxu0 0.0
    %2533 = vmatpush1.msra.mxu0 %v2517
    %2534 = vmatprep.subr.mxu0 0.0
    %2535 = vmatpush1.msra.mxu0 %v2518
    %2536 = vmatprep.subr.mxu0 0.0
    %2537 = vmatpush1.msra.mxu0 0.0
    %2538 = vmatprep.subr.mxu0 0.0
    %2539 = vmatpush1.msra.mxu0 0.0
    %2540 = vmatprep.subr.mxu0 0.0
    %2541 = vmatpush1.msra.mxu0 0.0
    %2542 = vmatprep.subr.mxu0 0.0
    %2543 = vmatpush1.msra.mxu0 0.0
    %2544 = vmatprep.subr.mxu0 0.0
    %2545 = vmatpush1.msra.mxu0 0.0
    %2546 = vmatprep.subr.mxu0 0.0
    %2547 = vmatpush1.msra.mxu0 0.0
    %2548 = vmatprep.subr.mxu0 0.0
    %2549 = vmatpush1.msra.mxu0 0.0
    %2550 = vmatprep.subr.mxu0 0.0
    %2551 = vmatpush1.msra.mxu0 0.0
    %2552 = vmatprep.subr.mxu0 0.0
    %2553 = vmatpush1.msra.mxu0 0.0
    %2554 = vmatprep.subr.mxu0 0.0
    %2555 = vmatpush1.msra.mxu0 0.0
    %2556 = vmatprep.subr.mxu0 0.0
    %2557 = vmatpush1.msra.mxu0 0.0
    %2558 = vmatprep.subr.mxu0 0.0
    %2559 = vmatpush1.msra.mxu0 0.0
    %2560 = vmatprep.subr.mxu0 0.0
    %2561 = vmatpush1.msra.mxu0 0.0
    %2562 = vmatprep.subr.mxu0 0.0
    %2563 = vmatpush1.msra.mxu0 0.0
    %2564 = vmatprep.subr.mxu0 0.0
    %2565 = vmatpush1.msra.mxu0 0.0
    %2566 = vmatprep.subr.mxu0 0.0
    %2567 = vmatpush1.msra.mxu0 0.0
    %2568 = vmatprep.subr.mxu0 0.0
    %2569 = vmatpush1.msra.mxu0 0.0
    %2570 = vmatprep.subr.mxu0 0.0
    %2571 = vmatpush1.msra.mxu0 0.0
    %2572 = vmatprep.subr.mxu0 0.0
    %2573 = vmatpush1.msra.mxu0 0.0
    %2574 = vmatprep.subr.mxu0 0.0
    %2575 = vmatpush1.msra.mxu0 0.0
    %2576 = vmatprep.subr.mxu0 0.0
    %2577 = vmatpush1.msra.mxu0 0.0
    %2578 = vmatprep.subr.mxu0 0.0
    %2579 = vmatpush1.msra.mxu0 0.0
    %2580 = vmatprep.subr.mxu0 0.0
    %2581 = vmatpush1.msra.mxu0 0.0
    %2582 = vmatprep.subr.mxu0 0.0
    %2583 = vmatpush1.msra.mxu0 0.0
    %2584 = vmatprep.subr.mxu0 0.0
    %2585 = vmatpush1.msra.mxu0 0.0
    %2586 = vmatprep.subr.mxu0 0.0
    %2587 = vmatpush1.msra.mxu0 0.0
    %2588 = vmatprep.subr.mxu0 0.0
    %2589 = vmatpush1.msra.mxu0 0.0
    %2590 = vmatprep.subr.mxu0 0.0
    %2591 = vmatpush1.msra.mxu0 0.0
    %2592 = vmatprep.mubr.f32.mxu0 0.0
    %2593 = vmatmul.mubr.f32.gmra.mrb[0].mxu0 %v2520
    %v2594 = vpop.f32.mrb[0].mxu0
    %v2595 = vadd.f32 0.0, %v2594
    %v2596 = vpop.f32.mrb[0].mxu0
    %2597 = vmatprep.mubr.f32.mxu0 0.0
    %2598 = vmatmul.mubr.f32.gmra.mrb[0].mxu0 %v2523
    %v2599 = vpop.f32.mrb[0].mxu0
    %v2600 = vadd.f32 0.0, %v2599
    %v2601 = vpop.f32.mrb[0].mxu0
    %2602 = vmatprep.mubr.f32.mxu0 0.0
    %2603 = vmatmul.mubr.f32.gmra.mrb[0].mxu0 %v2526
    %v2604 = vpop.f32.mrb[0].mxu0
    %v2605 = vadd.f32 0.0, %v2604
    %v2606 = vpop.f32.mrb[0].mxu0
    %2607 = vdwg.mxu0
    %2610 = vrot.lane.b32.xlu0 %v2595, 96
    %v2611 = vpop.permute.xlu0 %2610
    %2612 = vrot.lane.b32.xlu0 %v2600, 96
    %v2613 = vpop.permute.xlu0 %2612
    %v2614 = vsel %vm299, %v2595, 0
    %v2616 = vsel %vm299, %v2600, 0
    %v2618 = vsel %vm299, %v2611, 0
    %v2620 = vsel %vm299, %v2613, 0
    %2622 = vmatprep.subr.mxu0 0.0
    %2623 = vmatpush1.xpose.msra.mxu0 %v2618
    %2624 = vmatprep.subr.mxu0 0.0
    %2625 = vmatpush1.xpose.msra.mxu0 %v2620
    %2626 = vmatprep.subr.mxu0 0.0
    %2627 = vmatpush1.xpose.msra.mxu0 0.0
    %2628 = vmatprep.subr.mxu0 0.0
    %2629 = vmatpush1.xpose.msra.mxu0 0.0
    %2630 = vmatprep.subr.mxu0 0.0
    %2631 = vmatpush1.xpose.msra.mxu0 0.0
    %2632 = vmatprep.subr.mxu0 0.0
    %2633 = vmatpush1.xpose.msra.mxu0 0.0
    %2634 = vmatprep.subr.mxu0 0.0
    %2635 = vmatpush1.xpose.msra.mxu0 0.0
    %2636 = vmatprep.subr.mxu0 0.0
    %2637 = vmatpush1.xpose.msra.mxu0 0.0
    %2638 = vmatprep.subr.mxu0 0.0
    %2639 = vmatpush1.xpose.msra.mxu0 0.0
    %2640 = vmatprep.subr.mxu0 0.0
    %2641 = vmatpush1.xpose.msra.mxu0 0.0
    %2642 = vmatprep.subr.mxu0 0.0
    %2643 = vmatpush1.xpose.msra.mxu0 0.0
    %2644 = vmatprep.subr.mxu0 0.0
    %2645 = vmatpush1.xpose.msra.mxu0 0.0
    %2646 = vmatprep.subr.mxu0 0.0
    %2647 = vmatpush1.xpose.msra.mxu0 0.0
    %2648 = vmatprep.subr.mxu0 0.0
    %2649 = vmatpush1.xpose.msra.mxu0 0.0
    %2650 = vmatprep.subr.mxu0 0.0
    %2651 = vmatpush1.xpose.msra.mxu0 0.0
    %2652 = vmatprep.subr.mxu0 0.0
    %2653 = vmatpush1.xpose.msra.mxu0 0.0
    %2654 = vmatprep.subr.mxu0 0.0
    %2655 = vmatpush1.xpose.msra.mxu0 0.0
    %2656 = vmatprep.subr.mxu0 0.0
    %2657 = vmatpush1.xpose.msra.mxu0 0.0
    %2658 = vmatprep.subr.mxu0 0.0
    %2659 = vmatpush1.xpose.msra.mxu0 0.0
    %2660 = vmatprep.subr.mxu0 0.0
    %2661 = vmatpush1.xpose.msra.mxu0 0.0
    %2662 = vmatprep.subr.mxu0 0.0
    %2663 = vmatpush1.xpose.msra.mxu0 0.0
    %2664 = vmatprep.subr.mxu0 0.0
    %2665 = vmatpush1.xpose.msra.mxu0 0.0
    %2666 = vmatprep.subr.mxu0 0.0
    %2667 = vmatpush1.xpose.msra.mxu0 0.0
    %2668 = vmatprep.subr.mxu0 0.0
    %2669 = vmatpush1.xpose.msra.mxu0 0.0
    %2670 = vmatprep.subr.mxu0 0.0
    %2671 = vmatpush1.xpose.msra.mxu0 0.0
    %2672 = vmatprep.subr.mxu0 0.0
    %2673 = vmatpush1.xpose.msra.mxu0 0.0
    %2674 = vmatprep.subr.mxu0 0.0
    %2675 = vmatpush1.xpose.msra.mxu0 0.0
    %2676 = vmatprep.subr.mxu0 0.0
    %2677 = vmatpush1.xpose.msra.mxu0 0.0
    %2678 = vmatprep.subr.mxu0 0.0
    %2679 = vmatpush1.xpose.msra.mxu0 0.0
    %2680 = vmatprep.subr.mxu0 0.0
    %2681 = vmatpush1.xpose.msra.mxu0 0.0
    %2682 = vmatprep.subr.mxu0 0.0
    %2683 = vmatpush1.xpose.msra.mxu0 0.0
    %2684 = vmatprep.subr.mxu0 0.0
    %2685 = vmatpush1.xpose.msra.mxu0 0.0
    %2686 = vmatprep.mubr.f32.mxu0 0.0
    %2687 = vmatmul.mubr.f32.gmra.mrb[0].mxu0 %v2614
    %v2688 = vpop.f32.mrb[0].mxu0
    %v2689 = vadd.f32 0.0, %v2688
    %v2690 = vpop.f32.mrb[0].mxu0
    %2691 = vmatprep.mubr.f32.mxu0 0.0
    %2692 = vmatmul.mubr.f32.gmra.mrb[0].mxu0 %v2616
    %v2693 = vpop.f32.mrb[0].mxu0
    %v2694 = vadd.f32 0.0, %v2693
    %v2695 = vpop.f32.mrb[0].mxu0
    %2696 = vdwg.mxu0
    %v2697 = vsel %vm383, %v2689, -inf
    %2698 = vmax.xlane.f32.xlu0 %v2697
    %v2699 = vpop.xlane.xlu0 %2698
    %v2700 = vsel %vm387, %v2694, -inf
    %2701 = vmax.xlane.f32.xlu0 %v2700
    %v2702 = vpop.xlane.xlu0 %2701
    %v2703 = vsub.f32 %v2689, %v2699
    %v2704 = vsub.f32 %v2694, %v2702
    %v2705 = vmul.f32 %v2703, 1.442695
    %v2706 = vpow.pop %v2705
    %v2707 = vmul.f32 %v2704, 1.442695
    %v2708 = vpow.pop %v2707
    %v2709 = vsel %vm383, %v2706, 0.0
    %2710 = vadd.xlane.f32.xlu0 %v2709
    %v2711 = vpop.xlane.xlu0 %2710
    %v2712 = vsel %vm387, %v2708, 0.0
    %2713 = vadd.xlane.f32.xlu0 %v2712
    %v2714 = vpop.xlane.xlu0 %2713
    %v2715 = vrcp.pop %v2711
    %v2716 = vrcp.pop %v2714
    %v2717 = vmul.f32 %v2706, %v2715
    %v2718 = vmul.f32 %v2708, %v2716
    %2719 = vrot.lane.b32.xlu0 %v2595, 64
    %v2720 = vpop.permute.xlu0 %2719
    %2721 = vrot.lane.b32.xlu0 %v2600, 64
    %v2722 = vpop.permute.xlu0 %2721
    %v2725 = vsel %vm383, %v2717, 0
    %v2728 = vsel %vm383, %v2718, 0
    %v2730 = vsel %vm418, %v2722, 0
    %2732 = vmatprep.subr.mxu0 0.0
    %2733 = vmatpush1.msra.mxu0 %v2720
    %2734 = vmatprep.subr.mxu0 0.0
    %2735 = vmatpush1.msra.mxu0 %v2730
    %2736 = vmatprep.subr.mxu0 0.0
    %2737 = vmatpush1.msra.mxu0 0.0
    %2738 = vmatprep.subr.mxu0 0.0
    %2739 = vmatpush1.msra.mxu0 0.0
    %2740 = vmatprep.subr.mxu0 0.0
    %2741 = vmatpush1.msra.mxu0 0.0
    %2742 = vmatprep.subr.mxu0 0.0
    %2743 = vmatpush1.msra.mxu0 0.0
    %2744 = vmatprep.subr.mxu0 0.0
    %2745 = vmatpush1.msra.mxu0 0.0
    %2746 = vmatprep.subr.mxu0 0.0
    %2747 = vmatpush1.msra.mxu0 0.0
    %2748 = vmatprep.subr.mxu0 0.0
    %2749 = vmatpush1.msra.mxu0 0.0
    %2750 = vmatprep.subr.mxu0 0.0
    %2751 = vmatpush1.msra.mxu0 0.0
    %2752 = vmatprep.subr.mxu0 0.0
    %2753 = vmatpush1.msra.mxu0 0.0
    %2754 = vmatprep.subr.mxu0 0.0
    %2755 = vmatpush1.msra.mxu0 0.0
    %2756 = vmatprep.subr.mxu0 0.0
    %2757 = vmatpush1.msra.mxu0 0.0
    %2758 = vmatprep.subr.mxu0 0.0
    %2759 = vmatpush1.msra.mxu0 0.0
    %2760 = vmatprep.subr.mxu0 0.0
    %2761 = vmatpush1.msra.mxu0 0.0
    %2762 = vmatprep.subr.mxu0 0.0
    %2763 = vmatpush1.msra.mxu0 0.0
    %2764 = vmatprep.subr.mxu0 0.0
    %2765 = vmatpush1.msra.mxu0 0.0
    %2766 = vmatprep.subr.mxu0 0.0
    %2767 = vmatpush1.msra.mxu0 0.0
    %2768 = vmatprep.subr.mxu0 0.0
    %2769 = vmatpush1.msra.mxu0 0.0
    %2770 = vmatprep.subr.mxu0 0.0
    %2771 = vmatpush1.msra.mxu0 0.0
    %2772 = vmatprep.subr.mxu0 0.0
    %2773 = vmatpush1.msra.mxu0 0.0
    %2774 = vmatprep.subr.mxu0 0.0
    %2775 = vmatpush1.msra.mxu0 0.0
    %2776 = vmatprep.subr.mxu0 0.0
    %2777 = vmatpush1.msra.mxu0 0.0
    %2778 = vmatprep.subr.mxu0 0.0
    %2779 = vmatpush1.msra.mxu0 0.0
    %2780 = vmatprep.subr.mxu0 0.0
    %2781 = vmatpush1.msra.mxu0 0.0
    %2782 = vmatprep.subr.mxu0 0.0
    %2783 = vmatpush1.msra.mxu0 0.0
    %2784 = vmatprep.subr.mxu0 0.0
    %2785 = vmatpush1.msra.mxu0 0.0
    %2786 = vmatprep.subr.mxu0 0.0
    %2787 = vmatpush1.msra.mxu0 0.0
    %2788 = vmatprep.subr.mxu0 0.0
    %2789 = vmatpush1.msra.mxu0 0.0
    %2790 = vmatprep.subr.mxu0 0.0
    %2791 = vmatpush1.msra.mxu0 0.0
    %2792 = vmatprep.subr.mxu0 0.0
    %2793 = vmatpush1.msra.mxu0 0.0
    %2794 = vmatprep.subr.mxu0 0.0
    %2795 = vmatpush1.msra.mxu0 0.0
    %2796 = vmatprep.mubr.f32.mxu0 0.0
    %2797 = vmatmul.mubr.f32.gmra.mrb[0].mxu0 %v2725
    %v2798 = vpop.f32.mrb[0].mxu0
    %v2799 = vadd.f32 0.0, %v2798
    %v2800 = vpop.f32.mrb[0].mxu0
    %2801 = vmatprep.mubr.f32.mxu0 0.0
    %2802 = vmatmul.mubr.f32.gmra.mrb[0].mxu0 %v2728
    %v2803 = vpop.f32.mrb[0].mxu0
    %v2804 = vadd.f32 0.0, %v2803
    %v2805 = vpop.f32.mrb[0].mxu0
    %2806 = vdwg.mxu0
    %2807 = vrot.lane.b32.xlu0 %v2595, 120
    %v2808 = vpop.permute.xlu0 %2807
    %2809 = vrot.lane.b32.xlu0 %v2600, 120
    %v2810 = vpop.permute.xlu0 %2809
    %2811 = vrot.lane.b32.xlu0 %v2595, 88
    %v2812 = vpop.permute.xlu0 %2811
    %2813 = vrot.lane.b32.xlu0 %v2600, 88
    %v2814 = vpop.permute.xlu0 %2813
    %v2815 = vsel %vm299, %v2808, 0
    %v2817 = vsel %vm299, %v2810, 0
    %v2819 = vsel %vm299, %v2812, 0
    %v2821 = vsel %vm299, %v2814, 0
    %2823 = vmatprep.subr.mxu0 0.0
    %2824 = vmatpush1.xpose.msra.mxu0 %v2819
    %2825 = vmatprep.subr.mxu0 0.0
    %2826 = vmatpush1.xpose.msra.mxu0 %v2821
    %2827 = vmatprep.subr.mxu0 0.0
    %2828 = vmatpush1.xpose.msra.mxu0 0.0
    %2829 = vmatprep.subr.mxu0 0.0
    %2830 = vmatpush1.xpose.msra.mxu0 0.0
    %2831 = vmatprep.subr.mxu0 0.0
    %2832 = vmatpush1.xpose.msra.mxu0 0.0
    %2833 = vmatprep.subr.mxu0 0.0
    %2834 = vmatpush1.xpose.msra.mxu0 0.0
    %2835 = vmatprep.subr.mxu0 0.0
    %2836 = vmatpush1.xpose.msra.mxu0 0.0
    %2837 = vmatprep.subr.mxu0 0.0
    %2838 = vmatpush1.xpose.msra.mxu0 0.0
    %2839 = vmatprep.subr.mxu0 0.0
    %2840 = vmatpush1.xpose.msra.mxu0 0.0
    %2841 = vmatprep.subr.mxu0 0.0
    %2842 = vmatpush1.xpose.msra.mxu0 0.0
    %2843 = vmatprep.subr.mxu0 0.0
    %2844 = vmatpush1.xpose.msra.mxu0 0.0
    %2845 = vmatprep.subr.mxu0 0.0
    %2846 = vmatpush1.xpose.msra.mxu0 0.0
    %2847 = vmatprep.subr.mxu0 0.0
    %2848 = vmatpush1.xpose.msra.mxu0 0.0
    %2849 = vmatprep.subr.mxu0 0.0
    %2850 = vmatpush1.xpose.msra.mxu0 0.0
    %2851 = vmatprep.subr.mxu0 0.0
    %2852 = vmatpush1.xpose.msra.mxu0 0.0
    %2853 = vmatprep.subr.mxu0 0.0
    %2854 = vmatpush1.xpose.msra.mxu0 0.0
    %2855 = vmatprep.subr.mxu0 0.0
    %2856 = vmatpush1.xpose.msra.mxu0 0.0
    %2857 = vmatprep.subr.mxu0 0.0
    %2858 = vmatpush1.xpose.msra.mxu0 0.0
    %2859 = vmatprep.subr.mxu0 0.0
    %2860 = vmatpush1.xpose.msra.mxu0 0.0
    %2861 = vmatprep.subr.mxu0 0.0
    %2862 = vmatpush1.xpose.msra.mxu0 0.0
    %2863 = vmatprep.subr.mxu0 0.0
    %2864 = vmatpush1.xpose.msra.mxu0 0.0
    %2865 = vmatprep.subr.mxu0 0.0
    %2866 = vmatpush1.xpose.msra.mxu0 0.0
    %2867 = vmatprep.subr.mxu0 0.0
    %2868 = vmatpush1.xpose.msra.mxu0 0.0
    %2869 = vmatprep.subr.mxu0 0.0
    %2870 = vmatpush1.xpose.msra.mxu0 0.0
    %2871 = vmatprep.subr.mxu0 0.0
    %2872 = vmatpush1.xpose.msra.mxu0 0.0
    %2873 = vmatprep.subr.mxu0 0.0
    %2874 = vmatpush1.xpose.msra.mxu0 0.0
    %2875 = vmatprep.subr.mxu0 0.0
    %2876 = vmatpush1.xpose.msra.mxu0 0.0
    %2877 = vmatprep.subr.mxu0 0.0
    %2878 = vmatpush1.xpose.msra.mxu0 0.0
    %2879 = vmatprep.subr.mxu0 0.0
    %2880 = vmatpush1.xpose.msra.mxu0 0.0
    %2881 = vmatprep.subr.mxu0 0.0
    %2882 = vmatpush1.xpose.msra.mxu0 0.0
    %2883 = vmatprep.subr.mxu0 0.0
    %2884 = vmatpush1.xpose.msra.mxu0 0.0
    %2885 = vmatprep.subr.mxu0 0.0
    %2886 = vmatpush1.xpose.msra.mxu0 0.0
    %2887 = vmatprep.mubr.f32.mxu0 0.0
    %2888 = vmatmul.mubr.f32.gmra.mrb[0].mxu0 %v2815
    %v2889 = vpop.f32.mrb[0].mxu0
    %v2890 = vadd.f32 0.0, %v2889
    %v2891 = vpop.f32.mrb[0].mxu0
    %2892 = vmatprep.mubr.f32.mxu0 0.0
    %2893 = vmatmul.mubr.f32.gmra.mrb[0].mxu0 %v2817
    %v2894 = vpop.f32.mrb[0].mxu0
    %v2895 = vadd.f32 0.0, %v2894
    %v2896 = vpop.f32.mrb[0].mxu0
    %2897 = vdwg.mxu0
    %v2898 = vsel %vm383, %v2890, -inf
    %2899 = vmax.xlane.f32.xlu0 %v2898
    %v2900 = vpop.xlane.xlu0 %2899
    %v2901 = vsel %vm387, %v2895, -inf
    %2902 = vmax.xlane.f32.xlu0 %v2901
    %v2903 = vpop.xlane.xlu0 %2902
    %v2904 = vsub.f32 %v2890, %v2900
    %v2905 = vsub.f32 %v2895, %v2903
    %v2906 = vmul.f32 %v2904, 1.442695
    %v2907 = vpow.pop %v2906
    %v2908 = vmul.f32 %v2905, 1.442695
    %v2909 = vpow.pop %v2908
    %v2910 = vsel %vm383, %v2907, 0.0
    %2911 = vadd.xlane.f32.xlu0 %v2910
    %v2912 = vpop.xlane.xlu0 %2911
    %v2913 = vsel %vm387, %v2909, 0.0
    %2914 = vadd.xlane.f32.xlu0 %v2913
    %v2915 = vpop.xlane.xlu0 %2914
    %v2916 = vrcp.pop %v2912
    %v2917 = vrcp.pop %v2915
    %v2918 = vmul.f32 %v2907, %v2916
    %v2919 = vmul.f32 %v2909, %v2917
    %2920 = vrot.lane.b32.xlu0 %v2595, 56
    %v2921 = vpop.permute.xlu0 %2920
    %2922 = vrot.lane.b32.xlu0 %v2600, 56
    %v2923 = vpop.permute.xlu0 %2922
    %v2926 = vsel %vm383, %v2918, 0
    %v2929 = vsel %vm383, %v2919, 0
    %v2931 = vsel %vm418, %v2923, 0
    %2933 = vmatprep.subr.mxu0 0.0
    %2934 = vmatpush1.msra.mxu0 %v2921
    %2935 = vmatprep.subr.mxu0 0.0
    %2936 = vmatpush1.msra.mxu0 %v2931
    %2937 = vmatprep.subr.mxu0 0.0
    %2938 = vmatpush1.msra.mxu0 0.0
    %2939 = vmatprep.subr.mxu0 0.0
    %2940 = vmatpush1.msra.mxu0 0.0
    %2941 = vmatprep.subr.mxu0 0.0
    %2942 = vmatpush1.msra.mxu0 0.0
    %2943 = vmatprep.subr.mxu0 0.0
    %2944 = vmatpush1.msra.mxu0 0.0
    %2945 = vmatprep.subr.mxu0 0.0
    %2946 = vmatpush1.msra.mxu0 0.0
    %2947 = vmatprep.subr.mxu0 0.0
    %2948 = vmatpush1.msra.mxu0 0.0
    %2949 = vmatprep.subr.mxu0 0.0
    %2950 = vmatpush1.msra.mxu0 0.0
    %2951 = vmatprep.subr.mxu0 0.0
    %2952 = vmatpush1.msra.mxu0 0.0
    %2953 = vmatprep.subr.mxu0 0.0
    %2954 = vmatpush1.msra.mxu0 0.0
    %2955 = vmatprep.subr.mxu0 0.0
    %2956 = vmatpush1.msra.mxu0 0.0
    %2957 = vmatprep.subr.mxu0 0.0
    %2958 = vmatpush1.msra.mxu0 0.0
    %2959 = vmatprep.subr.mxu0 0.0
    %2960 = vmatpush1.msra.mxu0 0.0
    %2961 = vmatprep.subr.mxu0 0.0
    %2962 = vmatpush1.msra.mxu0 0.0
    %2963 = vmatprep.subr.mxu0 0.0
    %2964 = vmatpush1.msra.mxu0 0.0
    %2965 = vmatprep.subr.mxu0 0.0
    %2966 = vmatpush1.msra.mxu0 0.0
    %2967 = vmatprep.subr.mxu0 0.0
    %2968 = vmatpush1.msra.mxu0 0.0
    %2969 = vmatprep.subr.mxu0 0.0
    %2970 = vmatpush1.msra.mxu0 0.0
    %2971 = vmatprep.subr.mxu0 0.0
    %2972 = vmatpush1.msra.mxu0 0.0
    %2973 = vmatprep.subr.mxu0 0.0
    %2974 = vmatpush1.msra.mxu0 0.0
    %2975 = vmatprep.subr.mxu0 0.0
    %2976 = vmatpush1.msra.mxu0 0.0
    %2977 = vmatprep.subr.mxu0 0.0
    %2978 = vmatpush1.msra.mxu0 0.0
    %2979 = vmatprep.subr.mxu0 0.0
    %2980 = vmatpush1.msra.mxu0 0.0
    %2981 = vmatprep.subr.mxu0 0.0
    %2982 = vmatpush1.msra.mxu0 0.0
    %2983 = vmatprep.subr.mxu0 0.0
    %2984 = vmatpush1.msra.mxu0 0.0
    %2985 = vmatprep.subr.mxu0 0.0
    %2986 = vmatpush1.msra.mxu0 0.0
    %2987 = vmatprep.subr.mxu0 0.0
    %2988 = vmatpush1.msra.mxu0 0.0
    %2989 = vmatprep.subr.mxu0 0.0
    %2990 = vmatpush1.msra.mxu0 0.0
    %2991 = vmatprep.subr.mxu0 0.0
    %2992 = vmatpush1.msra.mxu0 0.0
    %2993 = vmatprep.subr.mxu0 0.0
    %2994 = vmatpush1.msra.mxu0 0.0
    %2995 = vmatprep.subr.mxu0 0.0
    %2996 = vmatpush1.msra.mxu0 0.0
    %2997 = vmatprep.mubr.f32.mxu0 0.0
    %2998 = vmatmul.mubr.f32.gmra.mrb[0].mxu0 %v2926
    %v2999 = vpop.f32.mrb[0].mxu0
    %v3000 = vadd.f32 0.0, %v2999
    %v3001 = vpop.f32.mrb[0].mxu0
    %3002 = vmatprep.mubr.f32.mxu0 0.0
    %3003 = vmatmul.mubr.f32.gmra.mrb[0].mxu0 %v2929
    %v3004 = vpop.f32.mrb[0].mxu0
    %v3005 = vadd.f32 0.0, %v3004
    %v3006 = vpop.f32.mrb[0].mxu0
    %3007 = vdwg.mxu0
    %3008 = vrot.lane.b32.xlu0 %v2595, 112
    %v3009 = vpop.permute.xlu0 %3008
    %3010 = vrot.lane.b32.xlu0 %v2600, 112
    %v3011 = vpop.permute.xlu0 %3010
    %3012 = vrot.lane.b32.xlu0 %v2595, 80
    %v3013 = vpop.permute.xlu0 %3012
    %3014 = vrot.lane.b32.xlu0 %v2600, 80
    %v3015 = vpop.permute.xlu0 %3014
    %v3016 = vsel %vm299, %v3009, 0
    %v3018 = vsel %vm299, %v3011, 0
    %v3020 = vsel %vm299, %v3013, 0
    %v3022 = vsel %vm299, %v3015, 0
    %3024 = vmatprep.subr.mxu0 0.0
    %3025 = vmatpush1.xpose.msra.mxu0 %v3020
    %3026 = vmatprep.subr.mxu0 0.0
    %3027 = vmatpush1.xpose.msra.mxu0 %v3022
    %3028 = vmatprep.subr.mxu0 0.0
    %3029 = vmatpush1.xpose.msra.mxu0 0.0
    %3030 = vmatprep.subr.mxu0 0.0
    %3031 = vmatpush1.xpose.msra.mxu0 0.0
    %3032 = vmatprep.subr.mxu0 0.0
    %3033 = vmatpush1.xpose.msra.mxu0 0.0
    %3034 = vmatprep.subr.mxu0 0.0
    %3035 = vmatpush1.xpose.msra.mxu0 0.0
    %3036 = vmatprep.subr.mxu0 0.0
    %3037 = vmatpush1.xpose.msra.mxu0 0.0
    %3038 = vmatprep.subr.mxu0 0.0
    %3039 = vmatpush1.xpose.msra.mxu0 0.0
    %3040 = vmatprep.subr.mxu0 0.0
    %3041 = vmatpush1.xpose.msra.mxu0 0.0
    %3042 = vmatprep.subr.mxu0 0.0
    %3043 = vmatpush1.xpose.msra.mxu0 0.0
    %3044 = vmatprep.subr.mxu0 0.0
    %3045 = vmatpush1.xpose.msra.mxu0 0.0
    %3046 = vmatprep.subr.mxu0 0.0
    %3047 = vmatpush1.xpose.msra.mxu0 0.0
    %3048 = vmatprep.subr.mxu0 0.0
    %3049 = vmatpush1.xpose.msra.mxu0 0.0
    %3050 = vmatprep.subr.mxu0 0.0
    %3051 = vmatpush1.xpose.msra.mxu0 0.0
    %3052 = vmatprep.subr.mxu0 0.0
    %3053 = vmatpush1.xpose.msra.mxu0 0.0
    %3054 = vmatprep.subr.mxu0 0.0
    %3055 = vmatpush1.xpose.msra.mxu0 0.0
    %3056 = vmatprep.subr.mxu0 0.0
    %3057 = vmatpush1.xpose.msra.mxu0 0.0
    %3058 = vmatprep.subr.mxu0 0.0
    %3059 = vmatpush1.xpose.msra.mxu0 0.0
    %3060 = vmatprep.subr.mxu0 0.0
    %3061 = vmatpush1.xpose.msra.mxu0 0.0
    %3062 = vmatprep.subr.mxu0 0.0
    %3063 = vmatpush1.xpose.msra.mxu0 0.0
    %3064 = vmatprep.subr.mxu0 0.0
    %3065 = vmatpush1.xpose.msra.mxu0 0.0
    %3066 = vmatprep.subr.mxu0 0.0
    %3067 = vmatpush1.xpose.msra.mxu0 0.0
    %3068 = vmatprep.subr.mxu0 0.0
    %3069 = vmatpush1.xpose.msra.mxu0 0.0
    %3070 = vmatprep.subr.mxu0 0.0
    %3071 = vmatpush1.xpose.msra.mxu0 0.0
    %3072 = vmatprep.subr.mxu0 0.0
    %3073 = vmatpush1.xpose.msra.mxu0 0.0
    %3074 = vmatprep.subr.mxu0 0.0
    %3075 = vmatpush1.xpose.msra.mxu0 0.0
    %3076 = vmatprep.subr.mxu0 0.0
    %3077 = vmatpush1.xpose.msra.mxu0 0.0
    %3078 = vmatprep.subr.mxu0 0.0
    %3079 = vmatpush1.xpose.msra.mxu0 0.0
    %3080 = vmatprep.subr.mxu0 0.0
    %3081 = vmatpush1.xpose.msra.mxu0 0.0
    %3082 = vmatprep.subr.mxu0 0.0
    %3083 = vmatpush1.xpose.msra.mxu0 0.0
    %3084 = vmatprep.subr.mxu0 0.0
    %3085 = vmatpush1.xpose.msra.mxu0 0.0
    %3086 = vmatprep.subr.mxu0 0.0
    %3087 = vmatpush1.xpose.msra.mxu0 0.0
    %3088 = vmatprep.mubr.f32.mxu0 0.0
    %3089 = vmatmul.mubr.f32.gmra.mrb[0].mxu0 %v3016
    %v3090 = vpop.f32.mrb[0].mxu0
    %v3091 = vadd.f32 0.0, %v3090
    %v3092 = vpop.f32.mrb[0].mxu0
    %3093 = vmatprep.mubr.f32.mxu0 0.0
    %3094 = vmatmul.mubr.f32.gmra.mrb[0].mxu0 %v3018
    %v3095 = vpop.f32.mrb[0].mxu0
    %v3096 = vadd.f32 0.0, %v3095
    %v3097 = vpop.f32.mrb[0].mxu0
    %3098 = vdwg.mxu0
    %v3099 = vsel %vm383, %v3091, -inf
    %3100 = vmax.xlane.f32.xlu0 %v3099
    %v3101 = vpop.xlane.xlu0 %3100
    %v3102 = vsel %vm387, %v3096, -inf
    %3103 = vmax.xlane.f32.xlu0 %v3102
    %v3104 = vpop.xlane.xlu0 %3103
    %v3105 = vsub.f32 %v3091, %v3101
    %v3106 = vsub.f32 %v3096, %v3104
    %v3107 = vmul.f32 %v3105, 1.442695
    %v3108 = vpow.pop %v3107
    %v3109 = vmul.f32 %v3106, 1.442695
    %v3110 = vpow.pop %v3109
    %v3111 = vsel %vm383, %v3108, 0.0
    %3112 = vadd.xlane.f32.xlu0 %v3111
    %v3113 = vpop.xlane.xlu0 %3112
    %v3114 = vsel %vm387, %v3110, 0.0
    %3115 = vadd.xlane.f32.xlu0 %v3114
    %v3116 = vpop.xlane.xlu0 %3115
    %v3117 = vrcp.pop %v3113
    %v3118 = vrcp.pop %v3116
    %v3119 = vmul.f32 %v3108, %v3117
    %v3120 = vmul.f32 %v3110, %v3118
    %3121 = vrot.lane.b32.xlu0 %v2595, 48
    %v3122 = vpop.permute.xlu0 %3121
    %3123 = vrot.lane.b32.xlu0 %v2600, 48
    %v3124 = vpop.permute.xlu0 %3123
    %v3127 = vsel %vm383, %v3119, 0
    %v3130 = vsel %vm383, %v3120, 0
    %v3132 = vsel %vm418, %v3124, 0
    %3134 = vmatprep.subr.mxu0 0.0
    %3135 = vmatpush1.msra.mxu0 %v3122
    %3136 = vmatprep.subr.mxu0 0.0
    %3137 = vmatpush1.msra.mxu0 %v3132
    %3138 = vmatprep.subr.mxu0 0.0
    %3139 = vmatpush1.msra.mxu0 0.0
    %3140 = vmatprep.subr.mxu0 0.0
    %3141 = vmatpush1.msra.mxu0 0.0
    %3142 = vmatprep.subr.mxu0 0.0
    %3143 = vmatpush1.msra.mxu0 0.0
    %3144 = vmatprep.subr.mxu0 0.0
    %3145 = vmatpush1.msra.mxu0 0.0
    %3146 = vmatprep.subr.mxu0 0.0
    %3147 = vmatpush1.msra.mxu0 0.0
    %3148 = vmatprep.subr.mxu0 0.0
    %3149 = vmatpush1.msra.mxu0 0.0
    %3150 = vmatprep.subr.mxu0 0.0
    %3151 = vmatpush1.msra.mxu0 0.0
    %3152 = vmatprep.subr.mxu0 0.0
    %3153 = vmatpush1.msra.mxu0 0.0
    %3154 = vmatprep.subr.mxu0 0.0
    %3155 = vmatpush1.msra.mxu0 0.0
    %3156 = vmatprep.subr.mxu0 0.0
    %3157 = vmatpush1.msra.mxu0 0.0
    %3158 = vmatprep.subr.mxu0 0.0
    %3159 = vmatpush1.msra.mxu0 0.0
    %3160 = vmatprep.subr.mxu0 0.0
    %3161 = vmatpush1.msra.mxu0 0.0
    %3162 = vmatprep.subr.mxu0 0.0
    %3163 = vmatpush1.msra.mxu0 0.0
    %3164 = vmatprep.subr.mxu0 0.0
    %3165 = vmatpush1.msra.mxu0 0.0
    %3166 = vmatprep.subr.mxu0 0.0
    %3167 = vmatpush1.msra.mxu0 0.0
    %3168 = vmatprep.subr.mxu0 0.0
    %3169 = vmatpush1.msra.mxu0 0.0
    %3170 = vmatprep.subr.mxu0 0.0
    %3171 = vmatpush1.msra.mxu0 0.0
    %3172 = vmatprep.subr.mxu0 0.0
    %3173 = vmatpush1.msra.mxu0 0.0
    %3174 = vmatprep.subr.mxu0 0.0
    %3175 = vmatpush1.msra.mxu0 0.0
    %3176 = vmatprep.subr.mxu0 0.0
    %3177 = vmatpush1.msra.mxu0 0.0
    %3178 = vmatprep.subr.mxu0 0.0
    %3179 = vmatpush1.msra.mxu0 0.0
    %3180 = vmatprep.subr.mxu0 0.0
    %3181 = vmatpush1.msra.mxu0 0.0
    %3182 = vmatprep.subr.mxu0 0.0
    %3183 = vmatpush1.msra.mxu0 0.0
    %3184 = vmatprep.subr.mxu0 0.0
    %3185 = vmatpush1.msra.mxu0 0.0
    %3186 = vmatprep.subr.mxu0 0.0
    %3187 = vmatpush1.msra.mxu0 0.0
    %3188 = vmatprep.subr.mxu0 0.0
    %3189 = vmatpush1.msra.mxu0 0.0
    %3190 = vmatprep.subr.mxu0 0.0
    %3191 = vmatpush1.msra.mxu0 0.0
    %3192 = vmatprep.subr.mxu0 0.0
    %3193 = vmatpush1.msra.mxu0 0.0
    %3194 = vmatprep.subr.mxu0 0.0
    %3195 = vmatpush1.msra.mxu0 0.0
    %3196 = vmatprep.subr.mxu0 0.0
    %3197 = vmatpush1.msra.mxu0 0.0
    %3198 = vmatprep.mubr.f32.mxu0 0.0
    %3199 = vmatmul.mubr.f32.gmra.mrb[0].mxu0 %v3127
    %v3200 = vpop.f32.mrb[0].mxu0
    %v3201 = vadd.f32 0.0, %v3200
    %v3202 = vpop.f32.mrb[0].mxu0
    %3203 = vmatprep.mubr.f32.mxu0 0.0
    %3204 = vmatmul.mubr.f32.gmra.mrb[0].mxu0 %v3130
    %v3205 = vpop.f32.mrb[0].mxu0
    %v3206 = vadd.f32 0.0, %v3205
    %v3207 = vpop.f32.mrb[0].mxu0
    %3208 = vdwg.mxu0
    %3209 = vrot.lane.b32.xlu0 %v2595, 104
    %v3210 = vpop.permute.xlu0 %3209
    %3211 = vrot.lane.b32.xlu0 %v2600, 104
    %v3212 = vpop.permute.xlu0 %3211
    %3213 = vrot.lane.b32.xlu0 %v2595, 72
    %v3214 = vpop.permute.xlu0 %3213
    %3215 = vrot.lane.b32.xlu0 %v2600, 72
    %v3216 = vpop.permute.xlu0 %3215
    %v3217 = vsel %vm299, %v3210, 0
    %v3219 = vsel %vm299, %v3212, 0
    %v3221 = vsel %vm299, %v3214, 0
    %v3223 = vsel %vm299, %v3216, 0
    %3225 = vmatprep.subr.mxu0 0.0
    %3226 = vmatpush1.xpose.msra.mxu0 %v3221
    %3227 = vmatprep.subr.mxu0 0.0
    %3228 = vmatpush1.xpose.msra.mxu0 %v3223
    %3229 = vmatprep.subr.mxu0 0.0
    %3230 = vmatpush1.xpose.msra.mxu0 0.0
    %3231 = vmatprep.subr.mxu0 0.0
    %3232 = vmatpush1.xpose.msra.mxu0 0.0
    %3233 = vmatprep.subr.mxu0 0.0
    %3234 = vmatpush1.xpose.msra.mxu0 0.0
    %3235 = vmatprep.subr.mxu0 0.0
    %3236 = vmatpush1.xpose.msra.mxu0 0.0
    %3237 = vmatprep.subr.mxu0 0.0
    %3238 = vmatpush1.xpose.msra.mxu0 0.0
    %3239 = vmatprep.subr.mxu0 0.0
    %3240 = vmatpush1.xpose.msra.mxu0 0.0
    %3241 = vmatprep.subr.mxu0 0.0
    %3242 = vmatpush1.xpose.msra.mxu0 0.0
    %3243 = vmatprep.subr.mxu0 0.0
    %3244 = vmatpush1.xpose.msra.mxu0 0.0
    %3245 = vmatprep.subr.mxu0 0.0
    %3246 = vmatpush1.xpose.msra.mxu0 0.0
    %3247 = vmatprep.subr.mxu0 0.0
    %3248 = vmatpush1.xpose.msra.mxu0 0.0
    %3249 = vmatprep.subr.mxu0 0.0
    %3250 = vmatpush1.xpose.msra.mxu0 0.0
    %3251 = vmatprep.subr.mxu0 0.0
    %3252 = vmatpush1.xpose.msra.mxu0 0.0
    %3253 = vmatprep.subr.mxu0 0.0
    %3254 = vmatpush1.xpose.msra.mxu0 0.0
    %3255 = vmatprep.subr.mxu0 0.0
    %3256 = vmatpush1.xpose.msra.mxu0 0.0
    %3257 = vmatprep.subr.mxu0 0.0
    %3258 = vmatpush1.xpose.msra.mxu0 0.0
    %3259 = vmatprep.subr.mxu0 0.0
    %3260 = vmatpush1.xpose.msra.mxu0 0.0
    %3261 = vmatprep.subr.mxu0 0.0
    %3262 = vmatpush1.xpose.msra.mxu0 0.0
    %3263 = vmatprep.subr.mxu0 0.0
    %3264 = vmatpush1.xpose.msra.mxu0 0.0
    %3265 = vmatprep.subr.mxu0 0.0
    %3266 = vmatpush1.xpose.msra.mxu0 0.0
    %3267 = vmatprep.subr.mxu0 0.0
    %3268 = vmatpush1.xpose.msra.mxu0 0.0
    %3269 = vmatprep.subr.mxu0 0.0
    %3270 = vmatpush1.xpose.msra.mxu0 0.0
    %3271 = vmatprep.subr.mxu0 0.0
    %3272 = vmatpush1.xpose.msra.mxu0 0.0
    %3273 = vmatprep.subr.mxu0 0.0
    %3274 = vmatpush1.xpose.msra.mxu0 0.0
    %3275 = vmatprep.subr.mxu0 0.0
    %3276 = vmatpush1.xpose.msra.mxu0 0.0
    %3277 = vmatprep.subr.mxu0 0.0
    %3278 = vmatpush1.xpose.msra.mxu0 0.0
    %3279 = vmatprep.subr.mxu0 0.0
    %3280 = vmatpush1.xpose.msra.mxu0 0.0
    %3281 = vmatprep.subr.mxu0 0.0
    %3282 = vmatpush1.xpose.msra.mxu0 0.0
    %3283 = vmatprep.subr.mxu0 0.0
    %3284 = vmatpush1.xpose.msra.mxu0 0.0
    %3285 = vmatprep.subr.mxu0 0.0
    %3286 = vmatpush1.xpose.msra.mxu0 0.0
    %3287 = vmatprep.subr.mxu0 0.0
    %3288 = vmatpush1.xpose.msra.mxu0 0.0
    %3289 = vmatprep.mubr.f32.mxu0 0.0
    %3290 = vmatmul.mubr.f32.gmra.mrb[0].mxu0 %v3217
    %v3291 = vpop.f32.mrb[0].mxu0
    %v3292 = vadd.f32 0.0, %v3291
    %v3293 = vpop.f32.mrb[0].mxu0
    %3294 = vmatprep.mubr.f32.mxu0 0.0
    %3295 = vmatmul.mubr.f32.gmra.mrb[0].mxu0 %v3219
    %v3296 = vpop.f32.mrb[0].mxu0
    %v3297 = vadd.f32 0.0, %v3296
    %v3298 = vpop.f32.mrb[0].mxu0
    %3299 = vdwg.mxu0
    %v3300 = vsel %vm383, %v3292, -inf
    %3301 = vmax.xlane.f32.xlu0 %v3300
    %v3302 = vpop.xlane.xlu0 %3301
    %v3303 = vsel %vm387, %v3297, -inf
    %3304 = vmax.xlane.f32.xlu0 %v3303
    %v3305 = vpop.xlane.xlu0 %3304
    %v3306 = vsub.f32 %v3292, %v3302
    %v3307 = vsub.f32 %v3297, %v3305
    %v3308 = vmul.f32 %v3306, 1.442695
    %v3309 = vpow.pop %v3308
    %v3310 = vmul.f32 %v3307, 1.442695
    %v3311 = vpow.pop %v3310
    %v3312 = vsel %vm383, %v3309, 0.0
    %3313 = vadd.xlane.f32.xlu0 %v3312
    %v3314 = vpop.xlane.xlu0 %3313
    %v3315 = vsel %vm387, %v3311, 0.0
    %3316 = vadd.xlane.f32.xlu0 %v3315
    %v3317 = vpop.xlane.xlu0 %3316
    %v3318 = vrcp.pop %v3314
    %v3319 = vrcp.pop %v3317
    %v3320 = vmul.f32 %v3309, %v3318
    %v3321 = vmul.f32 %v3311, %v3319
    %3322 = vrot.lane.b32.xlu0 %v2595, 40
    %v3323 = vpop.permute.xlu0 %3322
    %3324 = vrot.lane.b32.xlu0 %v2600, 40
    %v3325 = vpop.permute.xlu0 %3324
    %v3328 = vsel %vm383, %v3320, 0
    %v3331 = vsel %vm383, %v3321, 0
    %v3333 = vsel %vm418, %v3325, 0
    %3335 = vmatprep.subr.mxu0 0.0
    %3336 = vmatpush1.msra.mxu0 %v3323
    %3337 = vmatprep.subr.mxu0 0.0
    %3338 = vmatpush1.msra.mxu0 %v3333
    %3339 = vmatprep.subr.mxu0 0.0
    %3340 = vmatpush1.msra.mxu0 0.0
    %3341 = vmatprep.subr.mxu0 0.0
    %3342 = vmatpush1.msra.mxu0 0.0
    %3343 = vmatprep.subr.mxu0 0.0
    %3344 = vmatpush1.msra.mxu0 0.0
    %3345 = vmatprep.subr.mxu0 0.0
    %3346 = vmatpush1.msra.mxu0 0.0
    %3347 = vmatprep.subr.mxu0 0.0
    %3348 = vmatpush1.msra.mxu0 0.0
    %3349 = vmatprep.subr.mxu0 0.0
    %3350 = vmatpush1.msra.mxu0 0.0
    %3351 = vmatprep.subr.mxu0 0.0
    %3352 = vmatpush1.msra.mxu0 0.0
    %3353 = vmatprep.subr.mxu0 0.0
    %3354 = vmatpush1.msra.mxu0 0.0
    %3355 = vmatprep.subr.mxu0 0.0
    %3356 = vmatpush1.msra.mxu0 0.0
    %3357 = vmatprep.subr.mxu0 0.0
    %3358 = vmatpush1.msra.mxu0 0.0
    %3359 = vmatprep.subr.mxu0 0.0
    %3360 = vmatpush1.msra.mxu0 0.0
    %3361 = vmatprep.subr.mxu0 0.0
    %3362 = vmatpush1.msra.mxu0 0.0
    %3363 = vmatprep.subr.mxu0 0.0
    %3364 = vmatpush1.msra.mxu0 0.0
    %3365 = vmatprep.subr.mxu0 0.0
    %3366 = vmatpush1.msra.mxu0 0.0
    %3367 = vmatprep.subr.mxu0 0.0
    %3368 = vmatpush1.msra.mxu0 0.0
    %3369 = vmatprep.subr.mxu0 0.0
    %3370 = vmatpush1.msra.mxu0 0.0
    %3371 = vmatprep.subr.mxu0 0.0
    %3372 = vmatpush1.msra.mxu0 0.0
    %3373 = vmatprep.subr.mxu0 0.0
    %3374 = vmatpush1.msra.mxu0 0.0
    %3375 = vmatprep.subr.mxu0 0.0
    %3376 = vmatpush1.msra.mxu0 0.0
    %3377 = vmatprep.subr.mxu0 0.0
    %3378 = vmatpush1.msra.mxu0 0.0
    %3379 = vmatprep.subr.mxu0 0.0
    %3380 = vmatpush1.msra.mxu0 0.0
    %3381 = vmatprep.subr.mxu0 0.0
    %3382 = vmatpush1.msra.mxu0 0.0
    %3383 = vmatprep.subr.mxu0 0.0
    %3384 = vmatpush1.msra.mxu0 0.0
    %3385 = vmatprep.subr.mxu0 0.0
    %3386 = vmatpush1.msra.mxu0 0.0
    %3387 = vmatprep.subr.mxu0 0.0
    %3388 = vmatpush1.msra.mxu0 0.0
    %3389 = vmatprep.subr.mxu0 0.0
    %3390 = vmatpush1.msra.mxu0 0.0
    %3391 = vmatprep.subr.mxu0 0.0
    %3392 = vmatpush1.msra.mxu0 0.0
    %3393 = vmatprep.subr.mxu0 0.0
    %3394 = vmatpush1.msra.mxu0 0.0
    %3395 = vmatprep.subr.mxu0 0.0
    %3396 = vmatpush1.msra.mxu0 0.0
    %3397 = vmatprep.subr.mxu0 0.0
    %3398 = vmatpush1.msra.mxu0 0.0
    %3399 = vmatprep.mubr.f32.mxu0 0.0
    %3400 = vmatmul.mubr.f32.gmra.mrb[0].mxu0 %v3328
    %v3401 = vpop.f32.mrb[0].mxu0
    %v3402 = vadd.f32 0.0, %v3401
    %v3403 = vpop.f32.mrb[0].mxu0
    %3404 = vmatprep.mubr.f32.mxu0 0.0
    %3405 = vmatmul.mubr.f32.gmra.mrb[0].mxu0 %v3331
    %v3406 = vpop.f32.mrb[0].mxu0
    %v3407 = vadd.f32 0.0, %v3406
    %v3408 = vpop.f32.mrb[0].mxu0
    %3409 = vdwg.mxu0
    %3412 = vrot.lane.b32.xlu0 %v3000, 8
    %v3413 = vpop.permute.xlu0 %3412
    %3414 = vrot.lane.b32.xlu0 %v3005, 8
    %v3415 = vpop.permute.xlu0 %3414
    %3420 = vrot.lane.b32.xlu0 %v3201, 16
    %v3421 = vpop.permute.xlu0 %3420
    %3422 = vrot.lane.b32.xlu0 %v3206, 16
    %v3423 = vpop.permute.xlu0 %3422
    %3428 = vrot.lane.b32.xlu0 %v3402, 24
    %v3429 = vpop.permute.xlu0 %3428
    %3430 = vrot.lane.b32.xlu0 %v3407, 24
    %v3431 = vpop.permute.xlu0 %3430
    %v3434 = vsel %vm299, %v2799, %v3413
    %v3435 = vsel %vm299, %v2804, %v3415
    %v3436 = vsel %vm1125, %v3434, %v3421
    %v3437 = vsel %vm1125, %v3435, %v3423
    %v3438 = vsel %vm1128, %v3436, %v3429
    %v3439 = vsel %vm1128, %v3437, %v3431
    %s3440 = scalar_lea.vmem %s6, 32
    %v3441 = vld [vmem:[%s3440] sm:$0xff]
    %v3442 = vld [vmem:[%s3440 + $0x8] sm:$0xff]
    %v3443 = vld [vmem:[%s3440 + $0x10] sm:$0xff]
    %v3444 = vld [vmem:[%s3440 + $0x18] sm:$0xff]
    %s3445 = scalar_lea.vmem %s7, 1
    %v3446 = vld [vmem:[%s3445] sm:$0x1]
    %v3448 = vlaneseq
    %v3449 = vshrl.u32 %v3448, 7
    %v3450 = vsub.s32 0, %v3449
    %v3451 = vrot.slane %v3446, %v3450
    %v3454 = vsel %vm129, %v3438, 0
    %v3457 = vsel %vm129, %v3439, 0
    %3459 = vmatprep.subr.mxu0 0.0
    %3460 = vmatpush1.msra.mxu0 %v3441
    %3461 = vmatprep.subr.mxu0 0.0
    %3462 = vmatpush1.msra.mxu0 %v3442
    %3463 = vmatprep.subr.mxu0 0.0
    %3464 = vmatpush1.msra.mxu0 %v3443
    %3465 = vmatprep.subr.mxu0 0.0
    %3466 = vmatpush1.msra.mxu0 %v3444
    %3467 = vmatprep.subr.mxu0 0.0
    %3468 = vmatpush1.msra.mxu0 0.0
    %3469 = vmatprep.subr.mxu0 0.0
    %3470 = vmatpush1.msra.mxu0 0.0
    %3471 = vmatprep.subr.mxu0 0.0
    %3472 = vmatpush1.msra.mxu0 0.0
    %3473 = vmatprep.subr.mxu0 0.0
    %3474 = vmatpush1.msra.mxu0 0.0
    %3475 = vmatprep.subr.mxu0 0.0
    %3476 = vmatpush1.msra.mxu0 0.0
    %3477 = vmatprep.subr.mxu0 0.0
    %3478 = vmatpush1.msra.mxu0 0.0
    %3479 = vmatprep.subr.mxu0 0.0
    %3480 = vmatpush1.msra.mxu0 0.0
    %3481 = vmatprep.subr.mxu0 0.0
    %3482 = vmatpush1.msra.mxu0 0.0
    %3483 = vmatprep.subr.mxu0 0.0
    %3484 = vmatpush1.msra.mxu0 0.0
    %3485 = vmatprep.subr.mxu0 0.0
    %3486 = vmatpush1.msra.mxu0 0.0
    %3487 = vmatprep.subr.mxu0 0.0
    %3488 = vmatpush1.msra.mxu0 0.0
    %3489 = vmatprep.subr.mxu0 0.0
    %3490 = vmatpush1.msra.mxu0 0.0
    %3491 = vmatprep.subr.mxu0 0.0
    %3492 = vmatpush1.msra.mxu0 0.0
    %3493 = vmatprep.subr.mxu0 0.0
    %3494 = vmatpush1.msra.mxu0 0.0
    %3495 = vmatprep.subr.mxu0 0.0
    %3496 = vmatpush1.msra.mxu0 0.0
    %3497 = vmatprep.subr.mxu0 0.0
    %3498 = vmatpush1.msra.mxu0 0.0
    %3499 = vmatprep.subr.mxu0 0.0
    %3500 = vmatpush1.msra.mxu0 0.0
    %3501 = vmatprep.subr.mxu0 0.0
    %3502 = vmatpush1.msra.mxu0 0.0
    %3503 = vmatprep.subr.mxu0 0.0
    %3504 = vmatpush1.msra.mxu0 0.0
    %3505 = vmatprep.subr.mxu0 0.0
    %3506 = vmatpush1.msra.mxu0 0.0
    %3507 = vmatprep.subr.mxu0 0.0
    %3508 = vmatpush1.msra.mxu0 0.0
    %3509 = vmatprep.subr.mxu0 0.0
    %3510 = vmatpush1.msra.mxu0 0.0
    %3511 = vmatprep.subr.mxu0 0.0
    %3512 = vmatpush1.msra.mxu0 0.0
    %3513 = vmatprep.subr.mxu0 0.0
    %3514 = vmatpush1.msra.mxu0 0.0
    %3515 = vmatprep.subr.mxu0 0.0
    %3516 = vmatpush1.msra.mxu0 0.0
    %3517 = vmatprep.subr.mxu0 0.0
    %3518 = vmatpush1.msra.mxu0 0.0
    %3519 = vmatprep.subr.mxu0 0.0
    %3520 = vmatpush1.msra.mxu0 0.0
    %3521 = vmatprep.subr.mxu0 0.0
    %3522 = vmatpush1.msra.mxu0 0.0
    %3523 = vmatprep.mubr.f32.mxu0 0.0
    %3524 = vmatmul.mubr.f32.gmra.mrb[0].mxu0 %v3454
    %v3525 = vpop.f32.mrb[0].mxu0
    %v3526 = vadd.f32 %v3451, %v3525
    %v3527 = vpop.f32.mrb[0].mxu0
    %3528 = vmatprep.mubr.f32.mxu0 0.0
    %3529 = vmatmul.mubr.f32.gmra.mrb[0].mxu0 %v3457
    %v3530 = vpop.f32.mrb[0].mxu0
    %v3531 = vadd.f32 %v3451, %v3530
    %v3532 = vpop.f32.mrb[0].mxu0
    %3533 = vdwg.mxu0
    %v3534 = vadd.f32 %v2447, %v3526
    %v3535 = vadd.f32 %v2448, %v3531
    %3536 = vst.msk [vmem:[#allocation2] sm:$0xff] %vm129, %v3534
    %3537 = vst.msk [vmem:[#allocation2 + $0x8] sm:$0x1] %vm118, %v3535
    %v3539 = vrot.slane %v2600, 1
    %v3540 = vrot.slane %v2605, 1
    %v3541 = vsel %vm123, %v3539, %v3540
    %3542 = vrot.lane.b32.xlu0 %v3541, 96
    %v3543 = vpop.permute.xlu0 %3542
    %3544 = vrot.lane.b32.xlu0 %v3540, 96
    %v3545 = vpop.permute.xlu0 %3544
    %v3546 = vsel %vm299, %v3541, 0
    %v3548 = vsel %vm299, %v3540, 0
    %v3550 = vsel %vm299, %v3543, 0
    %v3552 = vsel %vm299, %v3545, 0
    %3554 = vmatprep.subr.mxu0 0.0
    %3555 = vmatpush1.xpose.msra.mxu0 %v3550
    %3556 = vmatprep.subr.mxu0 0.0
    %3557 = vmatpush1.xpose.msra.mxu0 %v3552
    %3558 = vmatprep.subr.mxu0 0.0
    %3559 = vmatpush1.xpose.msra.mxu0 0.0
    %3560 = vmatprep.subr.mxu0 0.0
    %3561 = vmatpush1.xpose.msra.mxu0 0.0
    %3562 = vmatprep.subr.mxu0 0.0
    %3563 = vmatpush1.xpose.msra.mxu0 0.0
    %3564 = vmatprep.subr.mxu0 0.0
    %3565 = vmatpush1.xpose.msra.mxu0 0.0
    %3566 = vmatprep.subr.mxu0 0.0
    %3567 = vmatpush1.xpose.msra.mxu0 0.0
    %3568 = vmatprep.subr.mxu0 0.0
    %3569 = vmatpush1.xpose.msra.mxu0 0.0
    %3570 = vmatprep.subr.mxu0 0.0
    %3571 = vmatpush1.xpose.msra.mxu0 0.0
    %3572 = vmatprep.subr.mxu0 0.0
    %3573 = vmatpush1.xpose.msra.mxu0 0.0
    %3574 = vmatprep.subr.mxu0 0.0
    %3575 = vmatpush1.xpose.msra.mxu0 0.0
    %3576 = vmatprep.subr.mxu0 0.0
    %3577 = vmatpush1.xpose.msra.mxu0 0.0
    %3578 = vmatprep.subr.mxu0 0.0
    %3579 = vmatpush1.xpose.msra.mxu0 0.0
    %3580 = vmatprep.subr.mxu0 0.0
    %3581 = vmatpush1.xpose.msra.mxu0 0.0
    %3582 = vmatprep.subr.mxu0 0.0
    %3583 = vmatpush1.xpose.msra.mxu0 0.0
    %3584 = vmatprep.subr.mxu0 0.0
    %3585 = vmatpush1.xpose.msra.mxu0 0.0
    %3586 = vmatprep.subr.mxu0 0.0
    %3587 = vmatpush1.xpose.msra.mxu0 0.0
    %3588 = vmatprep.subr.mxu0 0.0
    %3589 = vmatpush1.xpose.msra.mxu0 0.0
    %3590 = vmatprep.subr.mxu0 0.0
    %3591 = vmatpush1.xpose.msra.mxu0 0.0
    %3592 = vmatprep.subr.mxu0 0.0
    %3593 = vmatpush1.xpose.msra.mxu0 0.0
    %3594 = vmatprep.subr.mxu0 0.0
    %3595 = vmatpush1.xpose.msra.mxu0 0.0
    %3596 = vmatprep.subr.mxu0 0.0
    %3597 = vmatpush1.xpose.msra.mxu0 0.0
    %3598 = vmatprep.subr.mxu0 0.0
    %3599 = vmatpush1.xpose.msra.mxu0 0.0
    %3600 = vmatprep.subr.mxu0 0.0
    %3601 = vmatpush1.xpose.msra.mxu0 0.0
    %3602 = vmatprep.subr.mxu0 0.0
    %3603 = vmatpush1.xpose.msra.mxu0 0.0
    %3604 = vmatprep.subr.mxu0 0.0
    %3605 = vmatpush1.xpose.msra.mxu0 0.0
    %3606 = vmatprep.subr.mxu0 0.0
    %3607 = vmatpush1.xpose.msra.mxu0 0.0
    %3608 = vmatprep.subr.mxu0 0.0
    %3609 = vmatpush1.xpose.msra.mxu0 0.0
    %3610 = vmatprep.subr.mxu0 0.0
    %3611 = vmatpush1.xpose.msra.mxu0 0.0
    %3612 = vmatprep.subr.mxu0 0.0
    %3613 = vmatpush1.xpose.msra.mxu0 0.0
    %3614 = vmatprep.subr.mxu0 0.0
    %3615 = vmatpush1.xpose.msra.mxu0 0.0
    %3616 = vmatprep.subr.mxu0 0.0
    %3617 = vmatpush1.xpose.msra.mxu0 0.0
    %3618 = vmatprep.mubr.f32.mxu0 0.0
    %3619 = vmatmul.mubr.f32.gmra.mrb[0].mxu0 %v3546
    %v3620 = vpop.f32.mrb[0].mxu0
    %v3621 = vadd.f32 0.0, %v3620
    %v3622 = vpop.f32.mrb[0].mxu0
    %3623 = vmatprep.mubr.f32.mxu0 0.0
    %3624 = vmatmul.mubr.f32.gmra.mrb[0].mxu0 %v3548
    %v3625 = vpop.f32.mrb[0].mxu0
    %v3626 = vadd.f32 0.0, %v3625
    %v3627 = vpop.f32.mrb[0].mxu0
    %3628 = vdwg.mxu0
    %v3629 = vsel %vm383, %v3621, -inf
    %3630 = vmax.xlane.f32.xlu0 %v3629
    %v3631 = vpop.xlane.xlu0 %3630
    %v3632 = vsel %vm387, %v3626, -inf
    %3633 = vmax.xlane.f32.xlu0 %v3632
    %v3634 = vpop.xlane.xlu0 %3633
    %v3635 = vsub.f32 %v3621, %v3631
    %v3636 = vsub.f32 %v3626, %v3634
    %v3637 = vmul.f32 %v3635, 1.442695
    %v3638 = vpow.pop %v3637
    %v3639 = vmul.f32 %v3636, 1.442695
    %v3640 = vpow.pop %v3639
    %v3641 = vsel %vm383, %v3638, 0.0
    %3642 = vadd.xlane.f32.xlu0 %v3641
    %v3643 = vpop.xlane.xlu0 %3642
    %v3644 = vsel %vm387, %v3640, 0.0
    %3645 = vadd.xlane.f32.xlu0 %v3644
    %v3646 = vpop.xlane.xlu0 %3645
    %v3647 = vrcp.pop %v3643
    %v3648 = vrcp.pop %v3646
    %v3649 = vmul.f32 %v3638, %v3647
    %v3650 = vmul.f32 %v3640, %v3648
    %3651 = vrot.lane.b32.xlu0 %v3541, 64
    %v3652 = vpop.permute.xlu0 %3651
    %3653 = vrot.lane.b32.xlu0 %v3540, 64
    %v3654 = vpop.permute.xlu0 %3653
    %v3657 = vsel %vm383, %v3649, 0
    %v3660 = vsel %vm383, %v3650, 0
    %v3662 = vsel %vm418, %v3654, 0
    %3664 = vmatprep.subr.mxu0 0.0
    %3665 = vmatpush1.msra.mxu0 %v3652
    %3666 = vmatprep.subr.mxu0 0.0
    %3667 = vmatpush1.msra.mxu0 %v3662
    %3668 = vmatprep.subr.mxu0 0.0
    %3669 = vmatpush1.msra.mxu0 0.0
    %3670 = vmatprep.subr.mxu0 0.0
    %3671 = vmatpush1.msra.mxu0 0.0
    %3672 = vmatprep.subr.mxu0 0.0
    %3673 = vmatpush1.msra.mxu0 0.0
    %3674 = vmatprep.subr.mxu0 0.0
    %3675 = vmatpush1.msra.mxu0 0.0
    %3676 = vmatprep.subr.mxu0 0.0
    %3677 = vmatpush1.msra.mxu0 0.0
    %3678 = vmatprep.subr.mxu0 0.0
    %3679 = vmatpush1.msra.mxu0 0.0
    %3680 = vmatprep.subr.mxu0 0.0
    %3681 = vmatpush1.msra.mxu0 0.0
    %3682 = vmatprep.subr.mxu0 0.0
    %3683 = vmatpush1.msra.mxu0 0.0
    %3684 = vmatprep.subr.mxu0 0.0
    %3685 = vmatpush1.msra.mxu0 0.0
    %3686 = vmatprep.subr.mxu0 0.0
    %3687 = vmatpush1.msra.mxu0 0.0
    %3688 = vmatprep.subr.mxu0 0.0
    %3689 = vmatpush1.msra.mxu0 0.0
    %3690 = vmatprep.subr.mxu0 0.0
    %3691 = vmatpush1.msra.mxu0 0.0
    %3692 = vmatprep.subr.mxu0 0.0
    %3693 = vmatpush1.msra.mxu0 0.0
    %3694 = vmatprep.subr.mxu0 0.0
    %3695 = vmatpush1.msra.mxu0 0.0
    %3696 = vmatprep.subr.mxu0 0.0
    %3697 = vmatpush1.msra.mxu0 0.0
    %3698 = vmatprep.subr.mxu0 0.0
    %3699 = vmatpush1.msra.mxu0 0.0
    %3700 = vmatprep.subr.mxu0 0.0
    %3701 = vmatpush1.msra.mxu0 0.0
    %3702 = vmatprep.subr.mxu0 0.0
    %3703 = vmatpush1.msra.mxu0 0.0
    %3704 = vmatprep.subr.mxu0 0.0
    %3705 = vmatpush1.msra.mxu0 0.0
    %3706 = vmatprep.subr.mxu0 0.0
    %3707 = vmatpush1.msra.mxu0 0.0
    %3708 = vmatprep.subr.mxu0 0.0
    %3709 = vmatpush1.msra.mxu0 0.0
    %3710 = vmatprep.subr.mxu0 0.0
    %3711 = vmatpush1.msra.mxu0 0.0
    %3712 = vmatprep.subr.mxu0 0.0
    %3713 = vmatpush1.msra.mxu0 0.0
    %3714 = vmatprep.subr.mxu0 0.0
    %3715 = vmatpush1.msra.mxu0 0.0
    %3716 = vmatprep.subr.mxu0 0.0
    %3717 = vmatpush1.msra.mxu0 0.0
    %3718 = vmatprep.subr.mxu0 0.0
    %3719 = vmatpush1.msra.mxu0 0.0
    %3720 = vmatprep.subr.mxu0 0.0
    %3721 = vmatpush1.msra.mxu0 0.0
    %3722 = vmatprep.subr.mxu0 0.0
    %3723 = vmatpush1.msra.mxu0 0.0
    %3724 = vmatprep.subr.mxu0 0.0
    %3725 = vmatpush1.msra.mxu0 0.0
    %3726 = vmatprep.subr.mxu0 0.0
    %3727 = vmatpush1.msra.mxu0 0.0
    %3728 = vmatprep.mubr.f32.mxu0 0.0
    %3729 = vmatmul.mubr.f32.gmra.mrb[0].mxu0 %v3657
    %v3730 = vpop.f32.mrb[0].mxu0
    %v3731 = vadd.f32 0.0, %v3730
    %v3732 = vpop.f32.mrb[0].mxu0
    %3733 = vmatprep.mubr.f32.mxu0 0.0
    %3734 = vmatmul.mubr.f32.gmra.mrb[0].mxu0 %v3660
    %v3735 = vpop.f32.mrb[0].mxu0
    %v3736 = vadd.f32 0.0, %v3735
    %v3737 = vpop.f32.mrb[0].mxu0
    %3738 = vdwg.mxu0
    %3739 = vrot.lane.b32.xlu0 %v3541, 120
    %v3740 = vpop.permute.xlu0 %3739
    %3741 = vrot.lane.b32.xlu0 %v3540, 120
    %v3742 = vpop.permute.xlu0 %3741
    %3743 = vrot.lane.b32.xlu0 %v3541, 88
    %v3744 = vpop.permute.xlu0 %3743
    %3745 = vrot.lane.b32.xlu0 %v3540, 88
    %v3746 = vpop.permute.xlu0 %3745
    %v3747 = vsel %vm299, %v3740, 0
    %v3749 = vsel %vm299, %v3742, 0
    %v3751 = vsel %vm299, %v3744, 0
    %v3753 = vsel %vm299, %v3746, 0
    %3755 = vmatprep.subr.mxu0 0.0
    %3756 = vmatpush1.xpose.msra.mxu0 %v3751
    %3757 = vmatprep.subr.mxu0 0.0
    %3758 = vmatpush1.xpose.msra.mxu0 %v3753
    %3759 = vmatprep.subr.mxu0 0.0
    %3760 = vmatpush1.xpose.msra.mxu0 0.0
    %3761 = vmatprep.subr.mxu0 0.0
    %3762 = vmatpush1.xpose.msra.mxu0 0.0
    %3763 = vmatprep.subr.mxu0 0.0
    %3764 = vmatpush1.xpose.msra.mxu0 0.0
    %3765 = vmatprep.subr.mxu0 0.0
    %3766 = vmatpush1.xpose.msra.mxu0 0.0
    %3767 = vmatprep.subr.mxu0 0.0
    %3768 = vmatpush1.xpose.msra.mxu0 0.0
    %3769 = vmatprep.subr.mxu0 0.0
    %3770 = vmatpush1.xpose.msra.mxu0 0.0
    %3771 = vmatprep.subr.mxu0 0.0
    %3772 = vmatpush1.xpose.msra.mxu0 0.0
    %3773 = vmatprep.subr.mxu0 0.0
    %3774 = vmatpush1.xpose.msra.mxu0 0.0
    %3775 = vmatprep.subr.mxu0 0.0
    %3776 = vmatpush1.xpose.msra.mxu0 0.0
    %3777 = vmatprep.subr.mxu0 0.0
    %3778 = vmatpush1.xpose.msra.mxu0 0.0
    %3779 = vmatprep.subr.mxu0 0.0
    %3780 = vmatpush1.xpose.msra.mxu0 0.0
    %3781 = vmatprep.subr.mxu0 0.0
    %3782 = vmatpush1.xpose.msra.mxu0 0.0
    %3783 = vmatprep.subr.mxu0 0.0
    %3784 = vmatpush1.xpose.msra.mxu0 0.0
    %3785 = vmatprep.subr.mxu0 0.0
    %3786 = vmatpush1.xpose.msra.mxu0 0.0
    %3787 = vmatprep.subr.mxu0 0.0
    %3788 = vmatpush1.xpose.msra.mxu0 0.0
    %3789 = vmatprep.subr.mxu0 0.0
    %3790 = vmatpush1.xpose.msra.mxu0 0.0
    %3791 = vmatprep.subr.mxu0 0.0
    %3792 = vmatpush1.xpose.msra.mxu0 0.0
    %3793 = vmatprep.subr.mxu0 0.0
    %3794 = vmatpush1.xpose.msra.mxu0 0.0
    %3795 = vmatprep.subr.mxu0 0.0
    %3796 = vmatpush1.xpose.msra.mxu0 0.0
    %3797 = vmatprep.subr.mxu0 0.0
    %3798 = vmatpush1.xpose.msra.mxu0 0.0
    %3799 = vmatprep.subr.mxu0 0.0
    %3800 = vmatpush1.xpose.msra.mxu0 0.0
    %3801 = vmatprep.subr.mxu0 0.0
    %3802 = vmatpush1.xpose.msra.mxu0 0.0
    %3803 = vmatprep.subr.mxu0 0.0
    %3804 = vmatpush1.xpose.msra.mxu0 0.0
    %3805 = vmatprep.subr.mxu0 0.0
    %3806 = vmatpush1.xpose.msra.mxu0 0.0
    %3807 = vmatprep.subr.mxu0 0.0
    %3808 = vmatpush1.xpose.msra.mxu0 0.0
    %3809 = vmatprep.subr.mxu0 0.0
    %3810 = vmatpush1.xpose.msra.mxu0 0.0
    %3811 = vmatprep.subr.mxu0 0.0
    %3812 = vmatpush1.xpose.msra.mxu0 0.0
    %3813 = vmatprep.subr.mxu0 0.0
    %3814 = vmatpush1.xpose.msra.mxu0 0.0
    %3815 = vmatprep.subr.mxu0 0.0
    %3816 = vmatpush1.xpose.msra.mxu0 0.0
    %3817 = vmatprep.subr.mxu0 0.0
    %3818 = vmatpush1.xpose.msra.mxu0 0.0
    %3819 = vmatprep.mubr.f32.mxu0 0.0
    %3820 = vmatmul.mubr.f32.gmra.mrb[0].mxu0 %v3747
    %v3821 = vpop.f32.mrb[0].mxu0
    %v3822 = vadd.f32 0.0, %v3821
    %v3823 = vpop.f32.mrb[0].mxu0
    %3824 = vmatprep.mubr.f32.mxu0 0.0
    %3825 = vmatmul.mubr.f32.gmra.mrb[0].mxu0 %v3749
    %v3826 = vpop.f32.mrb[0].mxu0
    %v3827 = vadd.f32 0.0, %v3826
    %v3828 = vpop.f32.mrb[0].mxu0
    %3829 = vdwg.mxu0
    %v3830 = vsel %vm383, %v3822, -inf
    %3831 = vmax.xlane.f32.xlu0 %v3830
    %v3832 = vpop.xlane.xlu0 %3831
    %v3833 = vsel %vm387, %v3827, -inf
    %3834 = vmax.xlane.f32.xlu0 %v3833
    %v3835 = vpop.xlane.xlu0 %3834
    %v3836 = vsub.f32 %v3822, %v3832
    %v3837 = vsub.f32 %v3827, %v3835
    %v3838 = vmul.f32 %v3836, 1.442695
    %v3839 = vpow.pop %v3838
    %v3840 = vmul.f32 %v3837, 1.442695
    %v3841 = vpow.pop %v3840
    %v3842 = vsel %vm383, %v3839, 0.0
    %3843 = vadd.xlane.f32.xlu0 %v3842
    %v3844 = vpop.xlane.xlu0 %3843
    %v3845 = vsel %vm387, %v3841, 0.0
    %3846 = vadd.xlane.f32.xlu0 %v3845
    %v3847 = vpop.xlane.xlu0 %3846
    %v3848 = vrcp.pop %v3844
    %v3849 = vrcp.pop %v3847
    %v3850 = vmul.f32 %v3839, %v3848
    %v3851 = vmul.f32 %v3841, %v3849
    %3852 = vrot.lane.b32.xlu0 %v3541, 56
    %v3853 = vpop.permute.xlu0 %3852
    %3854 = vrot.lane.b32.xlu0 %v3540, 56
    %v3855 = vpop.permute.xlu0 %3854
    %v3858 = vsel %vm383, %v3850, 0
    %v3861 = vsel %vm383, %v3851, 0
    %v3863 = vsel %vm418, %v3855, 0
    %3865 = vmatprep.subr.mxu0 0.0
    %3866 = vmatpush1.msra.mxu0 %v3853
    %3867 = vmatprep.subr.mxu0 0.0
    %3868 = vmatpush1.msra.mxu0 %v3863
    %3869 = vmatprep.subr.mxu0 0.0
    %3870 = vmatpush1.msra.mxu0 0.0
    %3871 = vmatprep.subr.mxu0 0.0
    %3872 = vmatpush1.msra.mxu0 0.0
    %3873 = vmatprep.subr.mxu0 0.0
    %3874 = vmatpush1.msra.mxu0 0.0
    %3875 = vmatprep.subr.mxu0 0.0
    %3876 = vmatpush1.msra.mxu0 0.0
    %3877 = vmatprep.subr.mxu0 0.0
    %3878 = vmatpush1.msra.mxu0 0.0
    %3879 = vmatprep.subr.mxu0 0.0
    %3880 = vmatpush1.msra.mxu0 0.0
    %3881 = vmatprep.subr.mxu0 0.0
    %3882 = vmatpush1.msra.mxu0 0.0
    %3883 = vmatprep.subr.mxu0 0.0
    %3884 = vmatpush1.msra.mxu0 0.0
    %3885 = vmatprep.subr.mxu0 0.0
    %3886 = vmatpush1.msra.mxu0 0.0
    %3887 = vmatprep.subr.mxu0 0.0
    %3888 = vmatpush1.msra.mxu0 0.0
    %3889 = vmatprep.subr.mxu0 0.0
    %3890 = vmatpush1.msra.mxu0 0.0
    %3891 = vmatprep.subr.mxu0 0.0
    %3892 = vmatpush1.msra.mxu0 0.0
    %3893 = vmatprep.subr.mxu0 0.0
    %3894 = vmatpush1.msra.mxu0 0.0
    %3895 = vmatprep.subr.mxu0 0.0
    %3896 = vmatpush1.msra.mxu0 0.0
    %3897 = vmatprep.subr.mxu0 0.0
    %3898 = vmatpush1.msra.mxu0 0.0
    %3899 = vmatprep.subr.mxu0 0.0
    %3900 = vmatpush1.msra.mxu0 0.0
    %3901 = vmatprep.subr.mxu0 0.0
    %3902 = vmatpush1.msra.mxu0 0.0
    %3903 = vmatprep.subr.mxu0 0.0
    %3904 = vmatpush1.msra.mxu0 0.0
    %3905 = vmatprep.subr.mxu0 0.0
    %3906 = vmatpush1.msra.mxu0 0.0
    %3907 = vmatprep.subr.mxu0 0.0
    %3908 = vmatpush1.msra.mxu0 0.0
    %3909 = vmatprep.subr.mxu0 0.0
    %3910 = vmatpush1.msra.mxu0 0.0
    %3911 = vmatprep.subr.mxu0 0.0
    %3912 = vmatpush1.msra.mxu0 0.0
    %3913 = vmatprep.subr.mxu0 0.0
    %3914 = vmatpush1.msra.mxu0 0.0
    %3915 = vmatprep.subr.mxu0 0.0
    %3916 = vmatpush1.msra.mxu0 0.0
    %3917 = vmatprep.subr.mxu0 0.0
    %3918 = vmatpush1.msra.mxu0 0.0
    %3919 = vmatprep.subr.mxu0 0.0
    %3920 = vmatpush1.msra.mxu0 0.0
    %3921 = vmatprep.subr.mxu0 0.0
    %3922 = vmatpush1.msra.mxu0 0.0
    %3923 = vmatprep.subr.mxu0 0.0
    %3924 = vmatpush1.msra.mxu0 0.0
    %3925 = vmatprep.subr.mxu0 0.0
    %3926 = vmatpush1.msra.mxu0 0.0
    %3927 = vmatprep.subr.mxu0 0.0
    %3928 = vmatpush1.msra.mxu0 0.0
    %3929 = vmatprep.mubr.f32.mxu0 0.0
    %3930 = vmatmul.mubr.f32.gmra.mrb[0].mxu0 %v3858
    %v3931 = vpop.f32.mrb[0].mxu0
    %v3932 = vadd.f32 0.0, %v3931
    %v3933 = vpop.f32.mrb[0].mxu0
    %3934 = vmatprep.mubr.f32.mxu0 0.0
    %3935 = vmatmul.mubr.f32.gmra.mrb[0].mxu0 %v3861
    %v3936 = vpop.f32.mrb[0].mxu0
    %v3937 = vadd.f32 0.0, %v3936
    %v3938 = vpop.f32.mrb[0].mxu0
    %3939 = vdwg.mxu0
    %3940 = vrot.lane.b32.xlu0 %v3541, 112
    %v3941 = vpop.permute.xlu0 %3940
    %3942 = vrot.lane.b32.xlu0 %v3540, 112
    %v3943 = vpop.permute.xlu0 %3942
    %3944 = vrot.lane.b32.xlu0 %v3541, 80
    %v3945 = vpop.permute.xlu0 %3944
    %3946 = vrot.lane.b32.xlu0 %v3540, 80
    %v3947 = vpop.permute.xlu0 %3946
    %v3948 = vsel %vm299, %v3941, 0
    %v3950 = vsel %vm299, %v3943, 0
    %v3952 = vsel %vm299, %v3945, 0
    %v3954 = vsel %vm299, %v3947, 0
    %3956 = vmatprep.subr.mxu0 0.0
    %3957 = vmatpush1.xpose.msra.mxu0 %v3952
    %3958 = vmatprep.subr.mxu0 0.0
    %3959 = vmatpush1.xpose.msra.mxu0 %v3954
    %3960 = vmatprep.subr.mxu0 0.0
    %3961 = vmatpush1.xpose.msra.mxu0 0.0
    %3962 = vmatprep.subr.mxu0 0.0
    %3963 = vmatpush1.xpose.msra.mxu0 0.0
    %3964 = vmatprep.subr.mxu0 0.0
    %3965 = vmatpush1.xpose.msra.mxu0 0.0
    %3966 = vmatprep.subr.mxu0 0.0
    %3967 = vmatpush1.xpose.msra.mxu0 0.0
    %3968 = vmatprep.subr.mxu0 0.0
    %3969 = vmatpush1.xpose.msra.mxu0 0.0
    %3970 = vmatprep.subr.mxu0 0.0
    %3971 = vmatpush1.xpose.msra.mxu0 0.0
    %3972 = vmatprep.subr.mxu0 0.0
    %3973 = vmatpush1.xpose.msra.mxu0 0.0
    %3974 = vmatprep.subr.mxu0 0.0
    %3975 = vmatpush1.xpose.msra.mxu0 0.0
    %3976 = vmatprep.subr.mxu0 0.0
    %3977 = vmatpush1.xpose.msra.mxu0 0.0
    %3978 = vmatprep.subr.mxu0 0.0
    %3979 = vmatpush1.xpose.msra.mxu0 0.0
    %3980 = vmatprep.subr.mxu0 0.0
    %3981 = vmatpush1.xpose.msra.mxu0 0.0
    %3982 = vmatprep.subr.mxu0 0.0
    %3983 = vmatpush1.xpose.msra.mxu0 0.0
    %3984 = vmatprep.subr.mxu0 0.0
    %3985 = vmatpush1.xpose.msra.mxu0 0.0
    %3986 = vmatprep.subr.mxu0 0.0
    %3987 = vmatpush1.xpose.msra.mxu0 0.0
    %3988 = vmatprep.subr.mxu0 0.0
    %3989 = vmatpush1.xpose.msra.mxu0 0.0
    %3990 = vmatprep.subr.mxu0 0.0
    %3991 = vmatpush1.xpose.msra.mxu0 0.0
    %3992 = vmatprep.subr.mxu0 0.0
    %3993 = vmatpush1.xpose.msra.mxu0 0.0
    %3994 = vmatprep.subr.mxu0 0.0
    %3995 = vmatpush1.xpose.msra.mxu0 0.0
    %3996 = vmatprep.subr.mxu0 0.0
    %3997 = vmatpush1.xpose.msra.mxu0 0.0
    %3998 = vmatprep.subr.mxu0 0.0
    %3999 = vmatpush1.xpose.msra.mxu0 0.0
    %4000 = vmatprep.subr.mxu0 0.0
    %4001 = vmatpush1.xpose.msra.mxu0 0.0
    %4002 = vmatprep.subr.mxu0 0.0
    %4003 = vmatpush1.xpose.msra.mxu0 0.0
    %4004 = vmatprep.subr.mxu0 0.0
    %4005 = vmatpush1.xpose.msra.mxu0 0.0
    %4006 = vmatprep.subr.mxu0 0.0
    %4007 = vmatpush1.xpose.msra.mxu0 0.0
    %4008 = vmatprep.subr.mxu0 0.0
    %4009 = vmatpush1.xpose.msra.mxu0 0.0
    %4010 = vmatprep.subr.mxu0 0.0
    %4011 = vmatpush1.xpose.msra.mxu0 0.0
    %4012 = vmatprep.subr.mxu0 0.0
    %4013 = vmatpush1.xpose.msra.mxu0 0.0
    %4014 = vmatprep.subr.mxu0 0.0
    %4015 = vmatpush1.xpose.msra.mxu0 0.0
    %4016 = vmatprep.subr.mxu0 0.0
    %4017 = vmatpush1.xpose.msra.mxu0 0.0
    %4018 = vmatprep.subr.mxu0 0.0
    %4019 = vmatpush1.xpose.msra.mxu0 0.0
    %4020 = vmatprep.mubr.f32.mxu0 0.0
    %4021 = vmatmul.mubr.f32.gmra.mrb[0].mxu0 %v3948
    %v4022 = vpop.f32.mrb[0].mxu0
    %v4023 = vadd.f32 0.0, %v4022
    %v4024 = vpop.f32.mrb[0].mxu0
    %4025 = vmatprep.mubr.f32.mxu0 0.0
    %4026 = vmatmul.mubr.f32.gmra.mrb[0].mxu0 %v3950
    %v4027 = vpop.f32.mrb[0].mxu0
    %v4028 = vadd.f32 0.0, %v4027
    %v4029 = vpop.f32.mrb[0].mxu0
    %4030 = vdwg.mxu0
    %v4031 = vsel %vm383, %v4023, -inf
    %4032 = vmax.xlane.f32.xlu0 %v4031
    %v4033 = vpop.xlane.xlu0 %4032
    %v4034 = vsel %vm387, %v4028, -inf
    %4035 = vmax.xlane.f32.xlu0 %v4034
    %v4036 = vpop.xlane.xlu0 %4035
    %v4037 = vsub.f32 %v4023, %v4033
    %v4038 = vsub.f32 %v4028, %v4036
    %v4039 = vmul.f32 %v4037, 1.442695
    %v4040 = vpow.pop %v4039
    %v4041 = vmul.f32 %v4038, 1.442695
    %v4042 = vpow.pop %v4041
    %v4043 = vsel %vm383, %v4040, 0.0
    %4044 = vadd.xlane.f32.xlu0 %v4043
    %v4045 = vpop.xlane.xlu0 %4044
    %v4046 = vsel %vm387, %v4042, 0.0
    %4047 = vadd.xlane.f32.xlu0 %v4046
    %v4048 = vpop.xlane.xlu0 %4047
    %v4049 = vrcp.pop %v4045
    %v4050 = vrcp.pop %v4048
    %v4051 = vmul.f32 %v4040, %v4049
    %v4052 = vmul.f32 %v4042, %v4050
    %4053 = vrot.lane.b32.xlu0 %v3541, 48
    %v4054 = vpop.permute.xlu0 %4053
    %4055 = vrot.lane.b32.xlu0 %v3540, 48
    %v4056 = vpop.permute.xlu0 %4055
    %v4059 = vsel %vm383, %v4051, 0
    %v4062 = vsel %vm383, %v4052, 0
    %v4064 = vsel %vm418, %v4056, 0
    %4066 = vmatprep.subr.mxu0 0.0
    %4067 = vmatpush1.msra.mxu0 %v4054
    %4068 = vmatprep.subr.mxu0 0.0
    %4069 = vmatpush1.msra.mxu0 %v4064
    %4070 = vmatprep.subr.mxu0 0.0
    %4071 = vmatpush1.msra.mxu0 0.0
    %4072 = vmatprep.subr.mxu0 0.0
    %4073 = vmatpush1.msra.mxu0 0.0
    %4074 = vmatprep.subr.mxu0 0.0
    %4075 = vmatpush1.msra.mxu0 0.0
    %4076 = vmatprep.subr.mxu0 0.0
    %4077 = vmatpush1.msra.mxu0 0.0
    %4078 = vmatprep.subr.mxu0 0.0
    %4079 = vmatpush1.msra.mxu0 0.0
    %4080 = vmatprep.subr.mxu0 0.0
    %4081 = vmatpush1.msra.mxu0 0.0
    %4082 = vmatprep.subr.mxu0 0.0
    %4083 = vmatpush1.msra.mxu0 0.0
    %4084 = vmatprep.subr.mxu0 0.0
    %4085 = vmatpush1.msra.mxu0 0.0
    %4086 = vmatprep.subr.mxu0 0.0
    %4087 = vmatpush1.msra.mxu0 0.0
    %4088 = vmatprep.subr.mxu0 0.0
    %4089 = vmatpush1.msra.mxu0 0.0
    %4090 = vmatprep.subr.mxu0 0.0
    %4091 = vmatpush1.msra.mxu0 0.0
    %4092 = vmatprep.subr.mxu0 0.0
    %4093 = vmatpush1.msra.mxu0 0.0
    %4094 = vmatprep.subr.mxu0 0.0
    %4095 = vmatpush1.msra.mxu0 0.0
    %4096 = vmatprep.subr.mxu0 0.0
    %4097 = vmatpush1.msra.mxu0 0.0
    %4098 = vmatprep.subr.mxu0 0.0
    %4099 = vmatpush1.msra.mxu0 0.0
    %4100 = vmatprep.subr.mxu0 0.0
    %4101 = vmatpush1.msra.mxu0 0.0
    %4102 = vmatprep.subr.mxu0 0.0
    %4103 = vmatpush1.msra.mxu0 0.0
    %4104 = vmatprep.subr.mxu0 0.0
    %4105 = vmatpush1.msra.mxu0 0.0
    %4106 = vmatprep.subr.mxu0 0.0
    %4107 = vmatpush1.msra.mxu0 0.0
    %4108 = vmatprep.subr.mxu0 0.0
    %4109 = vmatpush1.msra.mxu0 0.0
    %4110 = vmatprep.subr.mxu0 0.0
    %4111 = vmatpush1.msra.mxu0 0.0
    %4112 = vmatprep.subr.mxu0 0.0
    %4113 = vmatpush1.msra.mxu0 0.0
    %4114 = vmatprep.subr.mxu0 0.0
    %4115 = vmatpush1.msra.mxu0 0.0
    %4116 = vmatprep.subr.mxu0 0.0
    %4117 = vmatpush1.msra.mxu0 0.0
    %4118 = vmatprep.subr.mxu0 0.0
    %4119 = vmatpush1.msra.mxu0 0.0
    %4120 = vmatprep.subr.mxu0 0.0
    %4121 = vmatpush1.msra.mxu0 0.0
    %4122 = vmatprep.subr.mxu0 0.0
    %4123 = vmatpush1.msra.mxu0 0.0
    %4124 = vmatprep.subr.mxu0 0.0
    %4125 = vmatpush1.msra.mxu0 0.0
    %4126 = vmatprep.subr.mxu0 0.0
    %4127 = vmatpush1.msra.mxu0 0.0
    %4128 = vmatprep.subr.mxu0 0.0
    %4129 = vmatpush1.msra.mxu0 0.0
    %4130 = vmatprep.mubr.f32.mxu0 0.0
    %4131 = vmatmul.mubr.f32.gmra.mrb[0].mxu0 %v4059
    %v4132 = vpop.f32.mrb[0].mxu0
    %v4133 = vadd.f32 0.0, %v4132
    %v4134 = vpop.f32.mrb[0].mxu0
    %4135 = vmatprep.mubr.f32.mxu0 0.0
    %4136 = vmatmul.mubr.f32.gmra.mrb[0].mxu0 %v4062
    %v4137 = vpop.f32.mrb[0].mxu0
    %v4138 = vadd.f32 0.0, %v4137
    %v4139 = vpop.f32.mrb[0].mxu0
    %4140 = vdwg.mxu0
    %4141 = vrot.lane.b32.xlu0 %v3541, 104
    %v4142 = vpop.permute.xlu0 %4141
    %4143 = vrot.lane.b32.xlu0 %v3540, 104
    %v4144 = vpop.permute.xlu0 %4143
    %4145 = vrot.lane.b32.xlu0 %v3541, 72
    %v4146 = vpop.permute.xlu0 %4145
    %4147 = vrot.lane.b32.xlu0 %v3540, 72
    %v4148 = vpop.permute.xlu0 %4147
    %v4149 = vsel %vm299, %v4142, 0
    %v4151 = vsel %vm299, %v4144, 0
    %v4153 = vsel %vm299, %v4146, 0
    %v4155 = vsel %vm299, %v4148, 0
    %4157 = vmatprep.subr.mxu0 0.0
    %4158 = vmatpush1.xpose.msra.mxu0 %v4153
    %4159 = vmatprep.subr.mxu0 0.0
    %4160 = vmatpush1.xpose.msra.mxu0 %v4155
    %4161 = vmatprep.subr.mxu0 0.0
    %4162 = vmatpush1.xpose.msra.mxu0 0.0
    %4163 = vmatprep.subr.mxu0 0.0
    %4164 = vmatpush1.xpose.msra.mxu0 0.0
    %4165 = vmatprep.subr.mxu0 0.0
    %4166 = vmatpush1.xpose.msra.mxu0 0.0
    %4167 = vmatprep.subr.mxu0 0.0
    %4168 = vmatpush1.xpose.msra.mxu0 0.0
    %4169 = vmatprep.subr.mxu0 0.0
    %4170 = vmatpush1.xpose.msra.mxu0 0.0
    %4171 = vmatprep.subr.mxu0 0.0
    %4172 = vmatpush1.xpose.msra.mxu0 0.0
    %4173 = vmatprep.subr.mxu0 0.0
    %4174 = vmatpush1.xpose.msra.mxu0 0.0
    %4175 = vmatprep.subr.mxu0 0.0
    %4176 = vmatpush1.xpose.msra.mxu0 0.0
    %4177 = vmatprep.subr.mxu0 0.0
    %4178 = vmatpush1.xpose.msra.mxu0 0.0
    %4179 = vmatprep.subr.mxu0 0.0
    %4180 = vmatpush1.xpose.msra.mxu0 0.0
    %4181 = vmatprep.subr.mxu0 0.0
    %4182 = vmatpush1.xpose.msra.mxu0 0.0
    %4183 = vmatprep.subr.mxu0 0.0
    %4184 = vmatpush1.xpose.msra.mxu0 0.0
    %4185 = vmatprep.subr.mxu0 0.0
    %4186 = vmatpush1.xpose.msra.mxu0 0.0
    %4187 = vmatprep.subr.mxu0 0.0
    %4188 = vmatpush1.xpose.msra.mxu0 0.0
    %4189 = vmatprep.subr.mxu0 0.0
    %4190 = vmatpush1.xpose.msra.mxu0 0.0
    %4191 = vmatprep.subr.mxu0 0.0
    %4192 = vmatpush1.xpose.msra.mxu0 0.0
    %4193 = vmatprep.subr.mxu0 0.0
    %4194 = vmatpush1.xpose.msra.mxu0 0.0
    %4195 = vmatprep.subr.mxu0 0.0
    %4196 = vmatpush1.xpose.msra.mxu0 0.0
    %4197 = vmatprep.subr.mxu0 0.0
    %4198 = vmatpush1.xpose.msra.mxu0 0.0
    %4199 = vmatprep.subr.mxu0 0.0
    %4200 = vmatpush1.xpose.msra.mxu0 0.0
    %4201 = vmatprep.subr.mxu0 0.0
    %4202 = vmatpush1.xpose.msra.mxu0 0.0
    %4203 = vmatprep.subr.mxu0 0.0
    %4204 = vmatpush1.xpose.msra.mxu0 0.0
    %4205 = vmatprep.subr.mxu0 0.0
    %4206 = vmatpush1.xpose.msra.mxu0 0.0
    %4207 = vmatprep.subr.mxu0 0.0
    %4208 = vmatpush1.xpose.msra.mxu0 0.0
    %4209 = vmatprep.subr.mxu0 0.0
    %4210 = vmatpush1.xpose.msra.mxu0 0.0
    %4211 = vmatprep.subr.mxu0 0.0
    %4212 = vmatpush1.xpose.msra.mxu0 0.0
    %4213 = vmatprep.subr.mxu0 0.0
    %4214 = vmatpush1.xpose.msra.mxu0 0.0
    %4215 = vmatprep.subr.mxu0 0.0
    %4216 = vmatpush1.xpose.msra.mxu0 0.0
    %4217 = vmatprep.subr.mxu0 0.0
    %4218 = vmatpush1.xpose.msra.mxu0 0.0
    %4219 = vmatprep.subr.mxu0 0.0
    %4220 = vmatpush1.xpose.msra.mxu0 0.0
    %4221 = vmatprep.mubr.f32.mxu0 0.0
    %4222 = vmatmul.mubr.f32.gmra.mrb[0].mxu0 %v4149
    %v4223 = vpop.f32.mrb[0].mxu0
    %v4224 = vadd.f32 0.0, %v4223
    %v4225 = vpop.f32.mrb[0].mxu0
    %4226 = vmatprep.mubr.f32.mxu0 0.0
    %4227 = vmatmul.mubr.f32.gmra.mrb[0].mxu0 %v4151
    %v4228 = vpop.f32.mrb[0].mxu0
    %v4229 = vadd.f32 0.0, %v4228
    %v4230 = vpop.f32.mrb[0].mxu0
    %4231 = vdwg.mxu0
    %v4232 = vsel %vm383, %v4224, -inf
    %4233 = vmax.xlane.f32.xlu0 %v4232
    %v4234 = vpop.xlane.xlu0 %4233
    %v4235 = vsel %vm387, %v4229, -inf
    %4236 = vmax.xlane.f32.xlu0 %v4235
    %v4237 = vpop.xlane.xlu0 %4236
    %v4238 = vsub.f32 %v4224, %v4234
    %v4239 = vsub.f32 %v4229, %v4237
    %v4240 = vmul.f32 %v4238, 1.442695
    %v4241 = vpow.pop %v4240
    %v4242 = vmul.f32 %v4239, 1.442695
    %v4243 = vpow.pop %v4242
    %v4244 = vsel %vm383, %v4241, 0.0
    %4245 = vadd.xlane.f32.xlu0 %v4244
    %v4246 = vpop.xlane.xlu0 %4245
    %v4247 = vsel %vm387, %v4243, 0.0
    %4248 = vadd.xlane.f32.xlu0 %v4247
    %v4249 = vpop.xlane.xlu0 %4248
    %v4250 = vrcp.pop %v4246
    %v4251 = vrcp.pop %v4249
    %v4252 = vmul.f32 %v4241, %v4250
    %v4253 = vmul.f32 %v4243, %v4251
    %4254 = vrot.lane.b32.xlu0 %v3541, 40
    %v4255 = vpop.permute.xlu0 %4254
    %4256 = vrot.lane.b32.xlu0 %v3540, 40
    %v4257 = vpop.permute.xlu0 %4256
    %v4260 = vsel %vm383, %v4252, 0
    %v4263 = vsel %vm383, %v4253, 0
    %v4265 = vsel %vm418, %v4257, 0
    %4267 = vmatprep.subr.mxu0 0.0
    %4268 = vmatpush1.msra.mxu0 %v4255
    %4269 = vmatprep.subr.mxu0 0.0
    %4270 = vmatpush1.msra.mxu0 %v4265
    %4271 = vmatprep.subr.mxu0 0.0
    %4272 = vmatpush1.msra.mxu0 0.0
    %4273 = vmatprep.subr.mxu0 0.0
    %4274 = vmatpush1.msra.mxu0 0.0
    %4275 = vmatprep.subr.mxu0 0.0
    %4276 = vmatpush1.msra.mxu0 0.0
    %4277 = vmatprep.subr.mxu0 0.0
    %4278 = vmatpush1.msra.mxu0 0.0
    %4279 = vmatprep.subr.mxu0 0.0
    %4280 = vmatpush1.msra.mxu0 0.0
    %4281 = vmatprep.subr.mxu0 0.0
    %4282 = vmatpush1.msra.mxu0 0.0
    %4283 = vmatprep.subr.mxu0 0.0
    %4284 = vmatpush1.msra.mxu0 0.0
    %4285 = vmatprep.subr.mxu0 0.0
    %4286 = vmatpush1.msra.mxu0 0.0
    %4287 = vmatprep.subr.mxu0 0.0
    %4288 = vmatpush1.msra.mxu0 0.0
    %4289 = vmatprep.subr.mxu0 0.0
    %4290 = vmatpush1.msra.mxu0 0.0
    %4291 = vmatprep.subr.mxu0 0.0
    %4292 = vmatpush1.msra.mxu0 0.0
    %4293 = vmatprep.subr.mxu0 0.0
    %4294 = vmatpush1.msra.mxu0 0.0
    %4295 = vmatprep.subr.mxu0 0.0
    %4296 = vmatpush1.msra.mxu0 0.0
    %4297 = vmatprep.subr.mxu0 0.0
    %4298 = vmatpush1.msra.mxu0 0.0
    %4299 = vmatprep.subr.mxu0 0.0
    %4300 = vmatpush1.msra.mxu0 0.0
    %4301 = vmatprep.subr.mxu0 0.0
    %4302 = vmatpush1.msra.mxu0 0.0
    %4303 = vmatprep.subr.mxu0 0.0
    %4304 = vmatpush1.msra.mxu0 0.0
    %4305 = vmatprep.subr.mxu0 0.0
    %4306 = vmatpush1.msra.mxu0 0.0
    %4307 = vmatprep.subr.mxu0 0.0
    %4308 = vmatpush1.msra.mxu0 0.0
    %4309 = vmatprep.subr.mxu0 0.0
    %4310 = vmatpush1.msra.mxu0 0.0
    %4311 = vmatprep.subr.mxu0 0.0
    %4312 = vmatpush1.msra.mxu0 0.0
    %4313 = vmatprep.subr.mxu0 0.0
    %4314 = vmatpush1.msra.mxu0 0.0
    %4315 = vmatprep.subr.mxu0 0.0
    %4316 = vmatpush1.msra.mxu0 0.0
    %4317 = vmatprep.subr.mxu0 0.0
    %4318 = vmatpush1.msra.mxu0 0.0
    %4319 = vmatprep.subr.mxu0 0.0
    %4320 = vmatpush1.msra.mxu0 0.0
    %4321 = vmatprep.subr.mxu0 0.0
    %4322 = vmatpush1.msra.mxu0 0.0
    %4323 = vmatprep.subr.mxu0 0.0
    %4324 = vmatpush1.msra.mxu0 0.0
    %4325 = vmatprep.subr.mxu0 0.0
    %4326 = vmatpush1.msra.mxu0 0.0
    %4327 = vmatprep.subr.mxu0 0.0
    %4328 = vmatpush1.msra.mxu0 0.0
    %4329 = vmatprep.subr.mxu0 0.0
    %4330 = vmatpush1.msra.mxu0 0.0
    %4331 = vmatprep.mubr.f32.mxu0 0.0
    %4332 = vmatmul.mubr.f32.gmra.mrb[0].mxu0 %v4260
    %v4333 = vpop.f32.mrb[0].mxu0
    %v4334 = vadd.f32 0.0, %v4333
    %v4335 = vpop.f32.mrb[0].mxu0
    %4336 = vmatprep.mubr.f32.mxu0 0.0
    %4337 = vmatmul.mubr.f32.gmra.mrb[0].mxu0 %v4263
    %v4338 = vpop.f32.mrb[0].mxu0
    %v4339 = vadd.f32 0.0, %v4338
    %v4340 = vpop.f32.mrb[0].mxu0
    %4341 = vdwg.mxu0
    %4344 = vrot.lane.b32.xlu0 %v3932, 8
    %v4345 = vpop.permute.xlu0 %4344
    %4346 = vrot.lane.b32.xlu0 %v3937, 8
    %v4347 = vpop.permute.xlu0 %4346
    %4352 = vrot.lane.b32.xlu0 %v4133, 16
    %v4353 = vpop.permute.xlu0 %4352
    %4354 = vrot.lane.b32.xlu0 %v4138, 16
    %v4355 = vpop.permute.xlu0 %4354
    %4360 = vrot.lane.b32.xlu0 %v4334, 24
    %v4361 = vpop.permute.xlu0 %4360
    %4362 = vrot.lane.b32.xlu0 %v4339, 24
    %v4363 = vpop.permute.xlu0 %4362
    %v4366 = vsel %vm299, %v3731, %v4345
    %v4367 = vsel %vm299, %v3736, %v4347
    %v4368 = vsel %vm1125, %v4366, %v4353
    %v4369 = vsel %vm1125, %v4367, %v4355
    %v4370 = vsel %vm1128, %v4368, %v4361
    %v4371 = vsel %vm1128, %v4369, %v4363
    %v4372 = vld [vmem:[%s3440] sm:$0xff]
    %v4373 = vld [vmem:[%s3440 + $0x8] sm:$0xff]
    %v4374 = vld [vmem:[%s3440 + $0x10] sm:$0xff]
    %v4375 = vld [vmem:[%s3440 + $0x18] sm:$0xff]
    %v4376 = vld [vmem:[%s3445] sm:$0x1]
    %v4378 = vlaneseq
    %v4379 = vshrl.u32 %v4378, 7
    %v4380 = vsub.s32 0, %v4379
    %v4381 = vrot.slane %v4376, %v4380
    %v4384 = vsel %vm129, %v4370, 0
    %v4387 = vsel %vm129, %v4371, 0
    %4389 = vmatprep.subr.mxu0 0.0
    %4390 = vmatpush1.msra.mxu0 %v4372
    %4391 = vmatprep.subr.mxu0 0.0
    %4392 = vmatpush1.msra.mxu0 %v4373
    %4393 = vmatprep.subr.mxu0 0.0
    %4394 = vmatpush1.msra.mxu0 %v4374
    %4395 = vmatprep.subr.mxu0 0.0
    %4396 = vmatpush1.msra.mxu0 %v4375
    %4397 = vmatprep.subr.mxu0 0.0
    %4398 = vmatpush1.msra.mxu0 0.0
    %4399 = vmatprep.subr.mxu0 0.0
    %4400 = vmatpush1.msra.mxu0 0.0
    %4401 = vmatprep.subr.mxu0 0.0
    %4402 = vmatpush1.msra.mxu0 0.0
    %4403 = vmatprep.subr.mxu0 0.0
    %4404 = vmatpush1.msra.mxu0 0.0
    %4405 = vmatprep.subr.mxu0 0.0
    %4406 = vmatpush1.msra.mxu0 0.0
    %4407 = vmatprep.subr.mxu0 0.0
    %4408 = vmatpush1.msra.mxu0 0.0
    %4409 = vmatprep.subr.mxu0 0.0
    %4410 = vmatpush1.msra.mxu0 0.0
    %4411 = vmatprep.subr.mxu0 0.0
    %4412 = vmatpush1.msra.mxu0 0.0
    %4413 = vmatprep.subr.mxu0 0.0
    %4414 = vmatpush1.msra.mxu0 0.0
    %4415 = vmatprep.subr.mxu0 0.0
    %4416 = vmatpush1.msra.mxu0 0.0
    %4417 = vmatprep.subr.mxu0 0.0
    %4418 = vmatpush1.msra.mxu0 0.0
    %4419 = vmatprep.subr.mxu0 0.0
    %4420 = vmatpush1.msra.mxu0 0.0
    %4421 = vmatprep.subr.mxu0 0.0
    %4422 = vmatpush1.msra.mxu0 0.0
    %4423 = vmatprep.subr.mxu0 0.0
    %4424 = vmatpush1.msra.mxu0 0.0
    %4425 = vmatprep.subr.mxu0 0.0
    %4426 = vmatpush1.msra.mxu0 0.0
    %4427 = vmatprep.subr.mxu0 0.0
    %4428 = vmatpush1.msra.mxu0 0.0
    %4429 = vmatprep.subr.mxu0 0.0
    %4430 = vmatpush1.msra.mxu0 0.0
    %4431 = vmatprep.subr.mxu0 0.0
    %4432 = vmatpush1.msra.mxu0 0.0
    %4433 = vmatprep.subr.mxu0 0.0
    %4434 = vmatpush1.msra.mxu0 0.0
    %4435 = vmatprep.subr.mxu0 0.0
    %4436 = vmatpush1.msra.mxu0 0.0
    %4437 = vmatprep.subr.mxu0 0.0
    %4438 = vmatpush1.msra.mxu0 0.0
    %4439 = vmatprep.subr.mxu0 0.0
    %4440 = vmatpush1.msra.mxu0 0.0
    %4441 = vmatprep.subr.mxu0 0.0
    %4442 = vmatpush1.msra.mxu0 0.0
    %4443 = vmatprep.subr.mxu0 0.0
    %4444 = vmatpush1.msra.mxu0 0.0
    %4445 = vmatprep.subr.mxu0 0.0
    %4446 = vmatpush1.msra.mxu0 0.0
    %4447 = vmatprep.subr.mxu0 0.0
    %4448 = vmatpush1.msra.mxu0 0.0
    %4449 = vmatprep.subr.mxu0 0.0
    %4450 = vmatpush1.msra.mxu0 0.0
    %4451 = vmatprep.subr.mxu0 0.0
    %4452 = vmatpush1.msra.mxu0 0.0
    %4453 = vmatprep.mubr.f32.mxu0 0.0
    %4454 = vmatmul.mubr.f32.gmra.mrb[0].mxu0 %v4384
    %v4455 = vpop.f32.mrb[0].mxu0
    %v4456 = vadd.f32 %v4381, %v4455
    %v4457 = vpop.f32.mrb[0].mxu0
    %4458 = vmatprep.mubr.f32.mxu0 0.0
    %4459 = vmatmul.mubr.f32.gmra.mrb[0].mxu0 %v4387
    %v4460 = vpop.f32.mrb[0].mxu0
    %v4461 = vadd.f32 %v4381, %v4460
    %v4462 = vpop.f32.mrb[0].mxu0
    %4463 = vdwg.mxu0
    %v4466 = vrot.slane %v4456, 7
    %v4467 = vrot.slane %v4461, 7
    %v4468 = vsel %vm418, %v4466, %v4467
    %v4471 = vadd.f32 %v2448, %v4466
    %v4472 = vadd.f32 %v2449, %v4468
    %4473 = vst.msk [vmem:[#allocation2 + $0x8] sm:$0xfe] %vm2162, %v4471
    %4474 = vst.msk [vmem:[#allocation2 + $0x10] sm:$0x3] %vm147, %v4472
    %v4475 = vld [vmem:[#allocation2] sm:$0xff]
    %v4476 = vld [vmem:[#allocation2 + $0x8] sm:$0xff]
    %v4477 = vld [vmem:[#allocation2 + $0x10] sm:$0x3]
    %s4478 = scalar_lea.vmem [#allocation8], 1
    %v4479 = vld [vmem:[%s4478] sm:$0x1]
    %s4480 = scalar_lea.vmem [#allocation9], 1
    %v4481 = vld [vmem:[%s4480] sm:$0x1]
    %v4482 = vsel %vm129, %v4475, 0.0
    %4483 = vadd.xlane.f32.xlu0 %v4482
    %v4484 = vpop.xlane.xlu0 %4483
    %v4485 = vsel %vm129, %v4476, 0.0
    %4486 = vadd.xlane.f32.xlu0 %v4485
    %v4487 = vpop.xlane.xlu0 %4486
    %v4488 = vsel %vm147, %v4477, 0.0
    %4489 = vadd.xlane.f32.xlu0 %v4488
    %v4490 = vpop.xlane.xlu0 %4489
    %v4491 = vmul.f32 %v4484, %v151
    %v4492 = vmul.f32 %v4487, %v151
    %v4493 = vmul.f32 %v4490, %v151
    %v4494 = vsub.f32 %v4475, %v4491
    %v4495 = vsub.f32 %v4476, %v4492
    %v4496 = vsub.f32 %v4477, %v4493
    %v4497 = vmul.f32 %v4494, %v4494
    %v4498 = vmul.f32 %v4495, %v4495
    %v4499 = vmul.f32 %v4496, %v4496
    %v4500 = vsel %vm129, %v4497, 0.0
    %4501 = vadd.xlane.f32.xlu0 %v4500
    %v4502 = vpop.xlane.xlu0 %4501
    %v4503 = vsel %vm129, %v4498, 0.0
    %4504 = vadd.xlane.f32.xlu0 %v4503
    %v4505 = vpop.xlane.xlu0 %4504
    %v4506 = vsel %vm147, %v4499, 0.0
    %4507 = vadd.xlane.f32.xlu0 %v4506
    %v4508 = vpop.xlane.xlu0 %4507
    %v4509 = vmul.f32 %v4502, %v151
    %v4510 = vmul.f32 %v4505, %v151
    %v4511 = vmul.f32 %v4508, %v151
    %v4512 = vadd.f32 %v4509, 1e-05
    %v4513 = vadd.f32 %v4510, 1e-05
    %v4514 = vadd.f32 %v4511, 1e-05
    %v4515 = vrsqrt.pop %v4512
    %v4516 = vrsqrt.pop %v4513
    %v4517 = vrsqrt.pop %v4514
    %v4518 = vmul.f32 %v4494, %v4515
    %v4519 = vmul.f32 %v4495, %v4516
    %v4520 = vmul.f32 %v4496, %v4517
    %v4522 = vlaneseq
    %v4523 = vshrl.u32 %v4522, 7
    %v4524 = vsub.s32 0, %v4523
    %v4525 = vrot.slane %v4479, %v4524
    %v4527 = vmul.f32 %v4518, %v4525
    %v4528 = vmul.f32 %v4519, %v4525
    %v4529 = vmul.f32 %v4520, %v4525
    %v4531 = vlaneseq
    %v4532 = vshrl.u32 %v4531, 7
    %v4533 = vsub.s32 0, %v4532
    %v4534 = vrot.slane %v4481, %v4533
    %v4536 = vadd.f32 %v4527, %v4534
    %v4537 = vadd.f32 %v4528, %v4534
    %v4538 = vadd.f32 %v4529, %v4534
    %s4539 = scalar_lea.vmem %s10, 32
    %v4540 = vld [vmem:[%s4539] sm:$0xff]
    %v4541 = vld [vmem:[%s4539 + $0x8] sm:$0xff]
    %v4542 = vld [vmem:[%s4539 + $0x10] sm:$0xff]
    %v4543 = vld [vmem:[%s4539 + $0x18] sm:$0xff]
    %s4544 = scalar_lea.vmem [#allocation11], 1
    %v4545 = vld [vmem:[%s4544] sm:$0x1]
    %v4547 = vlaneseq
    %v4548 = vshrl.u32 %v4547, 7
    %v4549 = vsub.s32 0, %v4548
    %v4550 = vrot.slane %v4545, %v4549
    %v4553 = vsel %vm129, %v4536, 0
    %v4556 = vsel %vm129, %v4537, 0
    %v4559 = vsel %vm129, %v4538, 0
    %4561 = vmatprep.subr.mxu0 0.0
    %4562 = vmatpush1.msra.mxu0 %v4540
    %4563 = vmatprep.subr.mxu0 0.0
    %4564 = vmatpush1.msra.mxu0 %v4541
    %4565 = vmatprep.subr.mxu0 0.0
    %4566 = vmatpush1.msra.mxu0 %v4542
    %4567 = vmatprep.subr.mxu0 0.0
    %4568 = vmatpush1.msra.mxu0 %v4543
    %4569 = vmatprep.subr.mxu0 0.0
    %4570 = vmatpush1.msra.mxu0 0.0
    %4571 = vmatprep.subr.mxu0 0.0
    %4572 = vmatpush1.msra.mxu0 0.0
    %4573 = vmatprep.subr.mxu0 0.0
    %4574 = vmatpush1.msra.mxu0 0.0
    %4575 = vmatprep.subr.mxu0 0.0
    %4576 = vmatpush1.msra.mxu0 0.0
    %4577 = vmatprep.subr.mxu0 0.0
    %4578 = vmatpush1.msra.mxu0 0.0
    %4579 = vmatprep.subr.mxu0 0.0
    %4580 = vmatpush1.msra.mxu0 0.0
    %4581 = vmatprep.subr.mxu0 0.0
    %4582 = vmatpush1.msra.mxu0 0.0
    %4583 = vmatprep.subr.mxu0 0.0
    %4584 = vmatpush1.msra.mxu0 0.0
    %4585 = vmatprep.subr.mxu0 0.0
    %4586 = vmatpush1.msra.mxu0 0.0
    %4587 = vmatprep.subr.mxu0 0.0
    %4588 = vmatpush1.msra.mxu0 0.0
    %4589 = vmatprep.subr.mxu0 0.0
    %4590 = vmatpush1.msra.mxu0 0.0
    %4591 = vmatprep.subr.mxu0 0.0
    %4592 = vmatpush1.msra.mxu0 0.0
    %4593 = vmatprep.subr.mxu0 0.0
    %4594 = vmatpush1.msra.mxu0 0.0
    %4595 = vmatprep.subr.mxu0 0.0
    %4596 = vmatpush1.msra.mxu0 0.0
    %4597 = vmatprep.subr.mxu0 0.0
    %4598 = vmatpush1.msra.mxu0 0.0
    %4599 = vmatprep.subr.mxu0 0.0
    %4600 = vmatpush1.msra.mxu0 0.0
    %4601 = vmatprep.subr.mxu0 0.0
    %4602 = vmatpush1.msra.mxu0 0.0
    %4603 = vmatprep.subr.mxu0 0.0
    %4604 = vmatpush1.msra.mxu0 0.0
    %4605 = vmatprep.subr.mxu0 0.0
    %4606 = vmatpush1.msra.mxu0 0.0
    %4607 = vmatprep.subr.mxu0 0.0
    %4608 = vmatpush1.msra.mxu0 0.0
    %4609 = vmatprep.subr.mxu0 0.0
    %4610 = vmatpush1.msra.mxu0 0.0
    %4611 = vmatprep.subr.mxu0 0.0
    %4612 = vmatpush1.msra.mxu0 0.0
    %4613 = vmatprep.subr.mxu0 0.0
    %4614 = vmatpush1.msra.mxu0 0.0
    %4615 = vmatprep.subr.mxu0 0.0
    %4616 = vmatpush1.msra.mxu0 0.0
    %4617 = vmatprep.subr.mxu0 0.0
    %4618 = vmatpush1.msra.mxu0 0.0
    %4619 = vmatprep.subr.mxu0 0.0
    %4620 = vmatpush1.msra.mxu0 0.0
    %4621 = vmatprep.subr.mxu0 0.0
    %4622 = vmatpush1.msra.mxu0 0.0
    %4623 = vmatprep.subr.mxu0 0.0
    %4624 = vmatpush1.msra.mxu0 0.0
    %4625 = vmatprep.mubr.f32.mxu0 0.0
    %4626 = vmatmul.mubr.f32.gmra.mrb[0].mxu0 %v4553
    %v4627 = vpop.f32.mrb[0].mxu0
    %v4628 = vadd.f32 %v4550, %v4627
    %v4629 = vpop.f32.mrb[0].mxu0
    %4630 = vmatprep.mubr.f32.mxu0 0.0
    %4631 = vmatmul.mubr.f32.gmra.mrb[0].mxu0 %v4556
    %v4632 = vpop.f32.mrb[0].mxu0
    %v4633 = vadd.f32 %v4550, %v4632
    %v4634 = vpop.f32.mrb[0].mxu0
    %4635 = vmatprep.mubr.f32.mxu0 0.0
    %4636 = vmatmul.mubr.f32.gmra.mrb[0].mxu0 %v4559
    %v4637 = vpop.f32.mrb[0].mxu0
    %v4638 = vadd.f32 %v4550, %v4637
    %v4639 = vpop.f32.mrb[0].mxu0
    %4640 = vdwg.mxu0
    %v4641 = vmul.f32 %v4628, 0.5
    %v4642 = vmul.f32 %v4633, 0.5
    %v4643 = vmul.f32 %v4638, 0.5
    %v4644 = vmul.f32 %v4628, 0.70710677
    %v4645 = vmul.f32 %v4633, 0.70710677
    %v4646 = vmul.f32 %v4638, 0.70710677
    %v4647 = verf.f32.pop %v4644
    %v4648 = verf.f32.pop %v4645
    %v4649 = verf.f32.pop %v4646
    %v4650 = vadd.f32 %v4647, 1.0
    %v4651 = vadd.f32 %v4648, 1.0
    %v4652 = vadd.f32 %v4649, 1.0
    %v4653 = vmul.f32 %v4641, %v4650
    %v4654 = vmul.f32 %v4642, %v4651
    %v4655 = vmul.f32 %v4643, %v4652
    %s4656 = scalar_lea.vmem %s12, 64
    %v4657 = vld [vmem:[%s4656] sm:$0xff]
    %v4658 = vld [vmem:[%s4656 + $0x8] sm:$0xff]
    %v4659 = vld [vmem:[%s4656 + $0x10] sm:$0xff]
    %v4660 = vld [vmem:[%s4656 + $0x18] sm:$0xff]
    %v4661 = vld [vmem:[%s4656 + $0x20] sm:$0xff]
    %v4662 = vld [vmem:[%s4656 + $0x28] sm:$0xff]
    %v4663 = vld [vmem:[%s4656 + $0x30] sm:$0xff]
    %v4664 = vld [vmem:[%s4656 + $0x38] sm:$0xff]
    %s4665 = scalar_lea.vmem %s13, 1
    %v4666 = vld [vmem:[%s4665] sm:$0x1]
    %v4668 = vlaneseq
    %v4669 = vshrl.u32 %v4668, 7
    %v4670 = vsub.s32 0, %v4669
    %v4671 = vrot.slane %v4666, %v4670
    %v4674 = vsel %vm2357, %v4653, 0
    %v4677 = vsel %vm2357, %v4654, 0
    %v4680 = vsel %vm2357, %v4655, 0
    %4682 = vmatprep.subr.mxu0 0.0
    %4683 = vmatpush1.msra.mxu0 %v4657
    %4684 = vmatprep.subr.mxu0 0.0
    %4685 = vmatpush1.msra.mxu0 %v4658
    %4686 = vmatprep.subr.mxu0 0.0
    %4687 = vmatpush1.msra.mxu0 %v4659
    %4688 = vmatprep.subr.mxu0 0.0
    %4689 = vmatpush1.msra.mxu0 %v4660
    %4690 = vmatprep.subr.mxu0 0.0
    %4691 = vmatpush1.msra.mxu0 %v4661
    %4692 = vmatprep.subr.mxu0 0.0
    %4693 = vmatpush1.msra.mxu0 %v4662
    %4694 = vmatprep.subr.mxu0 0.0
    %4695 = vmatpush1.msra.mxu0 %v4663
    %4696 = vmatprep.subr.mxu0 0.0
    %4697 = vmatpush1.msra.mxu0 %v4664
    %4698 = vmatprep.subr.mxu0 0.0
    %4699 = vmatpush1.msra.mxu0 0.0
    %4700 = vmatprep.subr.mxu0 0.0
    %4701 = vmatpush1.msra.mxu0 0.0
    %4702 = vmatprep.subr.mxu0 0.0
    %4703 = vmatpush1.msra.mxu0 0.0
    %4704 = vmatprep.subr.mxu0 0.0
    %4705 = vmatpush1.msra.mxu0 0.0
    %4706 = vmatprep.subr.mxu0 0.0
    %4707 = vmatpush1.msra.mxu0 0.0
    %4708 = vmatprep.subr.mxu0 0.0
    %4709 = vmatpush1.msra.mxu0 0.0
    %4710 = vmatprep.subr.mxu0 0.0
    %4711 = vmatpush1.msra.mxu0 0.0
    %4712 = vmatprep.subr.mxu0 0.0
    %4713 = vmatpush1.msra.mxu0 0.0
    %4714 = vmatprep.subr.mxu0 0.0
    %4715 = vmatpush1.msra.mxu0 0.0
    %4716 = vmatprep.subr.mxu0 0.0
    %4717 = vmatpush1.msra.mxu0 0.0
    %4718 = vmatprep.subr.mxu0 0.0
    %4719 = vmatpush1.msra.mxu0 0.0
    %4720 = vmatprep.subr.mxu0 0.0
    %4721 = vmatpush1.msra.mxu0 0.0
    %4722 = vmatprep.subr.mxu0 0.0
    %4723 = vmatpush1.msra.mxu0 0.0
    %4724 = vmatprep.subr.mxu0 0.0
    %4725 = vmatpush1.msra.mxu0 0.0
    %4726 = vmatprep.subr.mxu0 0.0
    %4727 = vmatpush1.msra.mxu0 0.0
    %4728 = vmatprep.subr.mxu0 0.0
    %4729 = vmatpush1.msra.mxu0 0.0
    %4730 = vmatprep.subr.mxu0 0.0
    %4731 = vmatpush1.msra.mxu0 0.0
    %4732 = vmatprep.subr.mxu0 0.0
    %4733 = vmatpush1.msra.mxu0 0.0
    %4734 = vmatprep.subr.mxu0 0.0
    %4735 = vmatpush1.msra.mxu0 0.0
    %4736 = vmatprep.subr.mxu0 0.0
    %4737 = vmatpush1.msra.mxu0 0.0
    %4738 = vmatprep.subr.mxu0 0.0
    %4739 = vmatpush1.msra.mxu0 0.0
    %4740 = vmatprep.subr.mxu0 0.0
    %4741 = vmatpush1.msra.mxu0 0.0
    %4742 = vmatprep.subr.mxu0 0.0
    %4743 = vmatpush1.msra.mxu0 0.0
    %4744 = vmatprep.subr.mxu0 0.0
    %4745 = vmatpush1.msra.mxu0 0.0
    %4746 = vmatprep.mubr.f32.mxu0 0.0
    %4747 = vmatmul.mubr.f32.gmra.mrb[0].mxu0 %v4674
    %v4748 = vpop.f32.mrb[0].mxu0
    %v4749 = vadd.f32 %v4671, %v4748
    %v4750 = vpop.f32.mrb[0].mxu0
    %4751 = vmatprep.mubr.f32.mxu0 0.0
    %4752 = vmatmul.mubr.f32.gmra.mrb[0].mxu0 %v4677
    %v4753 = vpop.f32.mrb[0].mxu0
    %v4754 = vadd.f32 %v4671, %v4753
    %v4755 = vpop.f32.mrb[0].mxu0
    %4756 = vmatprep.mubr.f32.mxu0 0.0
    %4757 = vmatmul.mubr.f32.gmra.mrb[0].mxu0 %v4680
    %v4758 = vpop.f32.mrb[0].mxu0
    %v4759 = vpop.f32.mrb[0].mxu0
    %4760 = vdwg.mxu0
    %v4761 = vadd.f32 %v4475, %v4749
    %v4762 = vadd.f32 %v4476, %v4754
    %4763 = vst.msk [vmem:[#allocation12] sm:$0x1] %vm118, %v4761
    %vm4764 = vcmask 254977
    %4765 = vst.msk [vmem:[#allocation12] sm:$0x2] %vm4764, %v4762
    // Predicated region
    $region78: #{tpu_custom_call.1} parent=1 // pred_check
      _
    $region79: #{tpu_custom_call.1} parent=1 // pred_check_branch
      %4767 = sbr.rel (0) target = $region81
    $region80: #{tpu_custom_call.1} parent=1 // pred_region
      %s4769 = ssub.s32 32, 32
      %4770 = vsyncadd [#allocation5], %s4769
      %s4772 = sshll.u32 [#allocation12], 4
      %s4773 = int_to_ptr.vmem [resolvable:$true] %s4772
      %4775 = dma.vmem_to_hbm [thread:$0]  %s4773, 32, %s14, [#allocation5]
    $region81: #{tpu_custom_call.1} parent=1 // pred_fallthru
      _
    // Predicated region
    $region82: #{tpu_custom_call.1} parent=1 // pred_check
      _
    $region83: #{tpu_custom_call.1} parent=1 // pred_check_branch
      %4777 = sbr.rel (0) target = $region85
    $region84: #{tpu_custom_call.1} parent=1 // pred_region
      %4778 = dma.done [#allocation5], 32
    $region85: #{tpu_custom_call.1} parent=1 // pred_fallthru
      _
    %4779 = vsyncpa [#allocation4], 1
    %4780 = vsyncpa [#allocation7], 1
    %4781 = vsyncpa [#allocation10], 1
    %4782 = vsyncpa [#allocation5], 1

</llo_original>
